<compile_context>
chip_gen: v7x
topology: tpu7x:2x2x1
jax: 0.10.0
libtpu: 0.0.40
codegen_flags: <defaults>
</compile_context>

<pallas_src>
import jax
import jax.numpy as jnp
from jax import lax
from jax.experimental import pallas as pl
from jax.experimental.pallas import tpu as pltpu

# ---------------- configuration (small, consistent with the module) ----------------
NUM_PARTICLES = 64          # model_args['num_particles'] default
BATCH = 2
SEQ = 8
INPUT_SIZE = 8              # model_args['input_size']
HIDDEN = 32                 # model_args['hidden_dimension']
N = NUM_PARTICLES * BATCH   # particle-expanded row count (=128 lanes in-kernel)
GATES = 4 * HIDDEN
LEAKY_SLOPE = 0.01          # nn.LeakyReLU default


def _leaky_relu(x):
    return jnp.where(x >= 0, x, LEAKY_SLOPE * x)


# --------------------------------- Pallas kernel -----------------------------------
def pflstm_kernel(xg_ref, xo_ref, h0_ref, c0_ref, p0_ref,
                  w4_ref, w_ho_ref, b_out_ref,
                  y_ref, pf_ref):
    """Single invocation: full SEQ-step PF-LSTM recurrence, all B*P=128 particles on lanes.

    Layout (lane n = batch*P + particle):
      h, c        : (H, N)           gates : (4H, N)  rows ordered [i|f|o|g]
      p, logit, pf: (1, N) lane rows
    """
    P = NUM_PARTICLES
    B = BATCH
    S = SEQ
    H = HIDDEN

    h = h0_ref[...]            # (H, N)
    c = c0_ref[...]            # (H, N)
    p = p0_ref[...]            # (1, N)  log particle weights

    w4 = w4_ref[...]           # (4H, H)  = permuted(w_hh)^T, rows [i|f|o|g]
    w_ho = w_ho_ref[...]       # (2, H)   rows [w_obs_h^T ; w_out^T]
    b_out_row = jnp.broadcast_to(b_out_ref[...], (1, N))   # hoisted bias broadcast

    lane = lax.broadcasted_iota(jnp.int32, (1, N), 1)
    mask0 = lane < P                                         # batch-0 lanes
    t_iota = lax.broadcasted_iota(jnp.int32, (1, S), 1)
    b_col0 = lax.broadcasted_iota(jnp.int32, (B, 1), 0) == 0
    neg_inf = jnp.float32(-jnp.inf)

    y_acc = jnp.zeros((B, S), jnp.float32)

    for t in range(S):         # fully unrolled in-kernel time loop (SEQ=8)
        # ---- gates: w_hh^T @ h  + per-batch precomputed x-term (biases folded) ----
        gh = jnp.dot(w4, h, preferred_element_type=jnp.float32)       # (4H, N)
        xg_t = xg_ref[:, pl.ds(B * t, B)]                              # (4H, B)
        gates = gh + jnp.where(mask0, xg_t[:, 0:1], xg_t[:, 1:2])      # (4H, N)

        # sublane-aligned gate slabs: sigmoid on [i|f|o], tanh on [g]
        sig = jax.nn.sigmoid(gates[0:3 * H, :])                        # (3H, N)
        g_g = jnp.tanh(gates[3 * H:4 * H, :])                          # (H, N)
        i_g = sig[0:H, :]
        f_g = sig[H:2 * H, :]
        o_g = sig[2 * H:3 * H, :]

        c = f_g * c + i_g * g_g
        h = o_g * jnp.tanh(c)

        # ---- fused observation-likelihood + label-head matmul on h_new ----
        ho = jnp.dot(w_ho, h, preferred_element_type=jnp.float32)      # (2, N)
        logit = ho[0:1, :] + xo_ref[pl.ds(t, 1), :]                    # (1, N)
        pf_lin = ho[1:2, :] + b_out_row                                # (1, N)

        # ---- log-weight update + per-batch logsumexp (masked lane reductions) ----
        p = p + logit
        m0 = jnp.max(jnp.where(mask0, p, neg_inf), axis=-1, keepdims=True)
        m1 = jnp.max(jnp.where(mask0, neg_inf, p), axis=-1, keepdims=True)
        m = jnp.where(mask0, m0, m1)                                   # (1, N)
        e = jnp.exp(p - m)
        s0 = jnp.sum(jnp.where(mask0, e, 0.0), axis=-1, keepdims=True)
        s1 = jnp.sum(jnp.where(mask0, 0.0, e), axis=-1, keepdims=True)
        p = p - (m + jnp.log(jnp.where(mask0, s0, s1)))                # normalized

        # ---- y follows algebraically (normalized weights sum to 1 per batch):
        #      y_b = sum_p exp(p) * pf_lin over batch b's lanes
        wy = jnp.exp(p) * pf_lin
        y0 = jnp.sum(jnp.where(mask0, wy, 0.0), axis=-1, keepdims=True)
        y1 = jnp.sum(jnp.where(mask0, 0.0, wy), axis=-1, keepdims=True)
        y_t = jnp.where(b_col0, y0, y1)                                # (B, 1)
        y_acc = jnp.where(t_iota == t, y_t, y_acc)                     # (B, S)

        pf_ref[pl.ds(t, 1), :] = _leaky_relu(pf_lin)                   # lane-dense row

    y_ref[...] = _leaky_relu(y_acc)                                    # single store


# ----------------------------------- wrapper ----------------------------------------
def _permute_gate_cols(w):
    # torch LSTM column order [i|f|g|o] -> [i|f|o|g] (sigmoid gates contiguous)
    H = HIDDEN
    return jnp.concatenate([w[:, :2 * H], w[:, 3 * H:], w[:, 2 * H:3 * H]], axis=1)


def svm_param_estimator_forward(observations, params, h0, c0, p0):
    B, S, E = observations.shape
    assert (B, S, E) == (BATCH, SEQ, INPUT_SIZE)
    P = NUM_PARTICLES
    H = HIDDEN
    G = GATES
    obs = observations.astype(jnp.float32)

    # ---- hoisted x-projections (tiny XLA matmuls, done once per forward) ----
    b_gate = params["b_ih"] + params["b_hh"]                              # (1, 4H)
    xg = jnp.einsum("bse,eg->bsg", obs, params["w_ih"]) + b_gate          # (B, S, 4H)
    xg = _permute_gate_cols(xg.reshape(B * S, G)).reshape(B, S, G)
    xg_cols = jnp.transpose(xg, (2, 1, 0)).reshape(G, S * B)              # col = t*B + b

    xo = jnp.einsum("bse,eo->bso", obs, params["w_obs_x"])[..., 0]        # (B, S)
    xo = xo + params["b_obs"][0, 0]
    xo_row = jnp.repeat(jnp.transpose(xo, (1, 0)), P, axis=1)             # (S, B*P)

    # ---- state remap: external particle-major rows (n = particle*B + b)
    #      -> internal transposed columns (lane = b*P + particle)
    def state_to_cols(a):
        return (a.reshape(P, B, H).transpose(2, 1, 0)
                 .reshape(H, B * P).astype(jnp.float32))

    hT0 = state_to_cols(h0)                                               # (H, N)
    cT0 = state_to_cols(c0)                                               # (H, N)
    p_row0 = (p0.reshape(P, B).transpose(1, 0)
                .reshape(1, B * P).astype(jnp.float32))                   # (1, N)

    # ---- fused / transposed weights (built once at trace time) ----
    w4 = _permute_gate_cols(params["w_hh"]).T                             # (4H, H)
    w_ho = jnp.concatenate([params["w_obs_h"], params["w_out"]], axis=1).T  # (2, H)

    def full_spec(shape):
        return pl.BlockSpec(shape, lambda i: tuple(0 for _ in shape))

    in_specs = [
        full_spec((G, S * B)),     # xg_cols
        full_spec((S, B * P)),     # xo_row
        full_spec((H, B * P)),     # hT0
        full_spec((H, B * P)),     # cT0
        full_spec((1, B * P)),     # p_row0
        full_spec((G, H)),         # w4
        full_spec((2, H)),         # w_ho
        full_spec((1, 1)),         # b_out
    ]
    out_specs = [
        full_spec((B, S)),         # y  (stored once)
        full_spec((S, B * P)),     # pf (lane-dense rows)
    ]
    out_shape = [
        jax.ShapeDtypeStruct((B, S), jnp.float32),
        jax.ShapeDtypeStruct((S, B * P), jnp.float32),
    ]

    y_int, pf_int = pl.pallas_call(
        pflstm_kernel,
        out_shape=out_shape,
        grid_spec=pltpu.PrefetchScalarGridSpec(
            num_scalar_prefetch=0,
            grid=(1,),
            in_specs=in_specs,
            out_specs=out_specs,
        ),
        compiler_params=pltpu.CompilerParams(
            dimension_semantics=("arbitrary",)),
    )(xg_cols, xo_row, hT0, cT0, p_row0, w4, w_ho, params["b_out"])

    # y: (B, S) -> (S, B, 1)
    y_out = jnp.transpose(y_int, (1, 0))[:, :, None]
    # pf: internal lane order (S, B*P) -> external particle-major (S, P*B, 1)
    pf_out = pf_int.reshape(S, B, P).transpose(0, 2, 1).reshape(S, P * B, 1)
    return y_out, pf_out


# ----------------------------- pure-JAX reference -----------------------------------
def reference_forward(observations, params, h0, c0, p0):
    emb = jnp.tile(observations, (NUM_PARTICLES, 1, 1))   # (N, S, E) particle-major rows
    h, c, p = h0, c0, p0
    ys, pfs = [], []
    for t in range(SEQ):
        x = emb[:, t, :]
        gates = (x @ params["w_ih"] + params["b_ih"]
                 + h @ params["w_hh"] + params["b_hh"])
        i_g = jax.nn.sigmoid(gates[:, :HIDDEN])
        f_g = jax.nn.sigmoid(gates[:, HIDDEN:2 * HIDDEN])
        g_g = jnp.tanh(gates[:, 2 * HIDDEN:3 * HIDDEN])
        o_g = jax.nn.sigmoid(gates[:, 3 * HIDDEN:])
        c = f_g * c + i_g * g_g
        h = o_g * jnp.tanh(c)
        logit = x @ params["w_obs_x"] + h @ params["w_obs_h"] + params["b_obs"]
        p = logit + p
        p_rs = p.reshape(NUM_PARTICLES, BATCH)
        p_rs = p_rs - jax.scipy.special.logsumexp(p_rs, axis=0, keepdims=True)
        p = p_rs.reshape(N, 1)
        weighted = (jnp.exp(p) * h).reshape(NUM_PARTICLES, BATCH, HIDDEN).sum(axis=0)
        y = weighted @ params["w_out"] + params["b_out"]
        ys.append(_leaky_relu(y))
        pf = h @ params["w_out"] + params["b_out"]
        pfs.append(_leaky_relu(pf))
    return jnp.stack(ys, axis=0), jnp.stack(pfs, axis=0)


# ----------------------------------- main --------------------------------------------
if __name__ == "__main__":
    key = jax.random.PRNGKey(0)
    ks = jax.random.split(key, 16)

    def uinit(k, shape, fan_in):
        bound = 1.0 / (fan_in ** 0.5)
        return jax.random.uniform(k, shape, jnp.float32, -bound, bound)

    params = {
        "w_ih": uinit(ks[0], (INPUT_SIZE, 4 * HIDDEN), INPUT_SIZE),
        "b_ih": uinit(ks[1], (1, 4 * HIDDEN), INPUT_SIZE),
        "w_hh": uinit(ks[2], (HIDDEN, 4 * HIDDEN), HIDDEN),
        "b_hh": uinit(ks[3], (1, 4 * HIDDEN), HIDDEN),
        "w_obs_x": uinit(ks[4], (INPUT_SIZE, 1), INPUT_SIZE + HIDDEN),
        "w_obs_h": uinit(ks[5], (HIDDEN, 1), INPUT_SIZE + HIDDEN),
        "b_obs": uinit(ks[6], (1, 1), INPUT_SIZE + HIDDEN),
        "w_out": uinit(ks[7], (HIDDEN, 1), HIDDEN),       # layer1: Linear(hidden, 1)
        "b_out": uinit(ks[8], (1, 1), HIDDEN),
    }

    observations = jax.random.normal(ks[9], (BATCH, SEQ, INPUT_SIZE), jnp.float32)

    # init_hidden: torch.rand for h0/c0 (deterministic here), p0 = log(1/P)
    h0 = jax.random.uniform(ks[10], (N, HIDDEN), jnp.float32)
    c0 = jax.random.uniform(ks[11], (N, HIDDEN), jnp.float32)
    p0 = jnp.full((N, 1), jnp.log(1.0 / NUM_PARTICLES), jnp.float32)

    y_out, pf_out = svm_param_estimator_forward(observations, params, h0, c0, p0)
    y_out, pf_out = jax.block_until_ready((y_out, pf_out))

    y_ref, pf_ref = reference_forward(observations, params, h0, c0, p0)
    assert y_out.shape == (SEQ, BATCH, 1) and pf_out.shape == (SEQ, N, 1)
    assert jnp.allclose(y_out, y_ref, atol=5e-4, rtol=5e-4)
    assert jnp.allclose(pf_out, pf_ref, atol=5e-4, rtol=5e-4)

    print("KERNEL_OK")
</pallas_src>

<mosaic_0001>
module attributes {stable_mosaic.version = 11 : i64} {
  func.func @pflstm_kernel(%arg0: i32, %arg1: memref<128x16xf32, #tpu.memory_space<vmem>>, %arg2: memref<8x128xf32, #tpu.memory_space<vmem>>, %arg3: memref<32x128xf32, #tpu.memory_space<vmem>>, %arg4: memref<32x128xf32, #tpu.memory_space<vmem>>, %arg5: memref<1x128xf32, #tpu.memory_space<vmem>>, %arg6: memref<128x32xf32, #tpu.memory_space<vmem>>, %arg7: memref<2x32xf32, #tpu.memory_space<vmem>>, %arg8: memref<1x1xf32, #tpu.memory_space<vmem>>, %arg9: memref<2x8xf32, #tpu.memory_space<vmem>>, %arg10: memref<8x128xf32, #tpu.memory_space<vmem>>) attributes {dimension_semantics = [#tpu.dimension_semantics<arbitrary>], iteration_bounds = array<i64: 1>, scalar_prefetch = 0 : i64, scratch_operands = 0 : i64, tpu.core_type = #tpu.core_type<tc>, window_params = [{pipeline_mode = #tpu.pipeline_mode<synchronous>, transform_indices = @transform_0, window_bounds = array<i64: 128, 16>}, {pipeline_mode = #tpu.pipeline_mode<synchronous>, transform_indices = @transform_1, window_bounds = array<i64: 8, 128>}, {pipeline_mode = #tpu.pipeline_mode<synchronous>, transform_indices = @transform_2, window_bounds = array<i64: 32, 128>}, {pipeline_mode = #tpu.pipeline_mode<synchronous>, transform_indices = @transform_3, window_bounds = array<i64: 32, 128>}, {pipeline_mode = #tpu.pipeline_mode<synchronous>, transform_indices = @transform_4, window_bounds = array<i64: 1, 128>}, {pipeline_mode = #tpu.pipeline_mode<synchronous>, transform_indices = @transform_5, window_bounds = array<i64: 128, 32>}, {pipeline_mode = #tpu.pipeline_mode<synchronous>, transform_indices = @transform_6, window_bounds = array<i64: 2, 32>}, {pipeline_mode = #tpu.pipeline_mode<synchronous>, transform_indices = @transform_7, window_bounds = array<i64: 1, 1>}, {pipeline_mode = #tpu.pipeline_mode<synchronous>, transform_indices = @transform_8, window_bounds = array<i64: 2, 8>}, {pipeline_mode = #tpu.pipeline_mode<synchronous>, transform_indices = @transform_9, window_bounds = array<i64: 8, 128>}]} {
    %c0 = arith.constant 0 : index
    %c0_0 = arith.constant 0 : index
    %0 = vector.load %arg3[%c0, %c0_0] : memref<32x128xf32, #tpu.memory_space<vmem>>, vector<32x128xf32>
    %c0_1 = arith.constant 0 : index
    %c0_2 = arith.constant 0 : index
    %1 = vector.load %arg4[%c0_1, %c0_2] : memref<32x128xf32, #tpu.memory_space<vmem>>, vector<32x128xf32>
    %c0_3 = arith.constant 0 : index
    %c0_4 = arith.constant 0 : index
    %2 = vector.load %arg5[%c0_3, %c0_4] : memref<1x128xf32, #tpu.memory_space<vmem>>, vector<1x128xf32>
    %c0_5 = arith.constant 0 : index
    %c0_6 = arith.constant 0 : index
    %3 = vector.load %arg6[%c0_5, %c0_6] : memref<128x32xf32, #tpu.memory_space<vmem>>, vector<128x32xf32>
    %c0_7 = arith.constant 0 : index
    %c0_8 = arith.constant 0 : index
    %4 = vector.load %arg7[%c0_7, %c0_8] : memref<2x32xf32, #tpu.memory_space<vmem>>, vector<2x32xf32>
    %c0_9 = arith.constant 0 : index
    %c0_10 = arith.constant 0 : index
    %5 = vector.load %arg8[%c0_9, %c0_10] : memref<1x1xf32, #tpu.memory_space<vmem>>, vector<1x1xf32>
    %6 = vector.shape_cast %5 : vector<1x1xf32> to vector<1x1xf32>
    %7 = vector.broadcast %6 : vector<1x1xf32> to vector<1x128xf32>
    %8 = tpu.iota {dimensions = array<i32: 1>} : vector<1x128xi32>
    %c64_i32 = arith.constant 64 : i32
    %9 = vector.broadcast %c64_i32 : i32 to vector<1x128xi32>
    %10 = arith.cmpi slt, %8, %9 : vector<1x128xi32>
    %11 = tpu.iota {dimensions = array<i32: 1>} : vector<1x8xi32>
    %12 = tpu.iota {dimensions = array<i32: 0>} : vector<2x1xi32>
    %c0_i32 = arith.constant 0 : i32
    %13 = vector.broadcast %c0_i32 : i32 to vector<2x1xi32>
    %14 = arith.cmpi eq, %12, %13 : vector<2x1xi32>
    %cst = arith.constant 0.000000e+00 : f32
    %15 = vector.broadcast %cst : f32 to vector<2x8xf32>
    %cst_11 = arith.constant dense<0.000000e+00> : vector<128x128xf32>
    %16 = tpu.matmul %3, %0, %cst_11 {dimension_numbers = #tpu.dot_dimension_numbers<[1], [0], [0], [1], [0, 0, 1, 1], [], []>} : vector<128x32xf32>, vector<32x128xf32>, vector<128x128xf32> -> vector<128x128xf32>
    %c0_12 = arith.constant 0 : index
    %c0_13 = arith.constant 0 : index
    %17 = vector.load %arg1[%c0_12, %c0_13] : memref<128x16xf32, #tpu.memory_space<vmem>>, vector<128x2xf32>
    %18 = vector.extract_strided_slice %17 {offsets = [0, 0], sizes = [128, 1], strides = [1, 1]} : vector<128x2xf32> to vector<128x1xf32>
    %19 = vector.extract_strided_slice %17 {offsets = [0, 1], sizes = [128, 1], strides = [1, 1]} : vector<128x2xf32> to vector<128x1xf32>
    %20 = vector.shape_cast %10 : vector<1x128xi1> to vector<1x128xi1>
    %21 = vector.broadcast %20 : vector<1x128xi1> to vector<128x128xi1>
    %22 = vector.shape_cast %18 : vector<128x1xf32> to vector<128x1xf32>
    %23 = vector.broadcast %22 : vector<128x1xf32> to vector<128x128xf32>
    %24 = vector.shape_cast %19 : vector<128x1xf32> to vector<128x1xf32>
    %25 = vector.broadcast %24 : vector<128x1xf32> to vector<128x128xf32>
    %26 = arith.select %21, %23, %25 : vector<128x128xi1>, vector<128x128xf32>
    %27 = arith.addf %16, %26 : vector<128x128xf32>
    %28 = vector.extract_strided_slice %27 {offsets = [0, 0], sizes = [96, 128], strides = [1, 1]} : vector<128x128xf32> to vector<96x128xf32>
    %29 = arith.negf %28 : vector<96x128xf32>
    %30 = math.exp %29 : vector<96x128xf32>
    %cst_14 = arith.constant 1.000000e+00 : f32
    %31 = vector.broadcast %cst_14 : f32 to vector<96x128xf32>
    %32 = arith.addf %31, %30 : vector<96x128xf32>
    %33 = arith.divf %31, %32 : vector<96x128xf32>
    %34 = vector.extract_strided_slice %27 {offsets = [96, 0], sizes = [32, 128], strides = [1, 1]} : vector<128x128xf32> to vector<32x128xf32>
    %35 = math.tanh %34 : vector<32x128xf32>
    %36 = vector.extract_strided_slice %33 {offsets = [0, 0], sizes = [32, 128], strides = [1, 1]} : vector<96x128xf32> to vector<32x128xf32>
    %37 = vector.extract_strided_slice %33 {offsets = [32, 0], sizes = [32, 128], strides = [1, 1]} : vector<96x128xf32> to vector<32x128xf32>
    %38 = vector.extract_strided_slice %33 {offsets = [64, 0], sizes = [32, 128], strides = [1, 1]} : vector<96x128xf32> to vector<32x128xf32>
    %39 = arith.mulf %37, %1 : vector<32x128xf32>
    %40 = arith.mulf %36, %35 : vector<32x128xf32>
    %41 = arith.addf %39, %40 : vector<32x128xf32>
    %42 = math.tanh %41 : vector<32x128xf32>
    %43 = arith.mulf %38, %42 : vector<32x128xf32>
    %cst_15 = arith.constant dense<0.000000e+00> : vector<2x128xf32>
    %44 = tpu.matmul %4, %43, %cst_15 {dimension_numbers = #tpu.dot_dimension_numbers<[1], [0], [0], [1], [0, 0, 1, 1], [], []>} : vector<2x32xf32>, vector<32x128xf32>, vector<2x128xf32> -> vector<2x128xf32>
    %45 = vector.extract_strided_slice %44 {offsets = [0, 0], sizes = [1, 128], strides = [1, 1]} : vector<2x128xf32> to vector<1x128xf32>
    %c0_16 = arith.constant 0 : index
    %c0_17 = arith.constant 0 : index
    %46 = vector.load %arg2[%c0_16, %c0_17] : memref<8x128xf32, #tpu.memory_space<vmem>>, vector<1x128xf32>
    %47 = arith.addf %45, %46 : vector<1x128xf32>
    %48 = vector.extract_strided_slice %44 {offsets = [1, 0], sizes = [1, 128], strides = [1, 1]} : vector<2x128xf32> to vector<1x128xf32>
    %49 = arith.addf %48, %7 : vector<1x128xf32>
    %50 = arith.addf %2, %47 : vector<1x128xf32>
    %cst_18 = arith.constant 0xFF800000 : f32
    %51 = vector.broadcast %cst_18 : f32 to vector<1x128xf32>
    %52 = arith.select %10, %50, %51 : vector<1x128xi1>, vector<1x128xf32>
    %cst_19 = arith.constant dense<0xFF800000> : vector<1xf32>
    %53 = vector.multi_reduction <maximumf>, %52, %cst_19 [1] : vector<1x128xf32> to vector<1xf32>
    %54 = vector.shape_cast %53 : vector<1xf32> to vector<1x1xf32>
    %cst_20 = arith.constant 0xFF800000 : f32
    %55 = vector.broadcast %cst_20 : f32 to vector<1x128xf32>
    %56 = arith.select %10, %55, %50 : vector<1x128xi1>, vector<1x128xf32>
    %cst_21 = arith.constant dense<0xFF800000> : vector<1xf32>
    %57 = vector.multi_reduction <maximumf>, %56, %cst_21 [1] : vector<1x128xf32> to vector<1xf32>
    %58 = vector.shape_cast %57 : vector<1xf32> to vector<1x1xf32>
    %59 = vector.shape_cast %54 : vector<1x1xf32> to vector<1x1xf32>
    %60 = vector.broadcast %59 : vector<1x1xf32> to vector<1x128xf32>
    %61 = vector.shape_cast %58 : vector<1x1xf32> to vector<1x1xf32>
    %62 = vector.broadcast %61 : vector<1x1xf32> to vector<1x128xf32>
    %63 = arith.select %10, %60, %62 : vector<1x128xi1>, vector<1x128xf32>
    %64 = arith.subf %50, %63 : vector<1x128xf32>
    %65 = math.exp %64 : vector<1x128xf32>
    %cst_22 = arith.constant 0.000000e+00 : f32
    %66 = vector.broadcast %cst_22 : f32 to vector<1x128xf32>
    %67 = arith.select %10, %65, %66 : vector<1x128xi1>, vector<1x128xf32>
    %cst_23 = arith.constant dense<0.000000e+00> : vector<1xf32>
    %68 = vector.multi_reduction <add>, %67, %cst_23 [1] : vector<1x128xf32> to vector<1xf32>
    %69 = vector.shape_cast %68 : vector<1xf32> to vector<1x1xf32>
    %cst_24 = arith.constant 0.000000e+00 : f32
    %70 = vector.broadcast %cst_24 : f32 to vector<1x128xf32>
    %71 = arith.select %10, %70, %65 : vector<1x128xi1>, vector<1x128xf32>
    %cst_25 = arith.constant dense<0.000000e+00> : vector<1xf32>
    %72 = vector.multi_reduction <add>, %71, %cst_25 [1] : vector<1x128xf32> to vector<1xf32>
    %73 = vector.shape_cast %72 : vector<1xf32> to vector<1x1xf32>
    %74 = vector.shape_cast %69 : vector<1x1xf32> to vector<1x1xf32>
    %75 = vector.broadcast %74 : vector<1x1xf32> to vector<1x128xf32>
    %76 = vector.shape_cast %73 : vector<1x1xf32> to vector<1x1xf32>
    %77 = vector.broadcast %76 : vector<1x1xf32> to vector<1x128xf32>
    %78 = arith.select %10, %75, %77 : vector<1x128xi1>, vector<1x128xf32>
    %79 = math.log %78 : vector<1x128xf32>
    %80 = arith.addf %63, %79 : vector<1x128xf32>
    %81 = arith.subf %50, %80 : vector<1x128xf32>
    %82 = math.exp %81 : vector<1x128xf32>
    %83 = arith.mulf %82, %49 : vector<1x128xf32>
    %cst_26 = arith.constant 0.000000e+00 : f32
    %84 = vector.broadcast %cst_26 : f32 to vector<1x128xf32>
    %85 = arith.select %10, %83, %84 : vector<1x128xi1>, vector<1x128xf32>
    %cst_27 = arith.constant dense<0.000000e+00> : vector<1xf32>
    %86 = vector.multi_reduction <add>, %85, %cst_27 [1] : vector<1x128xf32> to vector<1xf32>
    %87 = vector.shape_cast %86 : vector<1xf32> to vector<1x1xf32>
    %cst_28 = arith.constant 0.000000e+00 : f32
    %88 = vector.broadcast %cst_28 : f32 to vector<1x128xf32>
    %89 = arith.select %10, %88, %83 : vector<1x128xi1>, vector<1x128xf32>
    %cst_29 = arith.constant dense<0.000000e+00> : vector<1xf32>
    %90 = vector.multi_reduction <add>, %89, %cst_29 [1] : vector<1x128xf32> to vector<1xf32>
    %91 = vector.shape_cast %90 : vector<1xf32> to vector<1x1xf32>
    %92 = vector.shape_cast %87 : vector<1x1xf32> to vector<1x1xf32>
    %93 = vector.broadcast %92 : vector<1x1xf32> to vector<2x1xf32>
    %94 = vector.shape_cast %91 : vector<1x1xf32> to vector<1x1xf32>
    %95 = vector.broadcast %94 : vector<1x1xf32> to vector<2x1xf32>
    %96 = arith.select %14, %93, %95 : vector<2x1xi1>, vector<2x1xf32>
    %c0_i32_30 = arith.constant 0 : i32
    %97 = vector.broadcast %c0_i32_30 : i32 to vector<1x8xi32>
    %98 = arith.cmpi eq, %11, %97 : vector<1x8xi32>
    %99 = vector.shape_cast %98 : vector<1x8xi1> to vector<1x8xi1>
    %100 = vector.broadcast %99 : vector<1x8xi1> to vector<2x8xi1>
    %101 = vector.shape_cast %96 : vector<2x1xf32> to vector<2x1xf32>
    %102 = vector.broadcast %101 : vector<2x1xf32> to vector<2x8xf32>
    %103 = arith.select %100, %102, %15 : vector<2x8xi1>, vector<2x8xf32>
    %cst_31 = arith.constant 0.000000e+00 : f32
    %104 = vector.broadcast %cst_31 : f32 to vector<1x128xf32>
    %105 = arith.cmpf oge, %49, %104 : vector<1x128xf32>
    %cst_32 = arith.constant 0.00999999977 : f32
    %106 = vector.broadcast %cst_32 : f32 to vector<1x128xf32>
    %107 = arith.mulf %106, %49 : vector<1x128xf32>
    %108 = arith.select %105, %49, %107 : vector<1x128xi1>, vector<1x128xf32>
    %c0_33 = arith.constant 0 : index
    %c0_34 = arith.constant 0 : index
    %109 = vector.load %arg10[%c0_33, %c0_34] : memref<8x128xf32, #tpu.memory_space<vmem>>, vector<1x128xf32>
    tpu.vector_store %arg10[%c0_33, %c0_34], %108 {strides = array<i32>} : memref<8x128xf32, #tpu.memory_space<vmem>>, vector<1x128xf32>,
    %cst_35 = arith.constant dense<0.000000e+00> : vector<128x128xf32>
    %110 = tpu.matmul %3, %43, %cst_35 {dimension_numbers = #tpu.dot_dimension_numbers<[1], [0], [0], [1], [0, 0, 1, 1], [], []>} : vector<128x32xf32>, vector<32x128xf32>, vector<128x128xf32> -> vector<128x128xf32>
    %c0_36 = arith.constant 0 : index
    %c2 = arith.constant 2 : index
    %111 = vector.load %arg1[%c0_36, %c2] : memref<128x16xf32, #tpu.memory_space<vmem>>, vector<128x2xf32>
    %112 = vector.extract_strided_slice %111 {offsets = [0, 0], sizes = [128, 1], strides = [1, 1]} : vector<128x2xf32> to vector<128x1xf32>
    %113 = vector.extract_strided_slice %111 {offsets = [0, 1], sizes = [128, 1], strides = [1, 1]} : vector<128x2xf32> to vector<128x1xf32>
    %114 = vector.shape_cast %10 : vector<1x128xi1> to vector<1x128xi1>
    %115 = vector.broadcast %114 : vector<1x128xi1> to vector<128x128xi1>
    %116 = vector.shape_cast %112 : vector<128x1xf32> to vector<128x1xf32>
    %117 = vector.broadcast %116 : vector<128x1xf32> to vector<128x128xf32>
    %118 = vector.shape_cast %113 : vector<128x1xf32> to vector<128x1xf32>
    %119 = vector.broadcast %118 : vector<128x1xf32> to vector<128x128xf32>
    %120 = arith.select %115, %117, %119 : vector<128x128xi1>, vector<128x128xf32>
    %121 = arith.addf %110, %120 : vector<128x128xf32>
    %122 = vector.extract_strided_slice %121 {offsets = [0, 0], sizes = [96, 128], strides = [1, 1]} : vector<128x128xf32> to vector<96x128xf32>
    %123 = arith.negf %122 : vector<96x128xf32>
    %124 = math.exp %123 : vector<96x128xf32>
    %cst_37 = arith.constant 1.000000e+00 : f32
    %125 = vector.broadcast %cst_37 : f32 to vector<96x128xf32>
    %126 = arith.addf %125, %124 : vector<96x128xf32>
    %127 = arith.divf %125, %126 : vector<96x128xf32>
    %128 = vector.extract_strided_slice %121 {offsets = [96, 0], sizes = [32, 128], strides = [1, 1]} : vector<128x128xf32> to vector<32x128xf32>
    %129 = math.tanh %128 : vector<32x128xf32>
    %130 = vector.extract_strided_slice %127 {offsets = [0, 0], sizes = [32, 128], strides = [1, 1]} : vector<96x128xf32> to vector<32x128xf32>
    %131 = vector.extract_strided_slice %127 {offsets = [32, 0], sizes = [32, 128], strides = [1, 1]} : vector<96x128xf32> to vector<32x128xf32>
    %132 = vector.extract_strided_slice %127 {offsets = [64, 0], sizes = [32, 128], strides = [1, 1]} : vector<96x128xf32> to vector<32x128xf32>
    %133 = arith.mulf %131, %41 : vector<32x128xf32>
    %134 = arith.mulf %130, %129 : vector<32x128xf32>
    %135 = arith.addf %133, %134 : vector<32x128xf32>
    %136 = math.tanh %135 : vector<32x128xf32>
    %137 = arith.mulf %132, %136 : vector<32x128xf32>
    %cst_38 = arith.constant dense<0.000000e+00> : vector<2x128xf32>
    %138 = tpu.matmul %4, %137, %cst_38 {dimension_numbers = #tpu.dot_dimension_numbers<[1], [0], [0], [1], [0, 0, 1, 1], [], []>} : vector<2x32xf32>, vector<32x128xf32>, vector<2x128xf32> -> vector<2x128xf32>
    %139 = vector.extract_strided_slice %138 {offsets = [0, 0], sizes = [1, 128], strides = [1, 1]} : vector<2x128xf32> to vector<1x128xf32>
    %c1 = arith.constant 1 : index
    %c0_39 = arith.constant 0 : index
    %140 = vector.load %arg2[%c1, %c0_39] : memref<8x128xf32, #tpu.memory_space<vmem>>, vector<1x128xf32>
    %141 = arith.addf %139, %140 : vector<1x128xf32>
    %142 = vector.extract_strided_slice %138 {offsets = [1, 0], sizes = [1, 128], strides = [1, 1]} : vector<2x128xf32> to vector<1x128xf32>
    %143 = arith.addf %142, %7 : vector<1x128xf32>
    %144 = arith.addf %81, %141 : vector<1x128xf32>
    %cst_40 = arith.constant 0xFF800000 : f32
    %145 = vector.broadcast %cst_40 : f32 to vector<1x128xf32>
    %146 = arith.select %10, %144, %145 : vector<1x128xi1>, vector<1x128xf32>
    %cst_41 = arith.constant dense<0xFF800000> : vector<1xf32>
    %147 = vector.multi_reduction <maximumf>, %146, %cst_41 [1] : vector<1x128xf32> to vector<1xf32>
    %148 = vector.shape_cast %147 : vector<1xf32> to vector<1x1xf32>
    %cst_42 = arith.constant 0xFF800000 : f32
    %149 = vector.broadcast %cst_42 : f32 to vector<1x128xf32>
    %150 = arith.select %10, %149, %144 : vector<1x128xi1>, vector<1x128xf32>
    %cst_43 = arith.constant dense<0xFF800000> : vector<1xf32>
    %151 = vector.multi_reduction <maximumf>, %150, %cst_43 [1] : vector<1x128xf32> to vector<1xf32>
    %152 = vector.shape_cast %151 : vector<1xf32> to vector<1x1xf32>
    %153 = vector.shape_cast %148 : vector<1x1xf32> to vector<1x1xf32>
    %154 = vector.broadcast %153 : vector<1x1xf32> to vector<1x128xf32>
    %155 = vector.shape_cast %152 : vector<1x1xf32> to vector<1x1xf32>
    %156 = vector.broadcast %155 : vector<1x1xf32> to vector<1x128xf32>
    %157 = arith.select %10, %154, %156 : vector<1x128xi1>, vector<1x128xf32>
    %158 = arith.subf %144, %157 : vector<1x128xf32>
    %159 = math.exp %158 : vector<1x128xf32>
    %cst_44 = arith.constant 0.000000e+00 : f32
    %160 = vector.broadcast %cst_44 : f32 to vector<1x128xf32>
    %161 = arith.select %10, %159, %160 : vector<1x128xi1>, vector<1x128xf32>
    %cst_45 = arith.constant dense<0.000000e+00> : vector<1xf32>
    %162 = vector.multi_reduction <add>, %161, %cst_45 [1] : vector<1x128xf32> to vector<1xf32>
    %163 = vector.shape_cast %162 : vector<1xf32> to vector<1x1xf32>
    %cst_46 = arith.constant 0.000000e+00 : f32
    %164 = vector.broadcast %cst_46 : f32 to vector<1x128xf32>
    %165 = arith.select %10, %164, %159 : vector<1x128xi1>, vector<1x128xf32>
    %cst_47 = arith.constant dense<0.000000e+00> : vector<1xf32>
    %166 = vector.multi_reduction <add>, %165, %cst_47 [1] : vector<1x128xf32> to vector<1xf32>
    %167 = vector.shape_cast %166 : vector<1xf32> to vector<1x1xf32>
    %168 = vector.shape_cast %163 : vector<1x1xf32> to vector<1x1xf32>
    %169 = vector.broadcast %168 : vector<1x1xf32> to vector<1x128xf32>
    %170 = vector.shape_cast %167 : vector<1x1xf32> to vector<1x1xf32>
    %171 = vector.broadcast %170 : vector<1x1xf32> to vector<1x128xf32>
    %172 = arith.select %10, %169, %171 : vector<1x128xi1>, vector<1x128xf32>
    %173 = math.log %172 : vector<1x128xf32>
    %174 = arith.addf %157, %173 : vector<1x128xf32>
    %175 = arith.subf %144, %174 : vector<1x128xf32>
    %176 = math.exp %175 : vector<1x128xf32>
    %177 = arith.mulf %176, %143 : vector<1x128xf32>
    %cst_48 = arith.constant 0.000000e+00 : f32
    %178 = vector.broadcast %cst_48 : f32 to vector<1x128xf32>
    %179 = arith.select %10, %177, %178 : vector<1x128xi1>, vector<1x128xf32>
    %cst_49 = arith.constant dense<0.000000e+00> : vector<1xf32>
    %180 = vector.multi_reduction <add>, %179, %cst_49 [1] : vector<1x128xf32> to vector<1xf32>
    %181 = vector.shape_cast %180 : vector<1xf32> to vector<1x1xf32>
    %cst_50 = arith.constant 0.000000e+00 : f32
    %182 = vector.broadcast %cst_50 : f32 to vector<1x128xf32>
    %183 = arith.select %10, %182, %177 : vector<1x128xi1>, vector<1x128xf32>
    %cst_51 = arith.constant dense<0.000000e+00> : vector<1xf32>
    %184 = vector.multi_reduction <add>, %183, %cst_51 [1] : vector<1x128xf32> to vector<1xf32>
    %185 = vector.shape_cast %184 : vector<1xf32> to vector<1x1xf32>
    %186 = vector.shape_cast %181 : vector<1x1xf32> to vector<1x1xf32>
    %187 = vector.broadcast %186 : vector<1x1xf32> to vector<2x1xf32>
    %188 = vector.shape_cast %185 : vector<1x1xf32> to vector<1x1xf32>
    %189 = vector.broadcast %188 : vector<1x1xf32> to vector<2x1xf32>
    %190 = arith.select %14, %187, %189 : vector<2x1xi1>, vector<2x1xf32>
    %c1_i32 = arith.constant 1 : i32
    %191 = vector.broadcast %c1_i32 : i32 to vector<1x8xi32>
    %192 = arith.cmpi eq, %11, %191 : vector<1x8xi32>
    %193 = vector.shape_cast %192 : vector<1x8xi1> to vector<1x8xi1>
    %194 = vector.broadcast %193 : vector<1x8xi1> to vector<2x8xi1>
    %195 = vector.shape_cast %190 : vector<2x1xf32> to vector<2x1xf32>
    %196 = vector.broadcast %195 : vector<2x1xf32> to vector<2x8xf32>
    %197 = arith.select %194, %196, %103 : vector<2x8xi1>, vector<2x8xf32>
    %cst_52 = arith.constant 0.000000e+00 : f32
    %198 = vector.broadcast %cst_52 : f32 to vector<1x128xf32>
    %199 = arith.cmpf oge, %143, %198 : vector<1x128xf32>
    %cst_53 = arith.constant 0.00999999977 : f32
    %200 = vector.broadcast %cst_53 : f32 to vector<1x128xf32>
    %201 = arith.mulf %200, %143 : vector<1x128xf32>
    %202 = arith.select %199, %143, %201 : vector<1x128xi1>, vector<1x128xf32>
    %c1_54 = arith.constant 1 : index
    %c0_55 = arith.constant 0 : index
    %203 = vector.load %arg10[%c1_54, %c0_55] : memref<8x128xf32, #tpu.memory_space<vmem>>, vector<1x128xf32>
    tpu.vector_store %arg10[%c1_54, %c0_55], %202 {strides = array<i32>} : memref<8x128xf32, #tpu.memory_space<vmem>>, vector<1x128xf32>,
    %cst_56 = arith.constant dense<0.000000e+00> : vector<128x128xf32>
    %204 = tpu.matmul %3, %137, %cst_56 {dimension_numbers = #tpu.dot_dimension_numbers<[1], [0], [0], [1], [0, 0, 1, 1], [], []>} : vector<128x32xf32>, vector<32x128xf32>, vector<128x128xf32> -> vector<128x128xf32>
    %c0_57 = arith.constant 0 : index
    %c4 = arith.constant 4 : index
    %205 = vector.load %arg1[%c0_57, %c4] : memref<128x16xf32, #tpu.memory_space<vmem>>, vector<128x2xf32>
    %206 = vector.extract_strided_slice %205 {offsets = [0, 0], sizes = [128, 1], strides = [1, 1]} : vector<128x2xf32> to vector<128x1xf32>
    %207 = vector.extract_strided_slice %205 {offsets = [0, 1], sizes = [128, 1], strides = [1, 1]} : vector<128x2xf32> to vector<128x1xf32>
    %208 = vector.shape_cast %10 : vector<1x128xi1> to vector<1x128xi1>
    %209 = vector.broadcast %208 : vector<1x128xi1> to vector<128x128xi1>
    %210 = vector.shape_cast %206 : vector<128x1xf32> to vector<128x1xf32>
    %211 = vector.broadcast %210 : vector<128x1xf32> to vector<128x128xf32>
    %212 = vector.shape_cast %207 : vector<128x1xf32> to vector<128x1xf32>
    %213 = vector.broadcast %212 : vector<128x1xf32> to vector<128x128xf32>
    %214 = arith.select %209, %211, %213 : vector<128x128xi1>, vector<128x128xf32>
    %215 = arith.addf %204, %214 : vector<128x128xf32>
    %216 = vector.extract_strided_slice %215 {offsets = [0, 0], sizes = [96, 128], strides = [1, 1]} : vector<128x128xf32> to vector<96x128xf32>
    %217 = arith.negf %216 : vector<96x128xf32>
    %218 = math.exp %217 : vector<96x128xf32>
    %cst_58 = arith.constant 1.000000e+00 : f32
    %219 = vector.broadcast %cst_58 : f32 to vector<96x128xf32>
    %220 = arith.addf %219, %218 : vector<96x128xf32>
    %221 = arith.divf %219, %220 : vector<96x128xf32>
    %222 = vector.extract_strided_slice %215 {offsets = [96, 0], sizes = [32, 128], strides = [1, 1]} : vector<128x128xf32> to vector<32x128xf32>
    %223 = math.tanh %222 : vector<32x128xf32>
    %224 = vector.extract_strided_slice %221 {offsets = [0, 0], sizes = [32, 128], strides = [1, 1]} : vector<96x128xf32> to vector<32x128xf32>
    %225 = vector.extract_strided_slice %221 {offsets = [32, 0], sizes = [32, 128], strides = [1, 1]} : vector<96x128xf32> to vector<32x128xf32>
    %226 = vector.extract_strided_slice %221 {offsets = [64, 0], sizes = [32, 128], strides = [1, 1]} : vector<96x128xf32> to vector<32x128xf32>
    %227 = arith.mulf %225, %135 : vector<32x128xf32>
    %228 = arith.mulf %224, %223 : vector<32x128xf32>
    %229 = arith.addf %227, %228 : vector<32x128xf32>
    %230 = math.tanh %229 : vector<32x128xf32>
    %231 = arith.mulf %226, %230 : vector<32x128xf32>
    %cst_59 = arith.constant dense<0.000000e+00> : vector<2x128xf32>
    %232 = tpu.matmul %4, %231, %cst_59 {dimension_numbers = #tpu.dot_dimension_numbers<[1], [0], [0], [1], [0, 0, 1, 1], [], []>} : vector<2x32xf32>, vector<32x128xf32>, vector<2x128xf32> -> vector<2x128xf32>
    %233 = vector.extract_strided_slice %232 {offsets = [0, 0], sizes = [1, 128], strides = [1, 1]} : vector<2x128xf32> to vector<1x128xf32>
    %c2_60 = arith.constant 2 : index
    %c0_61 = arith.constant 0 : index
    %234 = vector.load %arg2[%c2_60, %c0_61] : memref<8x128xf32, #tpu.memory_space<vmem>>, vector<1x128xf32>
    %235 = arith.addf %233, %234 : vector<1x128xf32>
    %236 = vector.extract_strided_slice %232 {offsets = [1, 0], sizes = [1, 128], strides = [1, 1]} : vector<2x128xf32> to vector<1x128xf32>
    %237 = arith.addf %236, %7 : vector<1x128xf32>
    %238 = arith.addf %175, %235 : vector<1x128xf32>
    %cst_62 = arith.constant 0xFF800000 : f32
    %239 = vector.broadcast %cst_62 : f32 to vector<1x128xf32>
    %240 = arith.select %10, %238, %239 : vector<1x128xi1>, vector<1x128xf32>
    %cst_63 = arith.constant dense<0xFF800000> : vector<1xf32>
    %241 = vector.multi_reduction <maximumf>, %240, %cst_63 [1] : vector<1x128xf32> to vector<1xf32>
    %242 = vector.shape_cast %241 : vector<1xf32> to vector<1x1xf32>
    %cst_64 = arith.constant 0xFF800000 : f32
    %243 = vector.broadcast %cst_64 : f32 to vector<1x128xf32>
    %244 = arith.select %10, %243, %238 : vector<1x128xi1>, vector<1x128xf32>
    %cst_65 = arith.constant dense<0xFF800000> : vector<1xf32>
    %245 = vector.multi_reduction <maximumf>, %244, %cst_65 [1] : vector<1x128xf32> to vector<1xf32>
    %246 = vector.shape_cast %245 : vector<1xf32> to vector<1x1xf32>
    %247 = vector.shape_cast %242 : vector<1x1xf32> to vector<1x1xf32>
    %248 = vector.broadcast %247 : vector<1x1xf32> to vector<1x128xf32>
    %249 = vector.shape_cast %246 : vector<1x1xf32> to vector<1x1xf32>
    %250 = vector.broadcast %249 : vector<1x1xf32> to vector<1x128xf32>
    %251 = arith.select %10, %248, %250 : vector<1x128xi1>, vector<1x128xf32>
    %252 = arith.subf %238, %251 : vector<1x128xf32>
    %253 = math.exp %252 : vector<1x128xf32>
    %cst_66 = arith.constant 0.000000e+00 : f32
    %254 = vector.broadcast %cst_66 : f32 to vector<1x128xf32>
    %255 = arith.select %10, %253, %254 : vector<1x128xi1>, vector<1x128xf32>
    %cst_67 = arith.constant dense<0.000000e+00> : vector<1xf32>
    %256 = vector.multi_reduction <add>, %255, %cst_67 [1] : vector<1x128xf32> to vector<1xf32>
    %257 = vector.shape_cast %256 : vector<1xf32> to vector<1x1xf32>
    %cst_68 = arith.constant 0.000000e+00 : f32
    %258 = vector.broadcast %cst_68 : f32 to vector<1x128xf32>
    %259 = arith.select %10, %258, %253 : vector<1x128xi1>, vector<1x128xf32>
    %cst_69 = arith.constant dense<0.000000e+00> : vector<1xf32>
    %260 = vector.multi_reduction <add>, %259, %cst_69 [1] : vector<1x128xf32> to vector<1xf32>
    %261 = vector.shape_cast %260 : vector<1xf32> to vector<1x1xf32>
    %262 = vector.shape_cast %257 : vector<1x1xf32> to vector<1x1xf32>
    %263 = vector.broadcast %262 : vector<1x1xf32> to vector<1x128xf32>
    %264 = vector.shape_cast %261 : vector<1x1xf32> to vector<1x1xf32>
    %265 = vector.broadcast %264 : vector<1x1xf32> to vector<1x128xf32>
    %266 = arith.select %10, %263, %265 : vector<1x128xi1>, vector<1x128xf32>
    %267 = math.log %266 : vector<1x128xf32>
    %268 = arith.addf %251, %267 : vector<1x128xf32>
    %269 = arith.subf %238, %268 : vector<1x128xf32>
    %270 = math.exp %269 : vector<1x128xf32>
    %271 = arith.mulf %270, %237 : vector<1x128xf32>
    %cst_70 = arith.constant 0.000000e+00 : f32
    %272 = vector.broadcast %cst_70 : f32 to vector<1x128xf32>
    %273 = arith.select %10, %271, %272 : vector<1x128xi1>, vector<1x128xf32>
    %cst_71 = arith.constant dense<0.000000e+00> : vector<1xf32>
    %274 = vector.multi_reduction <add>, %273, %cst_71 [1] : vector<1x128xf32> to vector<1xf32>
    %275 = vector.shape_cast %274 : vector<1xf32> to vector<1x1xf32>
    %cst_72 = arith.constant 0.000000e+00 : f32
    %276 = vector.broadcast %cst_72 : f32 to vector<1x128xf32>
    %277 = arith.select %10, %276, %271 : vector<1x128xi1>, vector<1x128xf32>
    %cst_73 = arith.constant dense<0.000000e+00> : vector<1xf32>
    %278 = vector.multi_reduction <add>, %277, %cst_73 [1] : vector<1x128xf32> to vector<1xf32>
    %279 = vector.shape_cast %278 : vector<1xf32> to vector<1x1xf32>
    %280 = vector.shape_cast %275 : vector<1x1xf32> to vector<1x1xf32>
    %281 = vector.broadcast %280 : vector<1x1xf32> to vector<2x1xf32>
    %282 = vector.shape_cast %279 : vector<1x1xf32> to vector<1x1xf32>
    %283 = vector.broadcast %282 : vector<1x1xf32> to vector<2x1xf32>
    %284 = arith.select %14, %281, %283 : vector<2x1xi1>, vector<2x1xf32>
    %c2_i32 = arith.constant 2 : i32
    %285 = vector.broadcast %c2_i32 : i32 to vector<1x8xi32>
    %286 = arith.cmpi eq, %11, %285 : vector<1x8xi32>
    %287 = vector.shape_cast %286 : vector<1x8xi1> to vector<1x8xi1>
    %288 = vector.broadcast %287 : vector<1x8xi1> to vector<2x8xi1>
    %289 = vector.shape_cast %284 : vector<2x1xf32> to vector<2x1xf32>
    %290 = vector.broadcast %289 : vector<2x1xf32> to vector<2x8xf32>
    %291 = arith.select %288, %290, %197 : vector<2x8xi1>, vector<2x8xf32>
    %cst_74 = arith.constant 0.000000e+00 : f32
    %292 = vector.broadcast %cst_74 : f32 to vector<1x128xf32>
    %293 = arith.cmpf oge, %237, %292 : vector<1x128xf32>
    %cst_75 = arith.constant 0.00999999977 : f32
    %294 = vector.broadcast %cst_75 : f32 to vector<1x128xf32>
    %295 = arith.mulf %294, %237 : vector<1x128xf32>
    %296 = arith.select %293, %237, %295 : vector<1x128xi1>, vector<1x128xf32>
    %c2_76 = arith.constant 2 : index
    %c0_77 = arith.constant 0 : index
    %297 = vector.load %arg10[%c2_76, %c0_77] : memref<8x128xf32, #tpu.memory_space<vmem>>, vector<1x128xf32>
    tpu.vector_store %arg10[%c2_76, %c0_77], %296 {strides = array<i32>} : memref<8x128xf32, #tpu.memory_space<vmem>>, vector<1x128xf32>,
    %cst_78 = arith.constant dense<0.000000e+00> : vector<128x128xf32>
    %298 = tpu.matmul %3, %231, %cst_78 {dimension_numbers = #tpu.dot_dimension_numbers<[1], [0], [0], [1], [0, 0, 1, 1], [], []>} : vector<128x32xf32>, vector<32x128xf32>, vector<128x128xf32> -> vector<128x128xf32>
    %c0_79 = arith.constant 0 : index
    %c6 = arith.constant 6 : index
    %299 = vector.load %arg1[%c0_79, %c6] : memref<128x16xf32, #tpu.memory_space<vmem>>, vector<128x2xf32>
    %300 = vector.extract_strided_slice %299 {offsets = [0, 0], sizes = [128, 1], strides = [1, 1]} : vector<128x2xf32> to vector<128x1xf32>
    %301 = vector.extract_strided_slice %299 {offsets = [0, 1], sizes = [128, 1], strides = [1, 1]} : vector<128x2xf32> to vector<128x1xf32>
    %302 = vector.shape_cast %10 : vector<1x128xi1> to vector<1x128xi1>
    %303 = vector.broadcast %302 : vector<1x128xi1> to vector<128x128xi1>
    %304 = vector.shape_cast %300 : vector<128x1xf32> to vector<128x1xf32>
    %305 = vector.broadcast %304 : vector<128x1xf32> to vector<128x128xf32>
    %306 = vector.shape_cast %301 : vector<128x1xf32> to vector<128x1xf32>
    %307 = vector.broadcast %306 : vector<128x1xf32> to vector<128x128xf32>
    %308 = arith.select %303, %305, %307 : vector<128x128xi1>, vector<128x128xf32>
    %309 = arith.addf %298, %308 : vector<128x128xf32>
    %310 = vector.extract_strided_slice %309 {offsets = [0, 0], sizes = [96, 128], strides = [1, 1]} : vector<128x128xf32> to vector<96x128xf32>
    %311 = arith.negf %310 : vector<96x128xf32>
    %312 = math.exp %311 : vector<96x128xf32>
    %cst_80 = arith.constant 1.000000e+00 : f32
    %313 = vector.broadcast %cst_80 : f32 to vector<96x128xf32>
    %314 = arith.addf %313, %312 : vector<96x128xf32>
    %315 = arith.divf %313, %314 : vector<96x128xf32>
    %316 = vector.extract_strided_slice %309 {offsets = [96, 0], sizes = [32, 128], strides = [1, 1]} : vector<128x128xf32> to vector<32x128xf32>
    %317 = math.tanh %316 : vector<32x128xf32>
    %318 = vector.extract_strided_slice %315 {offsets = [0, 0], sizes = [32, 128], strides = [1, 1]} : vector<96x128xf32> to vector<32x128xf32>
    %319 = vector.extract_strided_slice %315 {offsets = [32, 0], sizes = [32, 128], strides = [1, 1]} : vector<96x128xf32> to vector<32x128xf32>
    %320 = vector.extract_strided_slice %315 {offsets = [64, 0], sizes = [32, 128], strides = [1, 1]} : vector<96x128xf32> to vector<32x128xf32>
    %321 = arith.mulf %319, %229 : vector<32x128xf32>
    %322 = arith.mulf %318, %317 : vector<32x128xf32>
    %323 = arith.addf %321, %322 : vector<32x128xf32>
    %324 = math.tanh %323 : vector<32x128xf32>
    %325 = arith.mulf %320, %324 : vector<32x128xf32>
    %cst_81 = arith.constant dense<0.000000e+00> : vector<2x128xf32>
    %326 = tpu.matmul %4, %325, %cst_81 {dimension_numbers = #tpu.dot_dimension_numbers<[1], [0], [0], [1], [0, 0, 1, 1], [], []>} : vector<2x32xf32>, vector<32x128xf32>, vector<2x128xf32> -> vector<2x128xf32>
    %327 = vector.extract_strided_slice %326 {offsets = [0, 0], sizes = [1, 128], strides = [1, 1]} : vector<2x128xf32> to vector<1x128xf32>
    %c3 = arith.constant 3 : index
    %c0_82 = arith.constant 0 : index
    %328 = vector.load %arg2[%c3, %c0_82] : memref<8x128xf32, #tpu.memory_space<vmem>>, vector<1x128xf32>
    %329 = arith.addf %327, %328 : vector<1x128xf32>
    %330 = vector.extract_strided_slice %326 {offsets = [1, 0], sizes = [1, 128], strides = [1, 1]} : vector<2x128xf32> to vector<1x128xf32>
    %331 = arith.addf %330, %7 : vector<1x128xf32>
    %332 = arith.addf %269, %329 : vector<1x128xf32>
    %cst_83 = arith.constant 0xFF800000 : f32
    %333 = vector.broadcast %cst_83 : f32 to vector<1x128xf32>
    %334 = arith.select %10, %332, %333 : vector<1x128xi1>, vector<1x128xf32>
    %cst_84 = arith.constant dense<0xFF800000> : vector<1xf32>
    %335 = vector.multi_reduction <maximumf>, %334, %cst_84 [1] : vector<1x128xf32> to vector<1xf32>
    %336 = vector.shape_cast %335 : vector<1xf32> to vector<1x1xf32>
    %cst_85 = arith.constant 0xFF800000 : f32
    %337 = vector.broadcast %cst_85 : f32 to vector<1x128xf32>
    %338 = arith.select %10, %337, %332 : vector<1x128xi1>, vector<1x128xf32>
    %cst_86 = arith.constant dense<0xFF800000> : vector<1xf32>
    %339 = vector.multi_reduction <maximumf>, %338, %cst_86 [1] : vector<1x128xf32> to vector<1xf32>
    %340 = vector.shape_cast %339 : vector<1xf32> to vector<1x1xf32>
    %341 = vector.shape_cast %336 : vector<1x1xf32> to vector<1x1xf32>
    %342 = vector.broadcast %341 : vector<1x1xf32> to vector<1x128xf32>
    %343 = vector.shape_cast %340 : vector<1x1xf32> to vector<1x1xf32>
    %344 = vector.broadcast %343 : vector<1x1xf32> to vector<1x128xf32>
    %345 = arith.select %10, %342, %344 : vector<1x128xi1>, vector<1x128xf32>
    %346 = arith.subf %332, %345 : vector<1x128xf32>
    %347 = math.exp %346 : vector<1x128xf32>
    %cst_87 = arith.constant 0.000000e+00 : f32
    %348 = vector.broadcast %cst_87 : f32 to vector<1x128xf32>
    %349 = arith.select %10, %347, %348 : vector<1x128xi1>, vector<1x128xf32>
    %cst_88 = arith.constant dense<0.000000e+00> : vector<1xf32>
    %350 = vector.multi_reduction <add>, %349, %cst_88 [1] : vector<1x128xf32> to vector<1xf32>
    %351 = vector.shape_cast %350 : vector<1xf32> to vector<1x1xf32>
    %cst_89 = arith.constant 0.000000e+00 : f32
    %352 = vector.broadcast %cst_89 : f32 to vector<1x128xf32>
    %353 = arith.select %10, %352, %347 : vector<1x128xi1>, vector<1x128xf32>
    %cst_90 = arith.constant dense<0.000000e+00> : vector<1xf32>
    %354 = vector.multi_reduction <add>, %353, %cst_90 [1] : vector<1x128xf32> to vector<1xf32>
    %355 = vector.shape_cast %354 : vector<1xf32> to vector<1x1xf32>
    %356 = vector.shape_cast %351 : vector<1x1xf32> to vector<1x1xf32>
    %357 = vector.broadcast %356 : vector<1x1xf32> to vector<1x128xf32>
    %358 = vector.shape_cast %355 : vector<1x1xf32> to vector<1x1xf32>
    %359 = vector.broadcast %358 : vector<1x1xf32> to vector<1x128xf32>
    %360 = arith.select %10, %357, %359 : vector<1x128xi1>, vector<1x128xf32>
    %361 = math.log %360 : vector<1x128xf32>
    %362 = arith.addf %345, %361 : vector<1x128xf32>
    %363 = arith.subf %332, %362 : vector<1x128xf32>
    %364 = math.exp %363 : vector<1x128xf32>
    %365 = arith.mulf %364, %331 : vector<1x128xf32>
    %cst_91 = arith.constant 0.000000e+00 : f32
    %366 = vector.broadcast %cst_91 : f32 to vector<1x128xf32>
    %367 = arith.select %10, %365, %366 : vector<1x128xi1>, vector<1x128xf32>
    %cst_92 = arith.constant dense<0.000000e+00> : vector<1xf32>
    %368 = vector.multi_reduction <add>, %367, %cst_92 [1] : vector<1x128xf32> to vector<1xf32>
    %369 = vector.shape_cast %368 : vector<1xf32> to vector<1x1xf32>
    %cst_93 = arith.constant 0.000000e+00 : f32
    %370 = vector.broadcast %cst_93 : f32 to vector<1x128xf32>
    %371 = arith.select %10, %370, %365 : vector<1x128xi1>, vector<1x128xf32>
    %cst_94 = arith.constant dense<0.000000e+00> : vector<1xf32>
    %372 = vector.multi_reduction <add>, %371, %cst_94 [1] : vector<1x128xf32> to vector<1xf32>
    %373 = vector.shape_cast %372 : vector<1xf32> to vector<1x1xf32>
    %374 = vector.shape_cast %369 : vector<1x1xf32> to vector<1x1xf32>
    %375 = vector.broadcast %374 : vector<1x1xf32> to vector<2x1xf32>
    %376 = vector.shape_cast %373 : vector<1x1xf32> to vector<1x1xf32>
    %377 = vector.broadcast %376 : vector<1x1xf32> to vector<2x1xf32>
    %378 = arith.select %14, %375, %377 : vector<2x1xi1>, vector<2x1xf32>
    %c3_i32 = arith.constant 3 : i32
    %379 = vector.broadcast %c3_i32 : i32 to vector<1x8xi32>
    %380 = arith.cmpi eq, %11, %379 : vector<1x8xi32>
    %381 = vector.shape_cast %380 : vector<1x8xi1> to vector<1x8xi1>
    %382 = vector.broadcast %381 : vector<1x8xi1> to vector<2x8xi1>
    %383 = vector.shape_cast %378 : vector<2x1xf32> to vector<2x1xf32>
    %384 = vector.broadcast %383 : vector<2x1xf32> to vector<2x8xf32>
    %385 = arith.select %382, %384, %291 : vector<2x8xi1>, vector<2x8xf32>
    %cst_95 = arith.constant 0.000000e+00 : f32
    %386 = vector.broadcast %cst_95 : f32 to vector<1x128xf32>
    %387 = arith.cmpf oge, %331, %386 : vector<1x128xf32>
    %cst_96 = arith.constant 0.00999999977 : f32
    %388 = vector.broadcast %cst_96 : f32 to vector<1x128xf32>
    %389 = arith.mulf %388, %331 : vector<1x128xf32>
    %390 = arith.select %387, %331, %389 : vector<1x128xi1>, vector<1x128xf32>
    %c3_97 = arith.constant 3 : index
    %c0_98 = arith.constant 0 : index
    %391 = vector.load %arg10[%c3_97, %c0_98] : memref<8x128xf32, #tpu.memory_space<vmem>>, vector<1x128xf32>
    tpu.vector_store %arg10[%c3_97, %c0_98], %390 {strides = array<i32>} : memref<8x128xf32, #tpu.memory_space<vmem>>, vector<1x128xf32>,
    %cst_99 = arith.constant dense<0.000000e+00> : vector<128x128xf32>
    %392 = tpu.matmul %3, %325, %cst_99 {dimension_numbers = #tpu.dot_dimension_numbers<[1], [0], [0], [1], [0, 0, 1, 1], [], []>} : vector<128x32xf32>, vector<32x128xf32>, vector<128x128xf32> -> vector<128x128xf32>
    %c0_100 = arith.constant 0 : index
    %c8 = arith.constant 8 : index
    %393 = vector.load %arg1[%c0_100, %c8] : memref<128x16xf32, #tpu.memory_space<vmem>>, vector<128x2xf32>
    %394 = vector.extract_strided_slice %393 {offsets = [0, 0], sizes = [128, 1], strides = [1, 1]} : vector<128x2xf32> to vector<128x1xf32>
    %395 = vector.extract_strided_slice %393 {offsets = [0, 1], sizes = [128, 1], strides = [1, 1]} : vector<128x2xf32> to vector<128x1xf32>
    %396 = vector.shape_cast %10 : vector<1x128xi1> to vector<1x128xi1>
    %397 = vector.broadcast %396 : vector<1x128xi1> to vector<128x128xi1>
    %398 = vector.shape_cast %394 : vector<128x1xf32> to vector<128x1xf32>
    %399 = vector.broadcast %398 : vector<128x1xf32> to vector<128x128xf32>
    %400 = vector.shape_cast %395 : vector<128x1xf32> to vector<128x1xf32>
    %401 = vector.broadcast %400 : vector<128x1xf32> to vector<128x128xf32>
    %402 = arith.select %397, %399, %401 : vector<128x128xi1>, vector<128x128xf32>
    %403 = arith.addf %392, %402 : vector<128x128xf32>
    %404 = vector.extract_strided_slice %403 {offsets = [0, 0], sizes = [96, 128], strides = [1, 1]} : vector<128x128xf32> to vector<96x128xf32>
    %405 = arith.negf %404 : vector<96x128xf32>
    %406 = math.exp %405 : vector<96x128xf32>
    %cst_101 = arith.constant 1.000000e+00 : f32
    %407 = vector.broadcast %cst_101 : f32 to vector<96x128xf32>
    %408 = arith.addf %407, %406 : vector<96x128xf32>
    %409 = arith.divf %407, %408 : vector<96x128xf32>
    %410 = vector.extract_strided_slice %403 {offsets = [96, 0], sizes = [32, 128], strides = [1, 1]} : vector<128x128xf32> to vector<32x128xf32>
    %411 = math.tanh %410 : vector<32x128xf32>
    %412 = vector.extract_strided_slice %409 {offsets = [0, 0], sizes = [32, 128], strides = [1, 1]} : vector<96x128xf32> to vector<32x128xf32>
    %413 = vector.extract_strided_slice %409 {offsets = [32, 0], sizes = [32, 128], strides = [1, 1]} : vector<96x128xf32> to vector<32x128xf32>
    %414 = vector.extract_strided_slice %409 {offsets = [64, 0], sizes = [32, 128], strides = [1, 1]} : vector<96x128xf32> to vector<32x128xf32>
    %415 = arith.mulf %413, %323 : vector<32x128xf32>
    %416 = arith.mulf %412, %411 : vector<32x128xf32>
    %417 = arith.addf %415, %416 : vector<32x128xf32>
    %418 = math.tanh %417 : vector<32x128xf32>
    %419 = arith.mulf %414, %418 : vector<32x128xf32>
    %cst_102 = arith.constant dense<0.000000e+00> : vector<2x128xf32>
    %420 = tpu.matmul %4, %419, %cst_102 {dimension_numbers = #tpu.dot_dimension_numbers<[1], [0], [0], [1], [0, 0, 1, 1], [], []>} : vector<2x32xf32>, vector<32x128xf32>, vector<2x128xf32> -> vector<2x128xf32>
    %421 = vector.extract_strided_slice %420 {offsets = [0, 0], sizes = [1, 128], strides = [1, 1]} : vector<2x128xf32> to vector<1x128xf32>
    %c4_103 = arith.constant 4 : index
    %c0_104 = arith.constant 0 : index
    %422 = vector.load %arg2[%c4_103, %c0_104] : memref<8x128xf32, #tpu.memory_space<vmem>>, vector<1x128xf32>
    %423 = arith.addf %421, %422 : vector<1x128xf32>
    %424 = vector.extract_strided_slice %420 {offsets = [1, 0], sizes = [1, 128], strides = [1, 1]} : vector<2x128xf32> to vector<1x128xf32>
    %425 = arith.addf %424, %7 : vector<1x128xf32>
    %426 = arith.addf %363, %423 : vector<1x128xf32>
    %cst_105 = arith.constant 0xFF800000 : f32
    %427 = vector.broadcast %cst_105 : f32 to vector<1x128xf32>
    %428 = arith.select %10, %426, %427 : vector<1x128xi1>, vector<1x128xf32>
    %cst_106 = arith.constant dense<0xFF800000> : vector<1xf32>
    %429 = vector.multi_reduction <maximumf>, %428, %cst_106 [1] : vector<1x128xf32> to vector<1xf32>
    %430 = vector.shape_cast %429 : vector<1xf32> to vector<1x1xf32>
    %cst_107 = arith.constant 0xFF800000 : f32
    %431 = vector.broadcast %cst_107 : f32 to vector<1x128xf32>
    %432 = arith.select %10, %431, %426 : vector<1x128xi1>, vector<1x128xf32>
    %cst_108 = arith.constant dense<0xFF800000> : vector<1xf32>
    %433 = vector.multi_reduction <maximumf>, %432, %cst_108 [1] : vector<1x128xf32> to vector<1xf32>
    %434 = vector.shape_cast %433 : vector<1xf32> to vector<1x1xf32>
    %435 = vector.shape_cast %430 : vector<1x1xf32> to vector<1x1xf32>
    %436 = vector.broadcast %435 : vector<1x1xf32> to vector<1x128xf32>
    %437 = vector.shape_cast %434 : vector<1x1xf32> to vector<1x1xf32>
    %438 = vector.broadcast %437 : vector<1x1xf32> to vector<1x128xf32>
    %439 = arith.select %10, %436, %438 : vector<1x128xi1>, vector<1x128xf32>
    %440 = arith.subf %426, %439 : vector<1x128xf32>
    %441 = math.exp %440 : vector<1x128xf32>
    %cst_109 = arith.constant 0.000000e+00 : f32
    %442 = vector.broadcast %cst_109 : f32 to vector<1x128xf32>
    %443 = arith.select %10, %441, %442 : vector<1x128xi1>, vector<1x128xf32>
    %cst_110 = arith.constant dense<0.000000e+00> : vector<1xf32>
    %444 = vector.multi_reduction <add>, %443, %cst_110 [1] : vector<1x128xf32> to vector<1xf32>
    %445 = vector.shape_cast %444 : vector<1xf32> to vector<1x1xf32>
    %cst_111 = arith.constant 0.000000e+00 : f32
    %446 = vector.broadcast %cst_111 : f32 to vector<1x128xf32>
    %447 = arith.select %10, %446, %441 : vector<1x128xi1>, vector<1x128xf32>
    %cst_112 = arith.constant dense<0.000000e+00> : vector<1xf32>
    %448 = vector.multi_reduction <add>, %447, %cst_112 [1] : vector<1x128xf32> to vector<1xf32>
    %449 = vector.shape_cast %448 : vector<1xf32> to vector<1x1xf32>
    %450 = vector.shape_cast %445 : vector<1x1xf32> to vector<1x1xf32>
    %451 = vector.broadcast %450 : vector<1x1xf32> to vector<1x128xf32>
    %452 = vector.shape_cast %449 : vector<1x1xf32> to vector<1x1xf32>
    %453 = vector.broadcast %452 : vector<1x1xf32> to vector<1x128xf32>
    %454 = arith.select %10, %451, %453 : vector<1x128xi1>, vector<1x128xf32>
    %455 = math.log %454 : vector<1x128xf32>
    %456 = arith.addf %439, %455 : vector<1x128xf32>
    %457 = arith.subf %426, %456 : vector<1x128xf32>
    %458 = math.exp %457 : vector<1x128xf32>
    %459 = arith.mulf %458, %425 : vector<1x128xf32>
    %cst_113 = arith.constant 0.000000e+00 : f32
    %460 = vector.broadcast %cst_113 : f32 to vector<1x128xf32>
    %461 = arith.select %10, %459, %460 : vector<1x128xi1>, vector<1x128xf32>
    %cst_114 = arith.constant dense<0.000000e+00> : vector<1xf32>
    %462 = vector.multi_reduction <add>, %461, %cst_114 [1] : vector<1x128xf32> to vector<1xf32>
    %463 = vector.shape_cast %462 : vector<1xf32> to vector<1x1xf32>
    %cst_115 = arith.constant 0.000000e+00 : f32
    %464 = vector.broadcast %cst_115 : f32 to vector<1x128xf32>
    %465 = arith.select %10, %464, %459 : vector<1x128xi1>, vector<1x128xf32>
    %cst_116 = arith.constant dense<0.000000e+00> : vector<1xf32>
    %466 = vector.multi_reduction <add>, %465, %cst_116 [1] : vector<1x128xf32> to vector<1xf32>
    %467 = vector.shape_cast %466 : vector<1xf32> to vector<1x1xf32>
    %468 = vector.shape_cast %463 : vector<1x1xf32> to vector<1x1xf32>
    %469 = vector.broadcast %468 : vector<1x1xf32> to vector<2x1xf32>
    %470 = vector.shape_cast %467 : vector<1x1xf32> to vector<1x1xf32>
    %471 = vector.broadcast %470 : vector<1x1xf32> to vector<2x1xf32>
    %472 = arith.select %14, %469, %471 : vector<2x1xi1>, vector<2x1xf32>
    %c4_i32 = arith.constant 4 : i32
    %473 = vector.broadcast %c4_i32 : i32 to vector<1x8xi32>
    %474 = arith.cmpi eq, %11, %473 : vector<1x8xi32>
    %475 = vector.shape_cast %474 : vector<1x8xi1> to vector<1x8xi1>
    %476 = vector.broadcast %475 : vector<1x8xi1> to vector<2x8xi1>
    %477 = vector.shape_cast %472 : vector<2x1xf32> to vector<2x1xf32>
    %478 = vector.broadcast %477 : vector<2x1xf32> to vector<2x8xf32>
    %479 = arith.select %476, %478, %385 : vector<2x8xi1>, vector<2x8xf32>
    %cst_117 = arith.constant 0.000000e+00 : f32
    %480 = vector.broadcast %cst_117 : f32 to vector<1x128xf32>
    %481 = arith.cmpf oge, %425, %480 : vector<1x128xf32>
    %cst_118 = arith.constant 0.00999999977 : f32
    %482 = vector.broadcast %cst_118 : f32 to vector<1x128xf32>
    %483 = arith.mulf %482, %425 : vector<1x128xf32>
    %484 = arith.select %481, %425, %483 : vector<1x128xi1>, vector<1x128xf32>
    %c4_119 = arith.constant 4 : index
    %c0_120 = arith.constant 0 : index
    %485 = vector.load %arg10[%c4_119, %c0_120] : memref<8x128xf32, #tpu.memory_space<vmem>>, vector<1x128xf32>
    tpu.vector_store %arg10[%c4_119, %c0_120], %484 {strides = array<i32>} : memref<8x128xf32, #tpu.memory_space<vmem>>, vector<1x128xf32>,
    %cst_121 = arith.constant dense<0.000000e+00> : vector<128x128xf32>
    %486 = tpu.matmul %3, %419, %cst_121 {dimension_numbers = #tpu.dot_dimension_numbers<[1], [0], [0], [1], [0, 0, 1, 1], [], []>} : vector<128x32xf32>, vector<32x128xf32>, vector<128x128xf32> -> vector<128x128xf32>
    %c0_122 = arith.constant 0 : index
    %c10 = arith.constant 10 : index
    %487 = vector.load %arg1[%c0_122, %c10] : memref<128x16xf32, #tpu.memory_space<vmem>>, vector<128x2xf32>
    %488 = vector.extract_strided_slice %487 {offsets = [0, 0], sizes = [128, 1], strides = [1, 1]} : vector<128x2xf32> to vector<128x1xf32>
    %489 = vector.extract_strided_slice %487 {offsets = [0, 1], sizes = [128, 1], strides = [1, 1]} : vector<128x2xf32> to vector<128x1xf32>
    %490 = vector.shape_cast %10 : vector<1x128xi1> to vector<1x128xi1>
    %491 = vector.broadcast %490 : vector<1x128xi1> to vector<128x128xi1>
    %492 = vector.shape_cast %488 : vector<128x1xf32> to vector<128x1xf32>
    %493 = vector.broadcast %492 : vector<128x1xf32> to vector<128x128xf32>
    %494 = vector.shape_cast %489 : vector<128x1xf32> to vector<128x1xf32>
    %495 = vector.broadcast %494 : vector<128x1xf32> to vector<128x128xf32>
    %496 = arith.select %491, %493, %495 : vector<128x128xi1>, vector<128x128xf32>
    %497 = arith.addf %486, %496 : vector<128x128xf32>
    %498 = vector.extract_strided_slice %497 {offsets = [0, 0], sizes = [96, 128], strides = [1, 1]} : vector<128x128xf32> to vector<96x128xf32>
    %499 = arith.negf %498 : vector<96x128xf32>
    %500 = math.exp %499 : vector<96x128xf32>
    %cst_123 = arith.constant 1.000000e+00 : f32
    %501 = vector.broadcast %cst_123 : f32 to vector<96x128xf32>
    %502 = arith.addf %501, %500 : vector<96x128xf32>
    %503 = arith.divf %501, %502 : vector<96x128xf32>
    %504 = vector.extract_strided_slice %497 {offsets = [96, 0], sizes = [32, 128], strides = [1, 1]} : vector<128x128xf32> to vector<32x128xf32>
    %505 = math.tanh %504 : vector<32x128xf32>
    %506 = vector.extract_strided_slice %503 {offsets = [0, 0], sizes = [32, 128], strides = [1, 1]} : vector<96x128xf32> to vector<32x128xf32>
    %507 = vector.extract_strided_slice %503 {offsets = [32, 0], sizes = [32, 128], strides = [1, 1]} : vector<96x128xf32> to vector<32x128xf32>
    %508 = vector.extract_strided_slice %503 {offsets = [64, 0], sizes = [32, 128], strides = [1, 1]} : vector<96x128xf32> to vector<32x128xf32>
    %509 = arith.mulf %507, %417 : vector<32x128xf32>
    %510 = arith.mulf %506, %505 : vector<32x128xf32>
    %511 = arith.addf %509, %510 : vector<32x128xf32>
    %512 = math.tanh %511 : vector<32x128xf32>
    %513 = arith.mulf %508, %512 : vector<32x128xf32>
    %cst_124 = arith.constant dense<0.000000e+00> : vector<2x128xf32>
    %514 = tpu.matmul %4, %513, %cst_124 {dimension_numbers = #tpu.dot_dimension_numbers<[1], [0], [0], [1], [0, 0, 1, 1], [], []>} : vector<2x32xf32>, vector<32x128xf32>, vector<2x128xf32> -> vector<2x128xf32>
    %515 = vector.extract_strided_slice %514 {offsets = [0, 0], sizes = [1, 128], strides = [1, 1]} : vector<2x128xf32> to vector<1x128xf32>
    %c5 = arith.constant 5 : index
    %c0_125 = arith.constant 0 : index
    %516 = vector.load %arg2[%c5, %c0_125] : memref<8x128xf32, #tpu.memory_space<vmem>>, vector<1x128xf32>
    %517 = arith.addf %515, %516 : vector<1x128xf32>
    %518 = vector.extract_strided_slice %514 {offsets = [1, 0], sizes = [1, 128], strides = [1, 1]} : vector<2x128xf32> to vector<1x128xf32>
    %519 = arith.addf %518, %7 : vector<1x128xf32>
    %520 = arith.addf %457, %517 : vector<1x128xf32>
    %cst_126 = arith.constant 0xFF800000 : f32
    %521 = vector.broadcast %cst_126 : f32 to vector<1x128xf32>
    %522 = arith.select %10, %520, %521 : vector<1x128xi1>, vector<1x128xf32>
    %cst_127 = arith.constant dense<0xFF800000> : vector<1xf32>
    %523 = vector.multi_reduction <maximumf>, %522, %cst_127 [1] : vector<1x128xf32> to vector<1xf32>
    %524 = vector.shape_cast %523 : vector<1xf32> to vector<1x1xf32>
    %cst_128 = arith.constant 0xFF800000 : f32
    %525 = vector.broadcast %cst_128 : f32 to vector<1x128xf32>
    %526 = arith.select %10, %525, %520 : vector<1x128xi1>, vector<1x128xf32>
    %cst_129 = arith.constant dense<0xFF800000> : vector<1xf32>
    %527 = vector.multi_reduction <maximumf>, %526, %cst_129 [1] : vector<1x128xf32> to vector<1xf32>
    %528 = vector.shape_cast %527 : vector<1xf32> to vector<1x1xf32>
    %529 = vector.shape_cast %524 : vector<1x1xf32> to vector<1x1xf32>
    %530 = vector.broadcast %529 : vector<1x1xf32> to vector<1x128xf32>
    %531 = vector.shape_cast %528 : vector<1x1xf32> to vector<1x1xf32>
    %532 = vector.broadcast %531 : vector<1x1xf32> to vector<1x128xf32>
    %533 = arith.select %10, %530, %532 : vector<1x128xi1>, vector<1x128xf32>
    %534 = arith.subf %520, %533 : vector<1x128xf32>
    %535 = math.exp %534 : vector<1x128xf32>
    %cst_130 = arith.constant 0.000000e+00 : f32
    %536 = vector.broadcast %cst_130 : f32 to vector<1x128xf32>
    %537 = arith.select %10, %535, %536 : vector<1x128xi1>, vector<1x128xf32>
    %cst_131 = arith.constant dense<0.000000e+00> : vector<1xf32>
    %538 = vector.multi_reduction <add>, %537, %cst_131 [1] : vector<1x128xf32> to vector<1xf32>
    %539 = vector.shape_cast %538 : vector<1xf32> to vector<1x1xf32>
    %cst_132 = arith.constant 0.000000e+00 : f32
    %540 = vector.broadcast %cst_132 : f32 to vector<1x128xf32>
    %541 = arith.select %10, %540, %535 : vector<1x128xi1>, vector<1x128xf32>
    %cst_133 = arith.constant dense<0.000000e+00> : vector<1xf32>
    %542 = vector.multi_reduction <add>, %541, %cst_133 [1] : vector<1x128xf32> to vector<1xf32>
    %543 = vector.shape_cast %542 : vector<1xf32> to vector<1x1xf32>
    %544 = vector.shape_cast %539 : vector<1x1xf32> to vector<1x1xf32>
    %545 = vector.broadcast %544 : vector<1x1xf32> to vector<1x128xf32>
    %546 = vector.shape_cast %543 : vector<1x1xf32> to vector<1x1xf32>
    %547 = vector.broadcast %546 : vector<1x1xf32> to vector<1x128xf32>
    %548 = arith.select %10, %545, %547 : vector<1x128xi1>, vector<1x128xf32>
    %549 = math.log %548 : vector<1x128xf32>
    %550 = arith.addf %533, %549 : vector<1x128xf32>
    %551 = arith.subf %520, %550 : vector<1x128xf32>
    %552 = math.exp %551 : vector<1x128xf32>
    %553 = arith.mulf %552, %519 : vector<1x128xf32>
    %cst_134 = arith.constant 0.000000e+00 : f32
    %554 = vector.broadcast %cst_134 : f32 to vector<1x128xf32>
    %555 = arith.select %10, %553, %554 : vector<1x128xi1>, vector<1x128xf32>
    %cst_135 = arith.constant dense<0.000000e+00> : vector<1xf32>
    %556 = vector.multi_reduction <add>, %555, %cst_135 [1] : vector<1x128xf32> to vector<1xf32>
    %557 = vector.shape_cast %556 : vector<1xf32> to vector<1x1xf32>
    %cst_136 = arith.constant 0.000000e+00 : f32
    %558 = vector.broadcast %cst_136 : f32 to vector<1x128xf32>
    %559 = arith.select %10, %558, %553 : vector<1x128xi1>, vector<1x128xf32>
    %cst_137 = arith.constant dense<0.000000e+00> : vector<1xf32>
    %560 = vector.multi_reduction <add>, %559, %cst_137 [1] : vector<1x128xf32> to vector<1xf32>
    %561 = vector.shape_cast %560 : vector<1xf32> to vector<1x1xf32>
    %562 = vector.shape_cast %557 : vector<1x1xf32> to vector<1x1xf32>
    %563 = vector.broadcast %562 : vector<1x1xf32> to vector<2x1xf32>
    %564 = vector.shape_cast %561 : vector<1x1xf32> to vector<1x1xf32>
    %565 = vector.broadcast %564 : vector<1x1xf32> to vector<2x1xf32>
    %566 = arith.select %14, %563, %565 : vector<2x1xi1>, vector<2x1xf32>
    %c5_i32 = arith.constant 5 : i32
    %567 = vector.broadcast %c5_i32 : i32 to vector<1x8xi32>
    %568 = arith.cmpi eq, %11, %567 : vector<1x8xi32>
    %569 = vector.shape_cast %568 : vector<1x8xi1> to vector<1x8xi1>
    %570 = vector.broadcast %569 : vector<1x8xi1> to vector<2x8xi1>
    %571 = vector.shape_cast %566 : vector<2x1xf32> to vector<2x1xf32>
    %572 = vector.broadcast %571 : vector<2x1xf32> to vector<2x8xf32>
    %573 = arith.select %570, %572, %479 : vector<2x8xi1>, vector<2x8xf32>
    %cst_138 = arith.constant 0.000000e+00 : f32
    %574 = vector.broadcast %cst_138 : f32 to vector<1x128xf32>
    %575 = arith.cmpf oge, %519, %574 : vector<1x128xf32>
    %cst_139 = arith.constant 0.00999999977 : f32
    %576 = vector.broadcast %cst_139 : f32 to vector<1x128xf32>
    %577 = arith.mulf %576, %519 : vector<1x128xf32>
    %578 = arith.select %575, %519, %577 : vector<1x128xi1>, vector<1x128xf32>
    %c5_140 = arith.constant 5 : index
    %c0_141 = arith.constant 0 : index
    %579 = vector.load %arg10[%c5_140, %c0_141] : memref<8x128xf32, #tpu.memory_space<vmem>>, vector<1x128xf32>
    tpu.vector_store %arg10[%c5_140, %c0_141], %578 {strides = array<i32>} : memref<8x128xf32, #tpu.memory_space<vmem>>, vector<1x128xf32>,
    %cst_142 = arith.constant dense<0.000000e+00> : vector<128x128xf32>
    %580 = tpu.matmul %3, %513, %cst_142 {dimension_numbers = #tpu.dot_dimension_numbers<[1], [0], [0], [1], [0, 0, 1, 1], [], []>} : vector<128x32xf32>, vector<32x128xf32>, vector<128x128xf32> -> vector<128x128xf32>
    %c0_143 = arith.constant 0 : index
    %c12 = arith.constant 12 : index
    %581 = vector.load %arg1[%c0_143, %c12] : memref<128x16xf32, #tpu.memory_space<vmem>>, vector<128x2xf32>
    %582 = vector.extract_strided_slice %581 {offsets = [0, 0], sizes = [128, 1], strides = [1, 1]} : vector<128x2xf32> to vector<128x1xf32>
    %583 = vector.extract_strided_slice %581 {offsets = [0, 1], sizes = [128, 1], strides = [1, 1]} : vector<128x2xf32> to vector<128x1xf32>
    %584 = vector.shape_cast %10 : vector<1x128xi1> to vector<1x128xi1>
    %585 = vector.broadcast %584 : vector<1x128xi1> to vector<128x128xi1>
    %586 = vector.shape_cast %582 : vector<128x1xf32> to vector<128x1xf32>
    %587 = vector.broadcast %586 : vector<128x1xf32> to vector<128x128xf32>
    %588 = vector.shape_cast %583 : vector<128x1xf32> to vector<128x1xf32>
    %589 = vector.broadcast %588 : vector<128x1xf32> to vector<128x128xf32>
    %590 = arith.select %585, %587, %589 : vector<128x128xi1>, vector<128x128xf32>
    %591 = arith.addf %580, %590 : vector<128x128xf32>
    %592 = vector.extract_strided_slice %591 {offsets = [0, 0], sizes = [96, 128], strides = [1, 1]} : vector<128x128xf32> to vector<96x128xf32>
    %593 = arith.negf %592 : vector<96x128xf32>
    %594 = math.exp %593 : vector<96x128xf32>
    %cst_144 = arith.constant 1.000000e+00 : f32
    %595 = vector.broadcast %cst_144 : f32 to vector<96x128xf32>
    %596 = arith.addf %595, %594 : vector<96x128xf32>
    %597 = arith.divf %595, %596 : vector<96x128xf32>
    %598 = vector.extract_strided_slice %591 {offsets = [96, 0], sizes = [32, 128], strides = [1, 1]} : vector<128x128xf32> to vector<32x128xf32>
    %599 = math.tanh %598 : vector<32x128xf32>
    %600 = vector.extract_strided_slice %597 {offsets = [0, 0], sizes = [32, 128], strides = [1, 1]} : vector<96x128xf32> to vector<32x128xf32>
    %601 = vector.extract_strided_slice %597 {offsets = [32, 0], sizes = [32, 128], strides = [1, 1]} : vector<96x128xf32> to vector<32x128xf32>
    %602 = vector.extract_strided_slice %597 {offsets = [64, 0], sizes = [32, 128], strides = [1, 1]} : vector<96x128xf32> to vector<32x128xf32>
    %603 = arith.mulf %601, %511 : vector<32x128xf32>
    %604 = arith.mulf %600, %599 : vector<32x128xf32>
    %605 = arith.addf %603, %604 : vector<32x128xf32>
    %606 = math.tanh %605 : vector<32x128xf32>
    %607 = arith.mulf %602, %606 : vector<32x128xf32>
    %cst_145 = arith.constant dense<0.000000e+00> : vector<2x128xf32>
    %608 = tpu.matmul %4, %607, %cst_145 {dimension_numbers = #tpu.dot_dimension_numbers<[1], [0], [0], [1], [0, 0, 1, 1], [], []>} : vector<2x32xf32>, vector<32x128xf32>, vector<2x128xf32> -> vector<2x128xf32>
    %609 = vector.extract_strided_slice %608 {offsets = [0, 0], sizes = [1, 128], strides = [1, 1]} : vector<2x128xf32> to vector<1x128xf32>
    %c6_146 = arith.constant 6 : index
    %c0_147 = arith.constant 0 : index
    %610 = vector.load %arg2[%c6_146, %c0_147] : memref<8x128xf32, #tpu.memory_space<vmem>>, vector<1x128xf32>
    %611 = arith.addf %609, %610 : vector<1x128xf32>
    %612 = vector.extract_strided_slice %608 {offsets = [1, 0], sizes = [1, 128], strides = [1, 1]} : vector<2x128xf32> to vector<1x128xf32>
    %613 = arith.addf %612, %7 : vector<1x128xf32>
    %614 = arith.addf %551, %611 : vector<1x128xf32>
    %cst_148 = arith.constant 0xFF800000 : f32
    %615 = vector.broadcast %cst_148 : f32 to vector<1x128xf32>
    %616 = arith.select %10, %614, %615 : vector<1x128xi1>, vector<1x128xf32>
    %cst_149 = arith.constant dense<0xFF800000> : vector<1xf32>
    %617 = vector.multi_reduction <maximumf>, %616, %cst_149 [1] : vector<1x128xf32> to vector<1xf32>
    %618 = vector.shape_cast %617 : vector<1xf32> to vector<1x1xf32>
    %cst_150 = arith.constant 0xFF800000 : f32
    %619 = vector.broadcast %cst_150 : f32 to vector<1x128xf32>
    %620 = arith.select %10, %619, %614 : vector<1x128xi1>, vector<1x128xf32>
    %cst_151 = arith.constant dense<0xFF800000> : vector<1xf32>
    %621 = vector.multi_reduction <maximumf>, %620, %cst_151 [1] : vector<1x128xf32> to vector<1xf32>
    %622 = vector.shape_cast %621 : vector<1xf32> to vector<1x1xf32>
    %623 = vector.shape_cast %618 : vector<1x1xf32> to vector<1x1xf32>
    %624 = vector.broadcast %623 : vector<1x1xf32> to vector<1x128xf32>
    %625 = vector.shape_cast %622 : vector<1x1xf32> to vector<1x1xf32>
    %626 = vector.broadcast %625 : vector<1x1xf32> to vector<1x128xf32>
    %627 = arith.select %10, %624, %626 : vector<1x128xi1>, vector<1x128xf32>
    %628 = arith.subf %614, %627 : vector<1x128xf32>
    %629 = math.exp %628 : vector<1x128xf32>
    %cst_152 = arith.constant 0.000000e+00 : f32
    %630 = vector.broadcast %cst_152 : f32 to vector<1x128xf32>
    %631 = arith.select %10, %629, %630 : vector<1x128xi1>, vector<1x128xf32>
    %cst_153 = arith.constant dense<0.000000e+00> : vector<1xf32>
    %632 = vector.multi_reduction <add>, %631, %cst_153 [1] : vector<1x128xf32> to vector<1xf32>
    %633 = vector.shape_cast %632 : vector<1xf32> to vector<1x1xf32>
    %cst_154 = arith.constant 0.000000e+00 : f32
    %634 = vector.broadcast %cst_154 : f32 to vector<1x128xf32>
    %635 = arith.select %10, %634, %629 : vector<1x128xi1>, vector<1x128xf32>
    %cst_155 = arith.constant dense<0.000000e+00> : vector<1xf32>
    %636 = vector.multi_reduction <add>, %635, %cst_155 [1] : vector<1x128xf32> to vector<1xf32>
    %637 = vector.shape_cast %636 : vector<1xf32> to vector<1x1xf32>
    %638 = vector.shape_cast %633 : vector<1x1xf32> to vector<1x1xf32>
    %639 = vector.broadcast %638 : vector<1x1xf32> to vector<1x128xf32>
    %640 = vector.shape_cast %637 : vector<1x1xf32> to vector<1x1xf32>
    %641 = vector.broadcast %640 : vector<1x1xf32> to vector<1x128xf32>
    %642 = arith.select %10, %639, %641 : vector<1x128xi1>, vector<1x128xf32>
    %643 = math.log %642 : vector<1x128xf32>
    %644 = arith.addf %627, %643 : vector<1x128xf32>
    %645 = arith.subf %614, %644 : vector<1x128xf32>
    %646 = math.exp %645 : vector<1x128xf32>
    %647 = arith.mulf %646, %613 : vector<1x128xf32>
    %cst_156 = arith.constant 0.000000e+00 : f32
    %648 = vector.broadcast %cst_156 : f32 to vector<1x128xf32>
    %649 = arith.select %10, %647, %648 : vector<1x128xi1>, vector<1x128xf32>
    %cst_157 = arith.constant dense<0.000000e+00> : vector<1xf32>
    %650 = vector.multi_reduction <add>, %649, %cst_157 [1] : vector<1x128xf32> to vector<1xf32>
    %651 = vector.shape_cast %650 : vector<1xf32> to vector<1x1xf32>
    %cst_158 = arith.constant 0.000000e+00 : f32
    %652 = vector.broadcast %cst_158 : f32 to vector<1x128xf32>
    %653 = arith.select %10, %652, %647 : vector<1x128xi1>, vector<1x128xf32>
    %cst_159 = arith.constant dense<0.000000e+00> : vector<1xf32>
    %654 = vector.multi_reduction <add>, %653, %cst_159 [1] : vector<1x128xf32> to vector<1xf32>
    %655 = vector.shape_cast %654 : vector<1xf32> to vector<1x1xf32>
    %656 = vector.shape_cast %651 : vector<1x1xf32> to vector<1x1xf32>
    %657 = vector.broadcast %656 : vector<1x1xf32> to vector<2x1xf32>
    %658 = vector.shape_cast %655 : vector<1x1xf32> to vector<1x1xf32>
    %659 = vector.broadcast %658 : vector<1x1xf32> to vector<2x1xf32>
    %660 = arith.select %14, %657, %659 : vector<2x1xi1>, vector<2x1xf32>
    %c6_i32 = arith.constant 6 : i32
    %661 = vector.broadcast %c6_i32 : i32 to vector<1x8xi32>
    %662 = arith.cmpi eq, %11, %661 : vector<1x8xi32>
    %663 = vector.shape_cast %662 : vector<1x8xi1> to vector<1x8xi1>
    %664 = vector.broadcast %663 : vector<1x8xi1> to vector<2x8xi1>
    %665 = vector.shape_cast %660 : vector<2x1xf32> to vector<2x1xf32>
    %666 = vector.broadcast %665 : vector<2x1xf32> to vector<2x8xf32>
    %667 = arith.select %664, %666, %573 : vector<2x8xi1>, vector<2x8xf32>
    %cst_160 = arith.constant 0.000000e+00 : f32
    %668 = vector.broadcast %cst_160 : f32 to vector<1x128xf32>
    %669 = arith.cmpf oge, %613, %668 : vector<1x128xf32>
    %cst_161 = arith.constant 0.00999999977 : f32
    %670 = vector.broadcast %cst_161 : f32 to vector<1x128xf32>
    %671 = arith.mulf %670, %613 : vector<1x128xf32>
    %672 = arith.select %669, %613, %671 : vector<1x128xi1>, vector<1x128xf32>
    %c6_162 = arith.constant 6 : index
    %c0_163 = arith.constant 0 : index
    %673 = vector.load %arg10[%c6_162, %c0_163] : memref<8x128xf32, #tpu.memory_space<vmem>>, vector<1x128xf32>
    tpu.vector_store %arg10[%c6_162, %c0_163], %672 {strides = array<i32>} : memref<8x128xf32, #tpu.memory_space<vmem>>, vector<1x128xf32>,
    %cst_164 = arith.constant dense<0.000000e+00> : vector<128x128xf32>
    %674 = tpu.matmul %3, %607, %cst_164 {dimension_numbers = #tpu.dot_dimension_numbers<[1], [0], [0], [1], [0, 0, 1, 1], [], []>} : vector<128x32xf32>, vector<32x128xf32>, vector<128x128xf32> -> vector<128x128xf32>
    %c0_165 = arith.constant 0 : index
    %c14 = arith.constant 14 : index
    %675 = vector.load %arg1[%c0_165, %c14] : memref<128x16xf32, #tpu.memory_space<vmem>>, vector<128x2xf32>
    %676 = vector.extract_strided_slice %675 {offsets = [0, 0], sizes = [128, 1], strides = [1, 1]} : vector<128x2xf32> to vector<128x1xf32>
    %677 = vector.extract_strided_slice %675 {offsets = [0, 1], sizes = [128, 1], strides = [1, 1]} : vector<128x2xf32> to vector<128x1xf32>
    %678 = vector.shape_cast %10 : vector<1x128xi1> to vector<1x128xi1>
    %679 = vector.broadcast %678 : vector<1x128xi1> to vector<128x128xi1>
    %680 = vector.shape_cast %676 : vector<128x1xf32> to vector<128x1xf32>
    %681 = vector.broadcast %680 : vector<128x1xf32> to vector<128x128xf32>
    %682 = vector.shape_cast %677 : vector<128x1xf32> to vector<128x1xf32>
    %683 = vector.broadcast %682 : vector<128x1xf32> to vector<128x128xf32>
    %684 = arith.select %679, %681, %683 : vector<128x128xi1>, vector<128x128xf32>
    %685 = arith.addf %674, %684 : vector<128x128xf32>
    %686 = vector.extract_strided_slice %685 {offsets = [0, 0], sizes = [96, 128], strides = [1, 1]} : vector<128x128xf32> to vector<96x128xf32>
    %687 = arith.negf %686 : vector<96x128xf32>
    %688 = math.exp %687 : vector<96x128xf32>
    %cst_166 = arith.constant 1.000000e+00 : f32
    %689 = vector.broadcast %cst_166 : f32 to vector<96x128xf32>
    %690 = arith.addf %689, %688 : vector<96x128xf32>
    %691 = arith.divf %689, %690 : vector<96x128xf32>
    %692 = vector.extract_strided_slice %685 {offsets = [96, 0], sizes = [32, 128], strides = [1, 1]} : vector<128x128xf32> to vector<32x128xf32>
    %693 = math.tanh %692 : vector<32x128xf32>
    %694 = vector.extract_strided_slice %691 {offsets = [0, 0], sizes = [32, 128], strides = [1, 1]} : vector<96x128xf32> to vector<32x128xf32>
    %695 = vector.extract_strided_slice %691 {offsets = [32, 0], sizes = [32, 128], strides = [1, 1]} : vector<96x128xf32> to vector<32x128xf32>
    %696 = vector.extract_strided_slice %691 {offsets = [64, 0], sizes = [32, 128], strides = [1, 1]} : vector<96x128xf32> to vector<32x128xf32>
    %697 = arith.mulf %695, %605 : vector<32x128xf32>
    %698 = arith.mulf %694, %693 : vector<32x128xf32>
    %699 = arith.addf %697, %698 : vector<32x128xf32>
    %700 = math.tanh %699 : vector<32x128xf32>
    %701 = arith.mulf %696, %700 : vector<32x128xf32>
    %cst_167 = arith.constant dense<0.000000e+00> : vector<2x128xf32>
    %702 = tpu.matmul %4, %701, %cst_167 {dimension_numbers = #tpu.dot_dimension_numbers<[1], [0], [0], [1], [0, 0, 1, 1], [], []>} : vector<2x32xf32>, vector<32x128xf32>, vector<2x128xf32> -> vector<2x128xf32>
    %703 = vector.extract_strided_slice %702 {offsets = [0, 0], sizes = [1, 128], strides = [1, 1]} : vector<2x128xf32> to vector<1x128xf32>
    %c7 = arith.constant 7 : index
    %c0_168 = arith.constant 0 : index
    %704 = vector.load %arg2[%c7, %c0_168] : memref<8x128xf32, #tpu.memory_space<vmem>>, vector<1x128xf32>
    %705 = arith.addf %703, %704 : vector<1x128xf32>
    %706 = vector.extract_strided_slice %702 {offsets = [1, 0], sizes = [1, 128], strides = [1, 1]} : vector<2x128xf32> to vector<1x128xf32>
    %707 = arith.addf %706, %7 : vector<1x128xf32>
    %708 = arith.addf %645, %705 : vector<1x128xf32>
    %cst_169 = arith.constant 0xFF800000 : f32
    %709 = vector.broadcast %cst_169 : f32 to vector<1x128xf32>
    %710 = arith.select %10, %708, %709 : vector<1x128xi1>, vector<1x128xf32>
    %cst_170 = arith.constant dense<0xFF800000> : vector<1xf32>
    %711 = vector.multi_reduction <maximumf>, %710, %cst_170 [1] : vector<1x128xf32> to vector<1xf32>
    %712 = vector.shape_cast %711 : vector<1xf32> to vector<1x1xf32>
    %cst_171 = arith.constant 0xFF800000 : f32
    %713 = vector.broadcast %cst_171 : f32 to vector<1x128xf32>
    %714 = arith.select %10, %713, %708 : vector<1x128xi1>, vector<1x128xf32>
    %cst_172 = arith.constant dense<0xFF800000> : vector<1xf32>
    %715 = vector.multi_reduction <maximumf>, %714, %cst_172 [1] : vector<1x128xf32> to vector<1xf32>
    %716 = vector.shape_cast %715 : vector<1xf32> to vector<1x1xf32>
    %717 = vector.shape_cast %712 : vector<1x1xf32> to vector<1x1xf32>
    %718 = vector.broadcast %717 : vector<1x1xf32> to vector<1x128xf32>
    %719 = vector.shape_cast %716 : vector<1x1xf32> to vector<1x1xf32>
    %720 = vector.broadcast %719 : vector<1x1xf32> to vector<1x128xf32>
    %721 = arith.select %10, %718, %720 : vector<1x128xi1>, vector<1x128xf32>
    %722 = arith.subf %708, %721 : vector<1x128xf32>
    %723 = math.exp %722 : vector<1x128xf32>
    %cst_173 = arith.constant 0.000000e+00 : f32
    %724 = vector.broadcast %cst_173 : f32 to vector<1x128xf32>
    %725 = arith.select %10, %723, %724 : vector<1x128xi1>, vector<1x128xf32>
    %cst_174 = arith.constant dense<0.000000e+00> : vector<1xf32>
    %726 = vector.multi_reduction <add>, %725, %cst_174 [1] : vector<1x128xf32> to vector<1xf32>
    %727 = vector.shape_cast %726 : vector<1xf32> to vector<1x1xf32>
    %cst_175 = arith.constant 0.000000e+00 : f32
    %728 = vector.broadcast %cst_175 : f32 to vector<1x128xf32>
    %729 = arith.select %10, %728, %723 : vector<1x128xi1>, vector<1x128xf32>
    %cst_176 = arith.constant dense<0.000000e+00> : vector<1xf32>
    %730 = vector.multi_reduction <add>, %729, %cst_176 [1] : vector<1x128xf32> to vector<1xf32>
    %731 = vector.shape_cast %730 : vector<1xf32> to vector<1x1xf32>
    %732 = vector.shape_cast %727 : vector<1x1xf32> to vector<1x1xf32>
    %733 = vector.broadcast %732 : vector<1x1xf32> to vector<1x128xf32>
    %734 = vector.shape_cast %731 : vector<1x1xf32> to vector<1x1xf32>
    %735 = vector.broadcast %734 : vector<1x1xf32> to vector<1x128xf32>
    %736 = arith.select %10, %733, %735 : vector<1x128xi1>, vector<1x128xf32>
    %737 = math.log %736 : vector<1x128xf32>
    %738 = arith.addf %721, %737 : vector<1x128xf32>
    %739 = arith.subf %708, %738 : vector<1x128xf32>
    %740 = math.exp %739 : vector<1x128xf32>
    %741 = arith.mulf %740, %707 : vector<1x128xf32>
    %cst_177 = arith.constant 0.000000e+00 : f32
    %742 = vector.broadcast %cst_177 : f32 to vector<1x128xf32>
    %743 = arith.select %10, %741, %742 : vector<1x128xi1>, vector<1x128xf32>
    %cst_178 = arith.constant dense<0.000000e+00> : vector<1xf32>
    %744 = vector.multi_reduction <add>, %743, %cst_178 [1] : vector<1x128xf32> to vector<1xf32>
    %745 = vector.shape_cast %744 : vector<1xf32> to vector<1x1xf32>
    %cst_179 = arith.constant 0.000000e+00 : f32
    %746 = vector.broadcast %cst_179 : f32 to vector<1x128xf32>
    %747 = arith.select %10, %746, %741 : vector<1x128xi1>, vector<1x128xf32>
    %cst_180 = arith.constant dense<0.000000e+00> : vector<1xf32>
    %748 = vector.multi_reduction <add>, %747, %cst_180 [1] : vector<1x128xf32> to vector<1xf32>
    %749 = vector.shape_cast %748 : vector<1xf32> to vector<1x1xf32>
    %750 = vector.shape_cast %745 : vector<1x1xf32> to vector<1x1xf32>
    %751 = vector.broadcast %750 : vector<1x1xf32> to vector<2x1xf32>
    %752 = vector.shape_cast %749 : vector<1x1xf32> to vector<1x1xf32>
    %753 = vector.broadcast %752 : vector<1x1xf32> to vector<2x1xf32>
    %754 = arith.select %14, %751, %753 : vector<2x1xi1>, vector<2x1xf32>
    %c7_i32 = arith.constant 7 : i32
    %755 = vector.broadcast %c7_i32 : i32 to vector<1x8xi32>
    %756 = arith.cmpi eq, %11, %755 : vector<1x8xi32>
    %757 = vector.shape_cast %756 : vector<1x8xi1> to vector<1x8xi1>
    %758 = vector.broadcast %757 : vector<1x8xi1> to vector<2x8xi1>
    %759 = vector.shape_cast %754 : vector<2x1xf32> to vector<2x1xf32>
    %760 = vector.broadcast %759 : vector<2x1xf32> to vector<2x8xf32>
    %761 = arith.select %758, %760, %667 : vector<2x8xi1>, vector<2x8xf32>
    %cst_181 = arith.constant 0.000000e+00 : f32
    %762 = vector.broadcast %cst_181 : f32 to vector<1x128xf32>
    %763 = arith.cmpf oge, %707, %762 : vector<1x128xf32>
    %cst_182 = arith.constant 0.00999999977 : f32
    %764 = vector.broadcast %cst_182 : f32 to vector<1x128xf32>
    %765 = arith.mulf %764, %707 : vector<1x128xf32>
    %766 = arith.select %763, %707, %765 : vector<1x128xi1>, vector<1x128xf32>
    %c7_183 = arith.constant 7 : index
    %c0_184 = arith.constant 0 : index
    %767 = vector.load %arg10[%c7_183, %c0_184] : memref<8x128xf32, #tpu.memory_space<vmem>>, vector<1x128xf32>
    tpu.vector_store %arg10[%c7_183, %c0_184], %766 {strides = array<i32>} : memref<8x128xf32, #tpu.memory_space<vmem>>, vector<1x128xf32>,
    %cst_185 = arith.constant 0.000000e+00 : f32
    %768 = vector.broadcast %cst_185 : f32 to vector<2x8xf32>
    %769 = arith.cmpf oge, %761, %768 : vector<2x8xf32>
    %cst_186 = arith.constant 0.00999999977 : f32
    %770 = vector.broadcast %cst_186 : f32 to vector<2x8xf32>
    %771 = arith.mulf %770, %761 : vector<2x8xf32>
    %772 = arith.select %769, %761, %771 : vector<2x8xi1>, vector<2x8xf32>
    %c0_187 = arith.constant 0 : index
    %c0_188 = arith.constant 0 : index
    %773 = vector.load %arg9[%c0_187, %c0_188] : memref<2x8xf32, #tpu.memory_space<vmem>>, vector<2x8xf32>
    tpu.vector_store %arg9[%c0_187, %c0_188], %772 {strides = array<i32>} : memref<2x8xf32, #tpu.memory_space<vmem>>, vector<2x8xf32>,
    return
  }
  func.func @transform_0(%arg0: i32) -> (i32, i32) {
    %c0_i32 = arith.constant 0 : i32
    %c0_i32_0 = arith.constant 0 : i32
    %c0_i32_1 = arith.constant 0 : i32
    return %c0_i32, %c0_i32_0 : i32, i32
  }
  func.func @transform_1(%arg0: i32) -> (i32, i32) {
    %c0_i32 = arith.constant 0 : i32
    %c0_i32_0 = arith.constant 0 : i32
    %c0_i32_1 = arith.constant 0 : i32
    return %c0_i32, %c0_i32_0 : i32, i32
  }
  func.func @transform_2(%arg0: i32) -> (i32, i32) {
    %c0_i32 = arith.constant 0 : i32
    %c0_i32_0 = arith.constant 0 : i32
    %c0_i32_1 = arith.constant 0 : i32
    return %c0_i32, %c0_i32_0 : i32, i32
  }
  func.func @transform_3(%arg0: i32) -> (i32, i32) {
    %c0_i32 = arith.constant 0 : i32
    %c0_i32_0 = arith.constant 0 : i32
    %c0_i32_1 = arith.constant 0 : i32
    return %c0_i32, %c0_i32_0 : i32, i32
  }
  func.func @transform_4(%arg0: i32) -> (i32, i32) {
    %c0_i32 = arith.constant 0 : i32
    %c0_i32_0 = arith.constant 0 : i32
    %c0_i32_1 = arith.constant 0 : i32
    return %c0_i32, %c0_i32_0 : i32, i32
  }
  func.func @transform_5(%arg0: i32) -> (i32, i32) {
    %c0_i32 = arith.constant 0 : i32
    %c0_i32_0 = arith.constant 0 : i32
    %c0_i32_1 = arith.constant 0 : i32
    return %c0_i32, %c0_i32_0 : i32, i32
  }
  func.func @transform_6(%arg0: i32) -> (i32, i32) {
    %c0_i32 = arith.constant 0 : i32
    %c0_i32_0 = arith.constant 0 : i32
    %c0_i32_1 = arith.constant 0 : i32
    return %c0_i32, %c0_i32_0 : i32, i32
  }
  func.func @transform_7(%arg0: i32) -> (i32, i32) {
    %c0_i32 = arith.constant 0 : i32
    %c0_i32_0 = arith.constant 0 : i32
    %c0_i32_1 = arith.constant 0 : i32
    return %c0_i32, %c0_i32_0 : i32, i32
  }
  func.func @transform_8(%arg0: i32) -> (i32, i32) {
    %c0_i32 = arith.constant 0 : i32
    %c0_i32_0 = arith.constant 0 : i32
    %c0_i32_1 = arith.constant 0 : i32
    return %c0_i32, %c0_i32_0 : i32, i32
  }
  func.func @transform_9(%arg0: i32) -> (i32, i32) {
    %c0_i32 = arith.constant 0 : i32
    %c0_i32_0 = arith.constant 0 : i32
    %c0_i32_1 = arith.constant 0 : i32
    return %c0_i32, %c0_i32_0 : i32, i32
  }
}

</mosaic_0001>

<llo_original>
// kernel: tpu_custom_call.1
$region0: #{tpu_custom_call.1}
  #allocation0 [shape = 'u32[]', space=smem, size = 0x4, offset = 0x4, fixed_abs, tag = 'smem constant byte address 0x4 - core index']
  #allocation1 [shape = 'u32[144,128]{1,0:T(1,128)}', space=vmem, size = 0x12000, scoped, tag = 'internal scratch']
  #allocation2 [shape = 'f32[1,1]{1,0:T(1,128)S(1)}', space=vmem, size = 0x200, scoped, tag = 'scoped memory for tpu_custom_call.1']
  %s0 = inlined_call_operand.vmem [shape: f32[128,16], index: 0, kind: input, shape index: {}]
  %s1 = inlined_call_operand.vmem [shape: f32[8,128], index: 1, kind: input, shape index: {}]
  %s2 = inlined_call_operand.vmem [shape: f32[32,128], index: 2, kind: input, shape index: {}]
  %s3 = inlined_call_operand.vmem [shape: f32[32,128], index: 3, kind: input, shape index: {}]
  %s4 = inlined_call_operand.vmem [shape: f32[1,128], index: 4, kind: input, shape index: {}]
  %s5 = inlined_call_operand.vmem [shape: f32[128,32], index: 5, kind: input, shape index: {}]
  %s6 = inlined_call_operand.vmem [shape: f32[2,32], index: 6, kind: input, shape index: {}]
  %s7 = inlined_call_operand.<no memory space> [shape: f32[1,1], index: 7, kind: input, shape index: {}]
  %s8 = inlined_call_operand.hbm [shape: f32[2,8], index: 8, kind: output, shape index: {0}]
  %s9 = inlined_call_operand.hbm [shape: f32[8,128], index: 9, kind: output, shape index: {1}]
  %10 = xla_tuple %s8, %s9
  %s11 = sld [smem:[#allocation0]]
  $region50: #{tpu_custom_call.1} parent=0
    _
  %s13 = ssub.s32 1, %s11
  %s14 = scalar_select 0, %s13, %s11
  %v15 = vstv %s7
  %16 = vst [vmem:[#allocation2] sm:$0x1] %v15
  $region1: #{tpu_custom_call.1} parent=0
    #allocation3 [shape = 'u8[1024]{0}', space=vmem, size = 0x400, scoped, tag = 'output window, operand 0, single buffered']
    #allocation4 [shape = 's32[1]{0}', space=sflag, size = 0x4, scoped, tag = 'scoped memory for tpu_custom_call.1']
    #allocation5 [shape = 'u8[4096]{0}', space=vmem, size = 0x1000, scoped, tag = 'output window, operand 1, single buffered']
    #allocation6 [shape = 's32[1]{0}', space=sflag, size = 0x4, scoped, tag = 'scoped memory for tpu_custom_call.1']
    %17 = vsyncpa [#allocation4], 0
    %18 = vsyncpa [#allocation6], 0
    // Predicated region
    $region2: #{tpu_custom_call.1} parent=1 // pred_check
      _
    $region3: #{tpu_custom_call.1} parent=1 // pred_check_branch
      %20 = sbr.rel (0) target = $region5
    $region4: #{tpu_custom_call.1} parent=1 // pred_region
      _
    $region5: #{tpu_custom_call.1} parent=1 // pred_fallthru
      _
    // Predicated region
    $region6: #{tpu_custom_call.1} parent=1 // pred_check
      _
    $region7: #{tpu_custom_call.1} parent=1 // pred_check_branch
      %22 = sbr.rel (0) target = $region9
    $region8: #{tpu_custom_call.1} parent=1 // pred_region
      _
    $region9: #{tpu_custom_call.1} parent=1 // pred_fallthru
      _
    // Predicated region
    $region10: #{tpu_custom_call.1} parent=1 // pred_check
      _
    $region11: #{tpu_custom_call.1} parent=1 // pred_check_branch
      %24 = sbr.rel (0) target = $region13
    $region12: #{tpu_custom_call.1} parent=1 // pred_region
      _
    $region13: #{tpu_custom_call.1} parent=1 // pred_fallthru
      _
    // Predicated region
    $region14: #{tpu_custom_call.1} parent=1 // pred_check
      _
    $region15: #{tpu_custom_call.1} parent=1 // pred_check_branch
      %26 = sbr.rel (0) target = $region17
    $region16: #{tpu_custom_call.1} parent=1 // pred_region
      _
    $region17: #{tpu_custom_call.1} parent=1 // pred_fallthru
      _
    // Predicated region
    $region18: #{tpu_custom_call.1} parent=1 // pred_check
      _
    $region19: #{tpu_custom_call.1} parent=1 // pred_check_branch
      %28 = sbr.rel (0) target = $region21
    $region20: #{tpu_custom_call.1} parent=1 // pred_region
      _
    $region21: #{tpu_custom_call.1} parent=1 // pred_fallthru
      _
    // Predicated region
    $region22: #{tpu_custom_call.1} parent=1 // pred_check
      _
    $region23: #{tpu_custom_call.1} parent=1 // pred_check_branch
      %30 = sbr.rel (0) target = $region25
    $region24: #{tpu_custom_call.1} parent=1 // pred_region
      _
    $region25: #{tpu_custom_call.1} parent=1 // pred_fallthru
      _
    // Predicated region
    $region26: #{tpu_custom_call.1} parent=1 // pred_check
      _
    $region27: #{tpu_custom_call.1} parent=1 // pred_check_branch
      %32 = sbr.rel (0) target = $region29
    $region28: #{tpu_custom_call.1} parent=1 // pred_region
      _
    $region29: #{tpu_custom_call.1} parent=1 // pred_fallthru
      _
    // Predicated region
    $region30: #{tpu_custom_call.1} parent=1 // pred_check
      _
    $region31: #{tpu_custom_call.1} parent=1 // pred_check_branch
      %34 = sbr.rel (0) target = $region33
    $region32: #{tpu_custom_call.1} parent=1 // pred_region
      _
    $region33: #{tpu_custom_call.1} parent=1 // pred_fallthru
      _
    %v35 = vld [vmem:[%s2] sm:$0xff]
    %v36 = vld [vmem:[%s2 + $0x8] sm:$0xff]
    %v37 = vld [vmem:[%s2 + $0x10] sm:$0xff]
    %v38 = vld [vmem:[%s2 + $0x18] sm:$0xff]
    %v39 = vld [vmem:[%s3] sm:$0xff]
    %v40 = vld [vmem:[%s3 + $0x8] sm:$0xff]
    %v41 = vld [vmem:[%s3 + $0x10] sm:$0xff]
    %v42 = vld [vmem:[%s3 + $0x18] sm:$0xff]
    %v43 = vld [vmem:[%s4] sm:$0x1]
    %v44 = vld [vmem:[%s5] sm:$0xff]
    %v45 = vld [vmem:[%s5 + $0x8] sm:$0xff]
    %v46 = vld [vmem:[%s5 + $0x10] sm:$0xff]
    %v47 = vld [vmem:[%s5 + $0x18] sm:$0xff]
    %v48 = vld [vmem:[%s5 + $0x20] sm:$0xff]
    %v49 = vld [vmem:[%s5 + $0x28] sm:$0xff]
    %v50 = vld [vmem:[%s5 + $0x30] sm:$0xff]
    %v51 = vld [vmem:[%s5 + $0x38] sm:$0xff]
    %v52 = vld [vmem:[%s5 + $0x40] sm:$0xff]
    %v53 = vld [vmem:[%s5 + $0x48] sm:$0xff]
    %v54 = vld [vmem:[%s5 + $0x50] sm:$0xff]
    %v55 = vld [vmem:[%s5 + $0x58] sm:$0xff]
    %v56 = vld [vmem:[%s5 + $0x60] sm:$0xff]
    %v57 = vld [vmem:[%s5 + $0x68] sm:$0xff]
    %v58 = vld [vmem:[%s5 + $0x70] sm:$0xff]
    %v59 = vld [vmem:[%s5 + $0x78] sm:$0xff]
    %v60 = vld [vmem:[%s6] sm:$0x3]
    %v61 = vld [vmem:[#allocation2] sm:$0x1]
    %63 = vset.pattern.permute.xlu0 0
    %64 = vperm.xlu0 %63, %v61
    %v65 = vpop.permute.xlu0 %64
    %v67 = vlaneseq
    %v68 = vshrl.u32 %v67, 7
    %v69 = vsub.s32 0, %v68
    %v70 = vrot.slane %v65, %v69
    %v71 = vlaneseq
    %v72 = vand.u32 %v71, 127
    %vm73 = vcmp.lt.s32.totalorder %v72, 64
    %v74 = vlaneseq
    %v75 = vshrl.u32 %v74, 7
    %vm76 = vcmp.eq.s32.totalorder %v75, 0
    %v77 = vld [vmem:[%s0] sm:$0xff]
    %v78 = vld [vmem:[%s0 + $0x8] sm:$0xff]
    %v79 = vld [vmem:[%s0 + $0x10] sm:$0xff]
    %v80 = vld [vmem:[%s0 + $0x18] sm:$0xff]
    %v81 = vld [vmem:[%s0 + $0x20] sm:$0xff]
    %v82 = vld [vmem:[%s0 + $0x28] sm:$0xff]
    %v83 = vld [vmem:[%s0 + $0x30] sm:$0xff]
    %v84 = vld [vmem:[%s0 + $0x38] sm:$0xff]
    %v85 = vld [vmem:[%s0 + $0x40] sm:$0xff]
    %v86 = vld [vmem:[%s0 + $0x48] sm:$0xff]
    %v87 = vld [vmem:[%s0 + $0x50] sm:$0xff]
    %v88 = vld [vmem:[%s0 + $0x58] sm:$0xff]
    %v89 = vld [vmem:[%s0 + $0x60] sm:$0xff]
    %v90 = vld [vmem:[%s0 + $0x68] sm:$0xff]
    %v91 = vld [vmem:[%s0 + $0x70] sm:$0xff]
    %v92 = vld [vmem:[%s0 + $0x78] sm:$0xff]
    %v93 = vsel %vm73, 1, 0
    %vm94 = vcmp.eq.s32.totalorder %v93, 1
    %96 = vset.pattern.permute.xlu0 0
    %97 = vperm.xlu0 %96, %v77
    %v98 = vpop.permute.xlu0 %97
    %101 = vset.pattern.permute.xlu0 0
    %102 = vperm.xlu0 %101, %v78
    %v103 = vpop.permute.xlu0 %102
    %106 = vset.pattern.permute.xlu0 0
    %107 = vperm.xlu0 %106, %v79
    %v108 = vpop.permute.xlu0 %107
    %111 = vset.pattern.permute.xlu0 0
    %112 = vperm.xlu0 %111, %v80
    %v113 = vpop.permute.xlu0 %112
    %116 = vset.pattern.permute.xlu0 0
    %117 = vperm.xlu0 %116, %v81
    %v118 = vpop.permute.xlu0 %117
    %121 = vset.pattern.permute.xlu0 0
    %122 = vperm.xlu0 %121, %v82
    %v123 = vpop.permute.xlu0 %122
    %126 = vset.pattern.permute.xlu0 0
    %127 = vperm.xlu0 %126, %v83
    %v128 = vpop.permute.xlu0 %127
    %131 = vset.pattern.permute.xlu0 0
    %132 = vperm.xlu0 %131, %v84
    %v133 = vpop.permute.xlu0 %132
    %136 = vset.pattern.permute.xlu0 0
    %137 = vperm.xlu0 %136, %v85
    %v138 = vpop.permute.xlu0 %137
    %141 = vset.pattern.permute.xlu0 0
    %142 = vperm.xlu0 %141, %v86
    %v143 = vpop.permute.xlu0 %142
    %146 = vset.pattern.permute.xlu0 0
    %147 = vperm.xlu0 %146, %v87
    %v148 = vpop.permute.xlu0 %147
    %151 = vset.pattern.permute.xlu0 0
    %152 = vperm.xlu0 %151, %v88
    %v153 = vpop.permute.xlu0 %152
    %156 = vset.pattern.permute.xlu0 0
    %157 = vperm.xlu0 %156, %v89
    %v158 = vpop.permute.xlu0 %157
    %161 = vset.pattern.permute.xlu0 0
    %162 = vperm.xlu0 %161, %v90
    %v163 = vpop.permute.xlu0 %162
    %166 = vset.pattern.permute.xlu0 0
    %167 = vperm.xlu0 %166, %v91
    %v168 = vpop.permute.xlu0 %167
    %171 = vset.pattern.permute.xlu0 0
    %172 = vperm.xlu0 %171, %v92
    %v173 = vpop.permute.xlu0 %172
    %175 = vset.pattern.permute.xlu0 1
    %176 = vperm.xlu0 %175, %v77
    %v177 = vpop.permute.xlu0 %176
    %179 = vset.pattern.permute.xlu0 1
    %180 = vperm.xlu0 %179, %v78
    %v181 = vpop.permute.xlu0 %180
    %183 = vset.pattern.permute.xlu0 1
    %184 = vperm.xlu0 %183, %v79
    %v185 = vpop.permute.xlu0 %184
    %187 = vset.pattern.permute.xlu0 1
    %188 = vperm.xlu0 %187, %v80
    %v189 = vpop.permute.xlu0 %188
    %191 = vset.pattern.permute.xlu0 1
    %192 = vperm.xlu0 %191, %v81
    %v193 = vpop.permute.xlu0 %192
    %195 = vset.pattern.permute.xlu0 1
    %196 = vperm.xlu0 %195, %v82
    %v197 = vpop.permute.xlu0 %196
    %199 = vset.pattern.permute.xlu0 1
    %200 = vperm.xlu0 %199, %v83
    %v201 = vpop.permute.xlu0 %200
    %203 = vset.pattern.permute.xlu0 1
    %204 = vperm.xlu0 %203, %v84
    %v205 = vpop.permute.xlu0 %204
    %207 = vset.pattern.permute.xlu0 1
    %208 = vperm.xlu0 %207, %v85
    %v209 = vpop.permute.xlu0 %208
    %211 = vset.pattern.permute.xlu0 1
    %212 = vperm.xlu0 %211, %v86
    %v213 = vpop.permute.xlu0 %212
    %215 = vset.pattern.permute.xlu0 1
    %216 = vperm.xlu0 %215, %v87
    %v217 = vpop.permute.xlu0 %216
    %219 = vset.pattern.permute.xlu0 1
    %220 = vperm.xlu0 %219, %v88
    %v221 = vpop.permute.xlu0 %220
    %223 = vset.pattern.permute.xlu0 1
    %224 = vperm.xlu0 %223, %v89
    %v225 = vpop.permute.xlu0 %224
    %227 = vset.pattern.permute.xlu0 1
    %228 = vperm.xlu0 %227, %v90
    %v229 = vpop.permute.xlu0 %228
    %231 = vset.pattern.permute.xlu0 1
    %232 = vperm.xlu0 %231, %v91
    %v233 = vpop.permute.xlu0 %232
    %235 = vset.pattern.permute.xlu0 1
    %236 = vperm.xlu0 %235, %v92
    %v237 = vpop.permute.xlu0 %236
    %v239 = vsel %vm94, %v98, %v177
    %v240 = vsel %vm94, %v103, %v181
    %v241 = vsel %vm94, %v108, %v185
    %v242 = vsel %vm94, %v113, %v189
    %v243 = vsel %vm94, %v118, %v193
    %v244 = vsel %vm94, %v123, %v197
    %v245 = vsel %vm94, %v128, %v201
    %v246 = vsel %vm94, %v133, %v205
    %v247 = vsel %vm94, %v138, %v209
    %v248 = vsel %vm94, %v143, %v213
    %v249 = vsel %vm94, %v148, %v217
    %v250 = vsel %vm94, %v153, %v221
    %v251 = vsel %vm94, %v158, %v225
    %v252 = vsel %vm94, %v163, %v229
    %v253 = vsel %vm94, %v168, %v233
    %v254 = vsel %vm94, %v173, %v237
    %vm255 = vcmask 261120
    %v257 = vsel %vm255, %v44, 0
    %v260 = vsel %vm255, %v45, 0
    %v263 = vsel %vm255, %v46, 0
    %v266 = vsel %vm255, %v47, 0
    %v269 = vsel %vm255, %v48, 0
    %v272 = vsel %vm255, %v49, 0
    %v275 = vsel %vm255, %v50, 0
    %v278 = vsel %vm255, %v51, 0
    %v281 = vsel %vm255, %v52, 0
    %v284 = vsel %vm255, %v53, 0
    %v287 = vsel %vm255, %v54, 0
    %v290 = vsel %vm255, %v55, 0
    %v293 = vsel %vm255, %v56, 0
    %v296 = vsel %vm255, %v57, 0
    %v299 = vsel %vm255, %v58, 0
    %v302 = vsel %vm255, %v59, 0
    %304 = vmatprep.subr.mxu0 0.0
    %305 = vmatpush1.msra.mxu0 %v35
    %306 = vmatprep.subr.mxu0 0.0
    %307 = vmatpush1.msra.mxu0 %v36
    %308 = vmatprep.subr.mxu0 0.0
    %309 = vmatpush1.msra.mxu0 %v37
    %310 = vmatprep.subr.mxu0 0.0
    %311 = vmatpush1.msra.mxu0 %v38
    %312 = vmatprep.subr.mxu0 0.0
    %313 = vmatpush1.msra.mxu0 0.0
    %314 = vmatprep.subr.mxu0 0.0
    %315 = vmatpush1.msra.mxu0 0.0
    %316 = vmatprep.subr.mxu0 0.0
    %317 = vmatpush1.msra.mxu0 0.0
    %318 = vmatprep.subr.mxu0 0.0
    %319 = vmatpush1.msra.mxu0 0.0
    %320 = vmatprep.subr.mxu0 0.0
    %321 = vmatpush1.msra.mxu0 0.0
    %322 = vmatprep.subr.mxu0 0.0
    %323 = vmatpush1.msra.mxu0 0.0
    %324 = vmatprep.subr.mxu0 0.0
    %325 = vmatpush1.msra.mxu0 0.0
    %326 = vmatprep.subr.mxu0 0.0
    %327 = vmatpush1.msra.mxu0 0.0
    %328 = vmatprep.subr.mxu0 0.0
    %329 = vmatpush1.msra.mxu0 0.0
    %330 = vmatprep.subr.mxu0 0.0
    %331 = vmatpush1.msra.mxu0 0.0
    %332 = vmatprep.subr.mxu0 0.0
    %333 = vmatpush1.msra.mxu0 0.0
    %334 = vmatprep.subr.mxu0 0.0
    %335 = vmatpush1.msra.mxu0 0.0
    %336 = vmatprep.subr.mxu0 0.0
    %337 = vmatpush1.msra.mxu0 0.0
    %338 = vmatprep.subr.mxu0 0.0
    %339 = vmatpush1.msra.mxu0 0.0
    %340 = vmatprep.subr.mxu0 0.0
    %341 = vmatpush1.msra.mxu0 0.0
    %342 = vmatprep.subr.mxu0 0.0
    %343 = vmatpush1.msra.mxu0 0.0
    %344 = vmatprep.subr.mxu0 0.0
    %345 = vmatpush1.msra.mxu0 0.0
    %346 = vmatprep.subr.mxu0 0.0
    %347 = vmatpush1.msra.mxu0 0.0
    %348 = vmatprep.subr.mxu0 0.0
    %349 = vmatpush1.msra.mxu0 0.0
    %350 = vmatprep.subr.mxu0 0.0
    %351 = vmatpush1.msra.mxu0 0.0
    %352 = vmatprep.subr.mxu0 0.0
    %353 = vmatpush1.msra.mxu0 0.0
    %354 = vmatprep.subr.mxu0 0.0
    %355 = vmatpush1.msra.mxu0 0.0
    %356 = vmatprep.subr.mxu0 0.0
    %357 = vmatpush1.msra.mxu0 0.0
    %358 = vmatprep.subr.mxu0 0.0
    %359 = vmatpush1.msra.mxu0 0.0
    %360 = vmatprep.subr.mxu0 0.0
    %361 = vmatpush1.msra.mxu0 0.0
    %362 = vmatprep.subr.mxu0 0.0
    %363 = vmatpush1.msra.mxu0 0.0
    %364 = vmatprep.subr.mxu0 0.0
    %365 = vmatpush1.msra.mxu0 0.0
    %366 = vmatprep.subr.mxu0 0.0
    %367 = vmatpush1.msra.mxu0 0.0
    %368 = vmatprep.mubr.f32.mxu0 0.0
    %369 = vmatmul.mubr.f32.gmra.mrb[0].mxu0 %v257
    %v370 = vpop.f32.mrb[0].mxu0
    %v371 = vadd.f32 %v239, %v370
    %v372 = vpop.f32.mrb[0].mxu0
    %373 = vmatprep.mubr.f32.mxu0 0.0
    %374 = vmatmul.mubr.f32.gmra.mrb[0].mxu0 %v260
    %v375 = vpop.f32.mrb[0].mxu0
    %v376 = vadd.f32 %v240, %v375
    %v377 = vpop.f32.mrb[0].mxu0
    %378 = vmatprep.mubr.f32.mxu0 0.0
    %379 = vmatmul.mubr.f32.gmra.mrb[0].mxu0 %v263
    %v380 = vpop.f32.mrb[0].mxu0
    %v381 = vadd.f32 %v241, %v380
    %v382 = vpop.f32.mrb[0].mxu0
    %383 = vmatprep.mubr.f32.mxu0 0.0
    %384 = vmatmul.mubr.f32.gmra.mrb[0].mxu0 %v266
    %v385 = vpop.f32.mrb[0].mxu0
    %v386 = vadd.f32 %v242, %v385
    %v387 = vpop.f32.mrb[0].mxu0
    %388 = vmatprep.mubr.f32.mxu0 0.0
    %389 = vmatmul.mubr.f32.gmra.mrb[0].mxu0 %v269
    %v390 = vpop.f32.mrb[0].mxu0
    %v391 = vadd.f32 %v243, %v390
    %v392 = vpop.f32.mrb[0].mxu0
    %393 = vmatprep.mubr.f32.mxu0 0.0
    %394 = vmatmul.mubr.f32.gmra.mrb[0].mxu0 %v272
    %v395 = vpop.f32.mrb[0].mxu0
    %v396 = vadd.f32 %v244, %v395
    %v397 = vpop.f32.mrb[0].mxu0
    %398 = vmatprep.mubr.f32.mxu0 0.0
    %399 = vmatmul.mubr.f32.gmra.mrb[0].mxu0 %v275
    %v400 = vpop.f32.mrb[0].mxu0
    %v401 = vadd.f32 %v245, %v400
    %v402 = vpop.f32.mrb[0].mxu0
    %403 = vmatprep.mubr.f32.mxu0 0.0
    %404 = vmatmul.mubr.f32.gmra.mrb[0].mxu0 %v278
    %v405 = vpop.f32.mrb[0].mxu0
    %v406 = vadd.f32 %v246, %v405
    %v407 = vpop.f32.mrb[0].mxu0
    %408 = vmatprep.mubr.f32.mxu0 0.0
    %409 = vmatmul.mubr.f32.gmra.mrb[0].mxu0 %v281
    %v410 = vpop.f32.mrb[0].mxu0
    %v411 = vadd.f32 %v247, %v410
    %v412 = vpop.f32.mrb[0].mxu0
    %413 = vmatprep.mubr.f32.mxu0 0.0
    %414 = vmatmul.mubr.f32.gmra.mrb[0].mxu0 %v284
    %v415 = vpop.f32.mrb[0].mxu0
    %v416 = vadd.f32 %v248, %v415
    %v417 = vpop.f32.mrb[0].mxu0
    %418 = vmatprep.mubr.f32.mxu0 0.0
    %419 = vmatmul.mubr.f32.gmra.mrb[0].mxu0 %v287
    %v420 = vpop.f32.mrb[0].mxu0
    %v421 = vadd.f32 %v249, %v420
    %v422 = vpop.f32.mrb[0].mxu0
    %423 = vmatprep.mubr.f32.mxu0 0.0
    %424 = vmatmul.mubr.f32.gmra.mrb[0].mxu0 %v290
    %v425 = vpop.f32.mrb[0].mxu0
    %v426 = vadd.f32 %v250, %v425
    %v427 = vpop.f32.mrb[0].mxu0
    %428 = vmatprep.mubr.f32.mxu0 0.0
    %429 = vmatmul.mubr.f32.gmra.mrb[0].mxu0 %v293
    %v430 = vpop.f32.mrb[0].mxu0
    %v431 = vadd.f32 %v251, %v430
    %v432 = vpop.f32.mrb[0].mxu0
    %433 = vmatprep.mubr.f32.mxu0 0.0
    %434 = vmatmul.mubr.f32.gmra.mrb[0].mxu0 %v296
    %v435 = vpop.f32.mrb[0].mxu0
    %v436 = vadd.f32 %v252, %v435
    %v437 = vpop.f32.mrb[0].mxu0
    %438 = vmatprep.mubr.f32.mxu0 0.0
    %439 = vmatmul.mubr.f32.gmra.mrb[0].mxu0 %v299
    %v440 = vpop.f32.mrb[0].mxu0
    %v441 = vadd.f32 %v253, %v440
    %v442 = vpop.f32.mrb[0].mxu0
    %443 = vmatprep.mubr.f32.mxu0 0.0
    %444 = vmatmul.mubr.f32.gmra.mrb[0].mxu0 %v302
    %v445 = vpop.f32.mrb[0].mxu0
    %v446 = vadd.f32 %v254, %v445
    %v447 = vpop.f32.mrb[0].mxu0
    %448 = vdwg.mxu0
    %v449 = vxor.u32 %v371, 2147483648
    %v450 = vxor.u32 %v376, 2147483648
    %v451 = vxor.u32 %v381, 2147483648
    %v452 = vxor.u32 %v386, 2147483648
    %v453 = vxor.u32 %v391, 2147483648
    %v454 = vxor.u32 %v396, 2147483648
    %v455 = vxor.u32 %v401, 2147483648
    %v456 = vxor.u32 %v406, 2147483648
    %v457 = vxor.u32 %v411, 2147483648
    %v458 = vxor.u32 %v416, 2147483648
    %v459 = vxor.u32 %v421, 2147483648
    %v460 = vxor.u32 %v426, 2147483648
    %v461 = vmul.f32 %v449, 1.442695
    %v462 = vpow.pop %v461
    %v463 = vmul.f32 %v450, 1.442695
    %v464 = vpow.pop %v463
    %v465 = vmul.f32 %v451, 1.442695
    %v466 = vpow.pop %v465
    %v467 = vmul.f32 %v452, 1.442695
    %v468 = vpow.pop %v467
    %v469 = vmul.f32 %v453, 1.442695
    %v470 = vpow.pop %v469
    %v471 = vmul.f32 %v454, 1.442695
    %v472 = vpow.pop %v471
    %v473 = vmul.f32 %v455, 1.442695
    %v474 = vpow.pop %v473
    %v475 = vmul.f32 %v456, 1.442695
    %v476 = vpow.pop %v475
    %v477 = vmul.f32 %v457, 1.442695
    %v478 = vpow.pop %v477
    %v479 = vmul.f32 %v458, 1.442695
    %v480 = vpow.pop %v479
    %v481 = vmul.f32 %v459, 1.442695
    %v482 = vpow.pop %v481
    %v483 = vmul.f32 %v460, 1.442695
    %v484 = vpow.pop %v483
    %v485 = vadd.f32 %v462, 1.0
    %v486 = vadd.f32 %v464, 1.0
    %v487 = vadd.f32 %v466, 1.0
    %v488 = vadd.f32 %v468, 1.0
    %v489 = vadd.f32 %v470, 1.0
    %v490 = vadd.f32 %v472, 1.0
    %v491 = vadd.f32 %v474, 1.0
    %v492 = vadd.f32 %v476, 1.0
    %v493 = vadd.f32 %v478, 1.0
    %v494 = vadd.f32 %v480, 1.0
    %v495 = vadd.f32 %v482, 1.0
    %v496 = vadd.f32 %v484, 1.0
    %v497 = vrcp.pop %v485
    %v498 = vmul.f32 1.0, %v497
    %v499 = vrcp.pop %v486
    %v500 = vmul.f32 1.0, %v499
    %v501 = vrcp.pop %v487
    %v502 = vmul.f32 1.0, %v501
    %v503 = vrcp.pop %v488
    %v504 = vmul.f32 1.0, %v503
    %v505 = vrcp.pop %v489
    %v506 = vmul.f32 1.0, %v505
    %v507 = vrcp.pop %v490
    %v508 = vmul.f32 1.0, %v507
    %v509 = vrcp.pop %v491
    %v510 = vmul.f32 1.0, %v509
    %v511 = vrcp.pop %v492
    %v512 = vmul.f32 1.0, %v511
    %v513 = vrcp.pop %v493
    %v514 = vmul.f32 1.0, %v513
    %v515 = vrcp.pop %v494
    %v516 = vmul.f32 1.0, %v515
    %v517 = vrcp.pop %v495
    %v518 = vmul.f32 1.0, %v517
    %v519 = vrcp.pop %v496
    %v520 = vmul.f32 1.0, %v519
    %v521 = vtanh.pop %v431
    %v522 = vtanh.pop %v436
    %v523 = vtanh.pop %v441
    %v524 = vtanh.pop %v446
    %v525 = vmul.f32 %v506, %v39
    %v526 = vmul.f32 %v508, %v40
    %v527 = vmul.f32 %v510, %v41
    %v528 = vmul.f32 %v512, %v42
    %v529 = vmul.f32 %v498, %v521
    %v530 = vmul.f32 %v500, %v522
    %v531 = vmul.f32 %v502, %v523
    %v532 = vmul.f32 %v504, %v524
    %v533 = vadd.f32 %v525, %v529
    %v534 = vadd.f32 %v526, %v530
    %v535 = vadd.f32 %v527, %v531
    %v536 = vadd.f32 %v528, %v532
    %v537 = vtanh.pop %v533
    %v538 = vtanh.pop %v534
    %v539 = vtanh.pop %v535
    %v540 = vtanh.pop %v536
    %v541 = vmul.f32 %v514, %v537
    %v542 = vmul.f32 %v516, %v538
    %v543 = vmul.f32 %v518, %v539
    %v544 = vmul.f32 %v520, %v540
    %v546 = vsel %vm255, %v60, 0
    %548 = vmatprep.subr.mxu0 0.0
    %549 = vmatpush1.msra.mxu0 %v541
    %550 = vmatprep.subr.mxu0 0.0
    %551 = vmatpush1.msra.mxu0 %v542
    %552 = vmatprep.subr.mxu0 0.0
    %553 = vmatpush1.msra.mxu0 %v543
    %554 = vmatprep.subr.mxu0 0.0
    %555 = vmatpush1.msra.mxu0 %v544
    %556 = vmatprep.subr.mxu0 0.0
    %557 = vmatpush1.msra.mxu0 0.0
    %558 = vmatprep.subr.mxu0 0.0
    %559 = vmatpush1.msra.mxu0 0.0
    %560 = vmatprep.subr.mxu0 0.0
    %561 = vmatpush1.msra.mxu0 0.0
    %562 = vmatprep.subr.mxu0 0.0
    %563 = vmatpush1.msra.mxu0 0.0
    %564 = vmatprep.subr.mxu0 0.0
    %565 = vmatpush1.msra.mxu0 0.0
    %566 = vmatprep.subr.mxu0 0.0
    %567 = vmatpush1.msra.mxu0 0.0
    %568 = vmatprep.subr.mxu0 0.0
    %569 = vmatpush1.msra.mxu0 0.0
    %570 = vmatprep.subr.mxu0 0.0
    %571 = vmatpush1.msra.mxu0 0.0
    %572 = vmatprep.subr.mxu0 0.0
    %573 = vmatpush1.msra.mxu0 0.0
    %574 = vmatprep.subr.mxu0 0.0
    %575 = vmatpush1.msra.mxu0 0.0
    %576 = vmatprep.subr.mxu0 0.0
    %577 = vmatpush1.msra.mxu0 0.0
    %578 = vmatprep.subr.mxu0 0.0
    %579 = vmatpush1.msra.mxu0 0.0
    %580 = vmatprep.subr.mxu0 0.0
    %581 = vmatpush1.msra.mxu0 0.0
    %582 = vmatprep.subr.mxu0 0.0
    %583 = vmatpush1.msra.mxu0 0.0
    %584 = vmatprep.subr.mxu0 0.0
    %585 = vmatpush1.msra.mxu0 0.0
    %586 = vmatprep.subr.mxu0 0.0
    %587 = vmatpush1.msra.mxu0 0.0
    %588 = vmatprep.subr.mxu0 0.0
    %589 = vmatpush1.msra.mxu0 0.0
    %590 = vmatprep.subr.mxu0 0.0
    %591 = vmatpush1.msra.mxu0 0.0
    %592 = vmatprep.subr.mxu0 0.0
    %593 = vmatpush1.msra.mxu0 0.0
    %594 = vmatprep.subr.mxu0 0.0
    %595 = vmatpush1.msra.mxu0 0.0
    %596 = vmatprep.subr.mxu0 0.0
    %597 = vmatpush1.msra.mxu0 0.0
    %598 = vmatprep.subr.mxu0 0.0
    %599 = vmatpush1.msra.mxu0 0.0
    %600 = vmatprep.subr.mxu0 0.0
    %601 = vmatpush1.msra.mxu0 0.0
    %602 = vmatprep.subr.mxu0 0.0
    %603 = vmatpush1.msra.mxu0 0.0
    %604 = vmatprep.subr.mxu0 0.0
    %605 = vmatpush1.msra.mxu0 0.0
    %606 = vmatprep.subr.mxu0 0.0
    %607 = vmatpush1.msra.mxu0 0.0
    %608 = vmatprep.subr.mxu0 0.0
    %609 = vmatpush1.msra.mxu0 0.0
    %610 = vmatprep.subr.mxu0 0.0
    %611 = vmatpush1.msra.mxu0 0.0
    %612 = vmatprep.mubr.f32.mxu0 0.0
    %613 = vmatmul.mubr.f32.gmra.mrb[0].mxu0 %v546
    %v614 = vpop.f32.mrb[0].mxu0
    %v615 = vadd.f32 0.0, %v614
    %v616 = vpop.f32.mrb[0].mxu0
    %617 = vdwg.mxu0
    %v618 = vld [vmem:[%s1] sm:$0x1]
    %v619 = vadd.f32 %v615, %v618
    %v620 = vadd.f32 %v615, %v70
    %v621 = vadd.f32 %v43, %v619
    %v622 = vsel %vm73, %v621, -inf
    %vm623 = vcmask 1040384
    %v624 = vsel %vm623, %v622, -inf
    %625 = vmax.xlane.f32.xlu0 %v624
    %v626 = vpop.xlane.xlu0 %625
    %v627 = vsel %vm73, -inf, %v621
    %v628 = vsel %vm623, %v627, -inf
    %629 = vmax.xlane.f32.xlu0 %v628
    %v630 = vpop.xlane.xlu0 %629
    %v631 = vsel %vm73, %v626, %v630
    %v632 = vsub.f32 %v621, %v631
    %v633 = vmul.f32 %v632, 1.442695
    %v634 = vpow.pop %v633
    %v635 = vsel %vm73, %v634, 0.0
    %v636 = vsel %vm623, %v635, 0.0
    %637 = vadd.xlane.f32.xlu0 %v636
    %v638 = vpop.xlane.xlu0 %637
    %v639 = vsel %vm73, 0.0, %v634
    %v640 = vsel %vm623, %v639, 0.0
    %641 = vadd.xlane.f32.xlu0 %v640
    %v642 = vpop.xlane.xlu0 %641
    %v643 = vsel %vm73, %v638, %v642
    %v644 = vlog2.pop %v643
    %v645 = vmul.f32 %v644, 0.6931472
    %v646 = vadd.f32 %v631, %v645
    %v647 = vsub.f32 %v621, %v646
    %v648 = vmul.f32 %v647, 1.442695
    %v649 = vpow.pop %v648
    %v652 = vunpack.c.l.s4 1966171168
    %v653 = vunpack.c.0.s8 %v652
    %v654 = vlaneseq
    %v655 = vshrl.u32 %v654, 7
    %v656 = vsub.s32 %v653, %v655
    %v657 = vrot.slane %v620, %v656
    %v658 = vcombine.high %v657, %v657
    %v660 = vunpack.c.l.s4 1966171168
    %v661 = vunpack.c.0.s8 %v660
    %v662 = vlaneseq
    %v663 = vshrl.u32 %v662, 7
    %v664 = vsub.s32 %v661, %v663
    %v665 = vrot.slane %v658, %v664
    %v667 = vmul.f32 %v649, %v665
    %v668 = vsel %vm73, %v667, 0.0
    %v669 = vsel %vm623, %v668, 0.0
    %670 = vadd.xlane.f32.xlu0 %v669
    %v671 = vpop.xlane.xlu0 %670
    %v672 = vsel %vm73, 0.0, %v667
    %v673 = vsel %vm623, %v672, 0.0
    %674 = vadd.xlane.f32.xlu0 %v673
    %v675 = vpop.xlane.xlu0 %674
    %v676 = vlaneseq
    %v677 = vshrl.u32 %v676, 7
    %v678 = vsub.s32 0, %v677
    %v679 = vrot.slane %v671, %v678
    %v680 = vlaneseq
    %v681 = vshrl.u32 %v680, 7
    %v682 = vsub.s32 0, %v681
    %v683 = vrot.slane %v675, %v682
    %v684 = vsel %vm76, %v679, %v683
    %vm685 = vcmp.eq.s32.totalorder %v72, 0
    %v686 = vsel %vm685, 1, 0
    %vm687 = vcmp.eq.s32.totalorder %v686, 1
    %v688 = vsel %vm687, %v684, 0.0
    %vm689 = vcmp.ge.f32.partialorder %v620, 0.0
    %v690 = vmul.f32 %v620, 0.01
    %v691 = vsel %vm689, %v620, %v690
    %692 = vst [vmem:[#allocation5 - $0x1] sm:$0x2] %v691
    %v693 = vld [vmem:[%s0] sm:$0xff]
    %v694 = vld [vmem:[%s0 + $0x8] sm:$0xff]
    %v695 = vld [vmem:[%s0 + $0x10] sm:$0xff]
    %v696 = vld [vmem:[%s0 + $0x18] sm:$0xff]
    %v697 = vld [vmem:[%s0 + $0x20] sm:$0xff]
    %v698 = vld [vmem:[%s0 + $0x28] sm:$0xff]
    %v699 = vld [vmem:[%s0 + $0x30] sm:$0xff]
    %v700 = vld [vmem:[%s0 + $0x38] sm:$0xff]
    %v701 = vld [vmem:[%s0 + $0x40] sm:$0xff]
    %v702 = vld [vmem:[%s0 + $0x48] sm:$0xff]
    %v703 = vld [vmem:[%s0 + $0x50] sm:$0xff]
    %v704 = vld [vmem:[%s0 + $0x58] sm:$0xff]
    %v705 = vld [vmem:[%s0 + $0x60] sm:$0xff]
    %v706 = vld [vmem:[%s0 + $0x68] sm:$0xff]
    %v707 = vld [vmem:[%s0 + $0x70] sm:$0xff]
    %v708 = vld [vmem:[%s0 + $0x78] sm:$0xff]
    %710 = vset.pattern.permute.xlu0 2
    %711 = vperm.xlu0 %710, %v693
    %v712 = vpop.permute.xlu0 %711
    %715 = vset.pattern.permute.xlu0 2
    %716 = vperm.xlu0 %715, %v694
    %v717 = vpop.permute.xlu0 %716
    %720 = vset.pattern.permute.xlu0 2
    %721 = vperm.xlu0 %720, %v695
    %v722 = vpop.permute.xlu0 %721
    %725 = vset.pattern.permute.xlu0 2
    %726 = vperm.xlu0 %725, %v696
    %v727 = vpop.permute.xlu0 %726
    %730 = vset.pattern.permute.xlu0 2
    %731 = vperm.xlu0 %730, %v697
    %v732 = vpop.permute.xlu0 %731
    %735 = vset.pattern.permute.xlu0 2
    %736 = vperm.xlu0 %735, %v698
    %v737 = vpop.permute.xlu0 %736
    %740 = vset.pattern.permute.xlu0 2
    %741 = vperm.xlu0 %740, %v699
    %v742 = vpop.permute.xlu0 %741
    %745 = vset.pattern.permute.xlu0 2
    %746 = vperm.xlu0 %745, %v700
    %v747 = vpop.permute.xlu0 %746
    %750 = vset.pattern.permute.xlu0 2
    %751 = vperm.xlu0 %750, %v701
    %v752 = vpop.permute.xlu0 %751
    %755 = vset.pattern.permute.xlu0 2
    %756 = vperm.xlu0 %755, %v702
    %v757 = vpop.permute.xlu0 %756
    %760 = vset.pattern.permute.xlu0 2
    %761 = vperm.xlu0 %760, %v703
    %v762 = vpop.permute.xlu0 %761
    %765 = vset.pattern.permute.xlu0 2
    %766 = vperm.xlu0 %765, %v704
    %v767 = vpop.permute.xlu0 %766
    %770 = vset.pattern.permute.xlu0 2
    %771 = vperm.xlu0 %770, %v705
    %v772 = vpop.permute.xlu0 %771
    %775 = vset.pattern.permute.xlu0 2
    %776 = vperm.xlu0 %775, %v706
    %v777 = vpop.permute.xlu0 %776
    %780 = vset.pattern.permute.xlu0 2
    %781 = vperm.xlu0 %780, %v707
    %v782 = vpop.permute.xlu0 %781
    %785 = vset.pattern.permute.xlu0 2
    %786 = vperm.xlu0 %785, %v708
    %v787 = vpop.permute.xlu0 %786
    %789 = vset.pattern.permute.xlu0 3
    %790 = vperm.xlu0 %789, %v693
    %v791 = vpop.permute.xlu0 %790
    %793 = vset.pattern.permute.xlu0 3
    %794 = vperm.xlu0 %793, %v694
    %v795 = vpop.permute.xlu0 %794
    %797 = vset.pattern.permute.xlu0 3
    %798 = vperm.xlu0 %797, %v695
    %v799 = vpop.permute.xlu0 %798
    %801 = vset.pattern.permute.xlu0 3
    %802 = vperm.xlu0 %801, %v696
    %v803 = vpop.permute.xlu0 %802
    %805 = vset.pattern.permute.xlu0 3
    %806 = vperm.xlu0 %805, %v697
    %v807 = vpop.permute.xlu0 %806
    %809 = vset.pattern.permute.xlu0 3
    %810 = vperm.xlu0 %809, %v698
    %v811 = vpop.permute.xlu0 %810
    %813 = vset.pattern.permute.xlu0 3
    %814 = vperm.xlu0 %813, %v699
    %v815 = vpop.permute.xlu0 %814
    %817 = vset.pattern.permute.xlu0 3
    %818 = vperm.xlu0 %817, %v700
    %v819 = vpop.permute.xlu0 %818
    %821 = vset.pattern.permute.xlu0 3
    %822 = vperm.xlu0 %821, %v701
    %v823 = vpop.permute.xlu0 %822
    %825 = vset.pattern.permute.xlu0 3
    %826 = vperm.xlu0 %825, %v702
    %v827 = vpop.permute.xlu0 %826
    %829 = vset.pattern.permute.xlu0 3
    %830 = vperm.xlu0 %829, %v703
    %v831 = vpop.permute.xlu0 %830
    %833 = vset.pattern.permute.xlu0 3
    %834 = vperm.xlu0 %833, %v704
    %v835 = vpop.permute.xlu0 %834
    %837 = vset.pattern.permute.xlu0 3
    %838 = vperm.xlu0 %837, %v705
    %v839 = vpop.permute.xlu0 %838
    %841 = vset.pattern.permute.xlu0 3
    %842 = vperm.xlu0 %841, %v706
    %v843 = vpop.permute.xlu0 %842
    %845 = vset.pattern.permute.xlu0 3
    %846 = vperm.xlu0 %845, %v707
    %v847 = vpop.permute.xlu0 %846
    %849 = vset.pattern.permute.xlu0 3
    %850 = vperm.xlu0 %849, %v708
    %v851 = vpop.permute.xlu0 %850
    %v853 = vsel %vm94, %v712, %v791
    %v854 = vsel %vm94, %v717, %v795
    %v855 = vsel %vm94, %v722, %v799
    %v856 = vsel %vm94, %v727, %v803
    %v857 = vsel %vm94, %v732, %v807
    %v858 = vsel %vm94, %v737, %v811
    %v859 = vsel %vm94, %v742, %v815
    %v860 = vsel %vm94, %v747, %v819
    %v861 = vsel %vm94, %v752, %v823
    %v862 = vsel %vm94, %v757, %v827
    %v863 = vsel %vm94, %v762, %v831
    %v864 = vsel %vm94, %v767, %v835
    %v865 = vsel %vm94, %v772, %v839
    %v866 = vsel %vm94, %v777, %v843
    %v867 = vsel %vm94, %v782, %v847
    %v868 = vsel %vm94, %v787, %v851
    %869 = vmatprep.subr.mxu0 0.0
    %870 = vmatpush1.msra.mxu0 %v541
    %871 = vmatprep.subr.mxu0 0.0
    %872 = vmatpush1.msra.mxu0 %v542
    %873 = vmatprep.subr.mxu0 0.0
    %874 = vmatpush1.msra.mxu0 %v543
    %875 = vmatprep.subr.mxu0 0.0
    %876 = vmatpush1.msra.mxu0 %v544
    %877 = vmatprep.subr.mxu0 0.0
    %878 = vmatpush1.msra.mxu0 0.0
    %879 = vmatprep.subr.mxu0 0.0
    %880 = vmatpush1.msra.mxu0 0.0
    %881 = vmatprep.subr.mxu0 0.0
    %882 = vmatpush1.msra.mxu0 0.0
    %883 = vmatprep.subr.mxu0 0.0
    %884 = vmatpush1.msra.mxu0 0.0
    %885 = vmatprep.subr.mxu0 0.0
    %886 = vmatpush1.msra.mxu0 0.0
    %887 = vmatprep.subr.mxu0 0.0
    %888 = vmatpush1.msra.mxu0 0.0
    %889 = vmatprep.subr.mxu0 0.0
    %890 = vmatpush1.msra.mxu0 0.0
    %891 = vmatprep.subr.mxu0 0.0
    %892 = vmatpush1.msra.mxu0 0.0
    %893 = vmatprep.subr.mxu0 0.0
    %894 = vmatpush1.msra.mxu0 0.0
    %895 = vmatprep.subr.mxu0 0.0
    %896 = vmatpush1.msra.mxu0 0.0
    %897 = vmatprep.subr.mxu0 0.0
    %898 = vmatpush1.msra.mxu0 0.0
    %899 = vmatprep.subr.mxu0 0.0
    %900 = vmatpush1.msra.mxu0 0.0
    %901 = vmatprep.subr.mxu0 0.0
    %902 = vmatpush1.msra.mxu0 0.0
    %903 = vmatprep.subr.mxu0 0.0
    %904 = vmatpush1.msra.mxu0 0.0
    %905 = vmatprep.subr.mxu0 0.0
    %906 = vmatpush1.msra.mxu0 0.0
    %907 = vmatprep.subr.mxu0 0.0
    %908 = vmatpush1.msra.mxu0 0.0
    %909 = vmatprep.subr.mxu0 0.0
    %910 = vmatpush1.msra.mxu0 0.0
    %911 = vmatprep.subr.mxu0 0.0
    %912 = vmatpush1.msra.mxu0 0.0
    %913 = vmatprep.subr.mxu0 0.0
    %914 = vmatpush1.msra.mxu0 0.0
    %915 = vmatprep.subr.mxu0 0.0
    %916 = vmatpush1.msra.mxu0 0.0
    %917 = vmatprep.subr.mxu0 0.0
    %918 = vmatpush1.msra.mxu0 0.0
    %919 = vmatprep.subr.mxu0 0.0
    %920 = vmatpush1.msra.mxu0 0.0
    %921 = vmatprep.subr.mxu0 0.0
    %922 = vmatpush1.msra.mxu0 0.0
    %923 = vmatprep.subr.mxu0 0.0
    %924 = vmatpush1.msra.mxu0 0.0
    %925 = vmatprep.subr.mxu0 0.0
    %926 = vmatpush1.msra.mxu0 0.0
    %927 = vmatprep.subr.mxu0 0.0
    %928 = vmatpush1.msra.mxu0 0.0
    %929 = vmatprep.subr.mxu0 0.0
    %930 = vmatpush1.msra.mxu0 0.0
    %931 = vmatprep.subr.mxu0 0.0
    %932 = vmatpush1.msra.mxu0 0.0
    %933 = vmatprep.mubr.f32.mxu0 0.0
    %934 = vmatmul.mubr.f32.gmra.mrb[0].mxu0 %v257
    %v935 = vpop.f32.mrb[0].mxu0
    %v936 = vadd.f32 %v853, %v935
    %v937 = vpop.f32.mrb[0].mxu0
    %938 = vmatprep.mubr.f32.mxu0 0.0
    %939 = vmatmul.mubr.f32.gmra.mrb[0].mxu0 %v260
    %v940 = vpop.f32.mrb[0].mxu0
    %v941 = vadd.f32 %v854, %v940
    %v942 = vpop.f32.mrb[0].mxu0
    %943 = vmatprep.mubr.f32.mxu0 0.0
    %944 = vmatmul.mubr.f32.gmra.mrb[0].mxu0 %v263
    %v945 = vpop.f32.mrb[0].mxu0
    %v946 = vadd.f32 %v855, %v945
    %v947 = vpop.f32.mrb[0].mxu0
    %948 = vmatprep.mubr.f32.mxu0 0.0
    %949 = vmatmul.mubr.f32.gmra.mrb[0].mxu0 %v266
    %v950 = vpop.f32.mrb[0].mxu0
    %v951 = vadd.f32 %v856, %v950
    %v952 = vpop.f32.mrb[0].mxu0
    %953 = vmatprep.mubr.f32.mxu0 0.0
    %954 = vmatmul.mubr.f32.gmra.mrb[0].mxu0 %v269
    %v955 = vpop.f32.mrb[0].mxu0
    %v956 = vadd.f32 %v857, %v955
    %v957 = vpop.f32.mrb[0].mxu0
    %958 = vmatprep.mubr.f32.mxu0 0.0
    %959 = vmatmul.mubr.f32.gmra.mrb[0].mxu0 %v272
    %v960 = vpop.f32.mrb[0].mxu0
    %v961 = vadd.f32 %v858, %v960
    %v962 = vpop.f32.mrb[0].mxu0
    %963 = vmatprep.mubr.f32.mxu0 0.0
    %964 = vmatmul.mubr.f32.gmra.mrb[0].mxu0 %v275
    %v965 = vpop.f32.mrb[0].mxu0
    %v966 = vadd.f32 %v859, %v965
    %v967 = vpop.f32.mrb[0].mxu0
    %968 = vmatprep.mubr.f32.mxu0 0.0
    %969 = vmatmul.mubr.f32.gmra.mrb[0].mxu0 %v278
    %v970 = vpop.f32.mrb[0].mxu0
    %v971 = vadd.f32 %v860, %v970
    %v972 = vpop.f32.mrb[0].mxu0
    %973 = vmatprep.mubr.f32.mxu0 0.0
    %974 = vmatmul.mubr.f32.gmra.mrb[0].mxu0 %v281
    %v975 = vpop.f32.mrb[0].mxu0
    %v976 = vadd.f32 %v861, %v975
    %v977 = vpop.f32.mrb[0].mxu0
    %978 = vmatprep.mubr.f32.mxu0 0.0
    %979 = vmatmul.mubr.f32.gmra.mrb[0].mxu0 %v284
    %v980 = vpop.f32.mrb[0].mxu0
    %v981 = vadd.f32 %v862, %v980
    %v982 = vpop.f32.mrb[0].mxu0
    %983 = vmatprep.mubr.f32.mxu0 0.0
    %984 = vmatmul.mubr.f32.gmra.mrb[0].mxu0 %v287
    %v985 = vpop.f32.mrb[0].mxu0
    %v986 = vadd.f32 %v863, %v985
    %v987 = vpop.f32.mrb[0].mxu0
    %988 = vmatprep.mubr.f32.mxu0 0.0
    %989 = vmatmul.mubr.f32.gmra.mrb[0].mxu0 %v290
    %v990 = vpop.f32.mrb[0].mxu0
    %v991 = vadd.f32 %v864, %v990
    %v992 = vpop.f32.mrb[0].mxu0
    %993 = vmatprep.mubr.f32.mxu0 0.0
    %994 = vmatmul.mubr.f32.gmra.mrb[0].mxu0 %v293
    %v995 = vpop.f32.mrb[0].mxu0
    %v996 = vadd.f32 %v865, %v995
    %v997 = vpop.f32.mrb[0].mxu0
    %998 = vmatprep.mubr.f32.mxu0 0.0
    %999 = vmatmul.mubr.f32.gmra.mrb[0].mxu0 %v296
    %v1000 = vpop.f32.mrb[0].mxu0
    %v1001 = vadd.f32 %v866, %v1000
    %v1002 = vpop.f32.mrb[0].mxu0
    %1003 = vmatprep.mubr.f32.mxu0 0.0
    %1004 = vmatmul.mubr.f32.gmra.mrb[0].mxu0 %v299
    %v1005 = vpop.f32.mrb[0].mxu0
    %v1006 = vadd.f32 %v867, %v1005
    %v1007 = vpop.f32.mrb[0].mxu0
    %1008 = vmatprep.mubr.f32.mxu0 0.0
    %1009 = vmatmul.mubr.f32.gmra.mrb[0].mxu0 %v302
    %v1010 = vpop.f32.mrb[0].mxu0
    %v1011 = vadd.f32 %v868, %v1010
    %v1012 = vpop.f32.mrb[0].mxu0
    %1013 = vdwg.mxu0
    %v1014 = vxor.u32 %v936, 2147483648
    %v1015 = vxor.u32 %v941, 2147483648
    %v1016 = vxor.u32 %v946, 2147483648
    %v1017 = vxor.u32 %v951, 2147483648
    %v1018 = vxor.u32 %v956, 2147483648
    %v1019 = vxor.u32 %v961, 2147483648
    %v1020 = vxor.u32 %v966, 2147483648
    %v1021 = vxor.u32 %v971, 2147483648
    %v1022 = vxor.u32 %v976, 2147483648
    %v1023 = vxor.u32 %v981, 2147483648
    %v1024 = vxor.u32 %v986, 2147483648
    %v1025 = vxor.u32 %v991, 2147483648
    %v1026 = vmul.f32 %v1014, 1.442695
    %v1027 = vpow.pop %v1026
    %v1028 = vmul.f32 %v1015, 1.442695
    %v1029 = vpow.pop %v1028
    %v1030 = vmul.f32 %v1016, 1.442695
    %v1031 = vpow.pop %v1030
    %v1032 = vmul.f32 %v1017, 1.442695
    %v1033 = vpow.pop %v1032
    %v1034 = vmul.f32 %v1018, 1.442695
    %v1035 = vpow.pop %v1034
    %v1036 = vmul.f32 %v1019, 1.442695
    %v1037 = vpow.pop %v1036
    %v1038 = vmul.f32 %v1020, 1.442695
    %v1039 = vpow.pop %v1038
    %v1040 = vmul.f32 %v1021, 1.442695
    %v1041 = vpow.pop %v1040
    %v1042 = vmul.f32 %v1022, 1.442695
    %v1043 = vpow.pop %v1042
    %v1044 = vmul.f32 %v1023, 1.442695
    %v1045 = vpow.pop %v1044
    %v1046 = vmul.f32 %v1024, 1.442695
    %v1047 = vpow.pop %v1046
    %v1048 = vmul.f32 %v1025, 1.442695
    %v1049 = vpow.pop %v1048
    %v1050 = vadd.f32 %v1027, 1.0
    %v1051 = vadd.f32 %v1029, 1.0
    %v1052 = vadd.f32 %v1031, 1.0
    %v1053 = vadd.f32 %v1033, 1.0
    %v1054 = vadd.f32 %v1035, 1.0
    %v1055 = vadd.f32 %v1037, 1.0
    %v1056 = vadd.f32 %v1039, 1.0
    %v1057 = vadd.f32 %v1041, 1.0
    %v1058 = vadd.f32 %v1043, 1.0
    %v1059 = vadd.f32 %v1045, 1.0
    %v1060 = vadd.f32 %v1047, 1.0
    %v1061 = vadd.f32 %v1049, 1.0
    %v1062 = vrcp.pop %v1050
    %v1063 = vmul.f32 1.0, %v1062
    %v1064 = vrcp.pop %v1051
    %v1065 = vmul.f32 1.0, %v1064
    %v1066 = vrcp.pop %v1052
    %v1067 = vmul.f32 1.0, %v1066
    %v1068 = vrcp.pop %v1053
    %v1069 = vmul.f32 1.0, %v1068
    %v1070 = vrcp.pop %v1054
    %v1071 = vmul.f32 1.0, %v1070
    %v1072 = vrcp.pop %v1055
    %v1073 = vmul.f32 1.0, %v1072
    %v1074 = vrcp.pop %v1056
    %v1075 = vmul.f32 1.0, %v1074
    %v1076 = vrcp.pop %v1057
    %v1077 = vmul.f32 1.0, %v1076
    %v1078 = vrcp.pop %v1058
    %v1079 = vmul.f32 1.0, %v1078
    %v1080 = vrcp.pop %v1059
    %v1081 = vmul.f32 1.0, %v1080
    %v1082 = vrcp.pop %v1060
    %v1083 = vmul.f32 1.0, %v1082
    %v1084 = vrcp.pop %v1061
    %v1085 = vmul.f32 1.0, %v1084
    %v1086 = vtanh.pop %v996
    %v1087 = vtanh.pop %v1001
    %v1088 = vtanh.pop %v1006
    %v1089 = vtanh.pop %v1011
    %v1090 = vmul.f32 %v1071, %v533
    %v1091 = vmul.f32 %v1073, %v534
    %v1092 = vmul.f32 %v1075, %v535
    %v1093 = vmul.f32 %v1077, %v536
    %v1094 = vmul.f32 %v1063, %v1086
    %v1095 = vmul.f32 %v1065, %v1087
    %v1096 = vmul.f32 %v1067, %v1088
    %v1097 = vmul.f32 %v1069, %v1089
    %v1098 = vadd.f32 %v1090, %v1094
    %v1099 = vadd.f32 %v1091, %v1095
    %v1100 = vadd.f32 %v1092, %v1096
    %v1101 = vadd.f32 %v1093, %v1097
    %v1102 = vtanh.pop %v1098
    %v1103 = vtanh.pop %v1099
    %v1104 = vtanh.pop %v1100
    %v1105 = vtanh.pop %v1101
    %v1106 = vmul.f32 %v1079, %v1102
    %v1107 = vmul.f32 %v1081, %v1103
    %v1108 = vmul.f32 %v1083, %v1104
    %v1109 = vmul.f32 %v1085, %v1105
    %1110 = vmatprep.subr.mxu0 0.0
    %1111 = vmatpush1.msra.mxu0 %v1106
    %1112 = vmatprep.subr.mxu0 0.0
    %1113 = vmatpush1.msra.mxu0 %v1107
    %1114 = vmatprep.subr.mxu0 0.0
    %1115 = vmatpush1.msra.mxu0 %v1108
    %1116 = vmatprep.subr.mxu0 0.0
    %1117 = vmatpush1.msra.mxu0 %v1109
    %1118 = vmatprep.subr.mxu0 0.0
    %1119 = vmatpush1.msra.mxu0 0.0
    %1120 = vmatprep.subr.mxu0 0.0
    %1121 = vmatpush1.msra.mxu0 0.0
    %1122 = vmatprep.subr.mxu0 0.0
    %1123 = vmatpush1.msra.mxu0 0.0
    %1124 = vmatprep.subr.mxu0 0.0
    %1125 = vmatpush1.msra.mxu0 0.0
    %1126 = vmatprep.subr.mxu0 0.0
    %1127 = vmatpush1.msra.mxu0 0.0
    %1128 = vmatprep.subr.mxu0 0.0
    %1129 = vmatpush1.msra.mxu0 0.0
    %1130 = vmatprep.subr.mxu0 0.0
    %1131 = vmatpush1.msra.mxu0 0.0
    %1132 = vmatprep.subr.mxu0 0.0
    %1133 = vmatpush1.msra.mxu0 0.0
    %1134 = vmatprep.subr.mxu0 0.0
    %1135 = vmatpush1.msra.mxu0 0.0
    %1136 = vmatprep.subr.mxu0 0.0
    %1137 = vmatpush1.msra.mxu0 0.0
    %1138 = vmatprep.subr.mxu0 0.0
    %1139 = vmatpush1.msra.mxu0 0.0
    %1140 = vmatprep.subr.mxu0 0.0
    %1141 = vmatpush1.msra.mxu0 0.0
    %1142 = vmatprep.subr.mxu0 0.0
    %1143 = vmatpush1.msra.mxu0 0.0
    %1144 = vmatprep.subr.mxu0 0.0
    %1145 = vmatpush1.msra.mxu0 0.0
    %1146 = vmatprep.subr.mxu0 0.0
    %1147 = vmatpush1.msra.mxu0 0.0
    %1148 = vmatprep.subr.mxu0 0.0
    %1149 = vmatpush1.msra.mxu0 0.0
    %1150 = vmatprep.subr.mxu0 0.0
    %1151 = vmatpush1.msra.mxu0 0.0
    %1152 = vmatprep.subr.mxu0 0.0
    %1153 = vmatpush1.msra.mxu0 0.0
    %1154 = vmatprep.subr.mxu0 0.0
    %1155 = vmatpush1.msra.mxu0 0.0
    %1156 = vmatprep.subr.mxu0 0.0
    %1157 = vmatpush1.msra.mxu0 0.0
    %1158 = vmatprep.subr.mxu0 0.0
    %1159 = vmatpush1.msra.mxu0 0.0
    %1160 = vmatprep.subr.mxu0 0.0
    %1161 = vmatpush1.msra.mxu0 0.0
    %1162 = vmatprep.subr.mxu0 0.0
    %1163 = vmatpush1.msra.mxu0 0.0
    %1164 = vmatprep.subr.mxu0 0.0
    %1165 = vmatpush1.msra.mxu0 0.0
    %1166 = vmatprep.subr.mxu0 0.0
    %1167 = vmatpush1.msra.mxu0 0.0
    %1168 = vmatprep.subr.mxu0 0.0
    %1169 = vmatpush1.msra.mxu0 0.0
    %1170 = vmatprep.subr.mxu0 0.0
    %1171 = vmatpush1.msra.mxu0 0.0
    %1172 = vmatprep.subr.mxu0 0.0
    %1173 = vmatpush1.msra.mxu0 0.0
    %1174 = vmatprep.mubr.f32.mxu0 0.0
    %1175 = vmatmul.mubr.f32.gmra.mrb[0].mxu0 %v546
    %v1176 = vpop.f32.mrb[0].mxu0
    %v1177 = vadd.f32 0.0, %v1176
    %v1178 = vpop.f32.mrb[0].mxu0
    %1179 = vdwg.mxu0
    %v1180 = vld [vmem:[%s1 + $0x1] sm:$0x1]
    %v1181 = vadd.f32 %v1177, %v1180
    %v1182 = vadd.f32 %v1177, %v70
    %v1183 = vadd.f32 %v647, %v1181
    %v1184 = vsel %vm73, %v1183, -inf
    %v1185 = vsel %vm623, %v1184, -inf
    %1186 = vmax.xlane.f32.xlu0 %v1185
    %v1187 = vpop.xlane.xlu0 %1186
    %v1188 = vsel %vm73, -inf, %v1183
    %v1189 = vsel %vm623, %v1188, -inf
    %1190 = vmax.xlane.f32.xlu0 %v1189
    %v1191 = vpop.xlane.xlu0 %1190
    %v1192 = vsel %vm73, %v1187, %v1191
    %v1193 = vsub.f32 %v1183, %v1192
    %v1194 = vmul.f32 %v1193, 1.442695
    %v1195 = vpow.pop %v1194
    %v1196 = vsel %vm73, %v1195, 0.0
    %v1197 = vsel %vm623, %v1196, 0.0
    %1198 = vadd.xlane.f32.xlu0 %v1197
    %v1199 = vpop.xlane.xlu0 %1198
    %v1200 = vsel %vm73, 0.0, %v1195
    %v1201 = vsel %vm623, %v1200, 0.0
    %1202 = vadd.xlane.f32.xlu0 %v1201
    %v1203 = vpop.xlane.xlu0 %1202
    %v1204 = vsel %vm73, %v1199, %v1203
    %v1205 = vlog2.pop %v1204
    %v1206 = vmul.f32 %v1205, 0.6931472
    %v1207 = vadd.f32 %v1192, %v1206
    %v1208 = vsub.f32 %v1183, %v1207
    %v1209 = vmul.f32 %v1208, 1.442695
    %v1210 = vpow.pop %v1209
    %v1213 = vunpack.c.l.s4 1966171168
    %v1214 = vunpack.c.0.s8 %v1213
    %v1215 = vlaneseq
    %v1216 = vshrl.u32 %v1215, 7
    %v1217 = vsub.s32 %v1214, %v1216
    %v1218 = vrot.slane %v1182, %v1217
    %v1219 = vcombine.high %v1218, %v1218
    %v1221 = vunpack.c.l.s4 1966171168
    %v1222 = vunpack.c.0.s8 %v1221
    %v1223 = vlaneseq
    %v1224 = vshrl.u32 %v1223, 7
    %v1225 = vsub.s32 %v1222, %v1224
    %v1226 = vrot.slane %v1219, %v1225
    %v1228 = vmul.f32 %v1210, %v1226
    %v1229 = vsel %vm73, %v1228, 0.0
    %v1230 = vsel %vm623, %v1229, 0.0
    %1231 = vadd.xlane.f32.xlu0 %v1230
    %v1232 = vpop.xlane.xlu0 %1231
    %v1233 = vsel %vm73, 0.0, %v1228
    %v1234 = vsel %vm623, %v1233, 0.0
    %1235 = vadd.xlane.f32.xlu0 %v1234
    %v1236 = vpop.xlane.xlu0 %1235
    %v1237 = vlaneseq
    %v1238 = vshrl.u32 %v1237, 7
    %v1239 = vsub.s32 0, %v1238
    %v1240 = vrot.slane %v1232, %v1239
    %v1241 = vlaneseq
    %v1242 = vshrl.u32 %v1241, 7
    %v1243 = vsub.s32 0, %v1242
    %v1244 = vrot.slane %v1236, %v1243
    %v1245 = vsel %vm76, %v1240, %v1244
    %vm1246 = vcmp.eq.s32.totalorder %v72, 1
    %v1247 = vsel %vm1246, 1, 0
    %vm1248 = vcmp.eq.s32.totalorder %v1247, 1
    %v1249 = vsel %vm1248, %v1245, %v688
    %vm1250 = vcmp.ge.f32.partialorder %v1182, 0.0
    %v1251 = vmul.f32 %v1182, 0.01
    %v1252 = vsel %vm1250, %v1182, %v1251
    %1253 = vst [vmem:[#allocation5] sm:$0x2] %v1252
    %v1254 = vld [vmem:[%s0] sm:$0xff]
    %v1255 = vld [vmem:[%s0 + $0x8] sm:$0xff]
    %v1256 = vld [vmem:[%s0 + $0x10] sm:$0xff]
    %v1257 = vld [vmem:[%s0 + $0x18] sm:$0xff]
    %v1258 = vld [vmem:[%s0 + $0x20] sm:$0xff]
    %v1259 = vld [vmem:[%s0 + $0x28] sm:$0xff]
    %v1260 = vld [vmem:[%s0 + $0x30] sm:$0xff]
    %v1261 = vld [vmem:[%s0 + $0x38] sm:$0xff]
    %v1262 = vld [vmem:[%s0 + $0x40] sm:$0xff]
    %v1263 = vld [vmem:[%s0 + $0x48] sm:$0xff]
    %v1264 = vld [vmem:[%s0 + $0x50] sm:$0xff]
    %v1265 = vld [vmem:[%s0 + $0x58] sm:$0xff]
    %v1266 = vld [vmem:[%s0 + $0x60] sm:$0xff]
    %v1267 = vld [vmem:[%s0 + $0x68] sm:$0xff]
    %v1268 = vld [vmem:[%s0 + $0x70] sm:$0xff]
    %v1269 = vld [vmem:[%s0 + $0x78] sm:$0xff]
    %1271 = vset.pattern.permute.xlu0 4
    %1272 = vperm.xlu0 %1271, %v1254
    %v1273 = vpop.permute.xlu0 %1272
    %1276 = vset.pattern.permute.xlu0 4
    %1277 = vperm.xlu0 %1276, %v1255
    %v1278 = vpop.permute.xlu0 %1277
    %1281 = vset.pattern.permute.xlu0 4
    %1282 = vperm.xlu0 %1281, %v1256
    %v1283 = vpop.permute.xlu0 %1282
    %1286 = vset.pattern.permute.xlu0 4
    %1287 = vperm.xlu0 %1286, %v1257
    %v1288 = vpop.permute.xlu0 %1287
    %1291 = vset.pattern.permute.xlu0 4
    %1292 = vperm.xlu0 %1291, %v1258
    %v1293 = vpop.permute.xlu0 %1292
    %1296 = vset.pattern.permute.xlu0 4
    %1297 = vperm.xlu0 %1296, %v1259
    %v1298 = vpop.permute.xlu0 %1297
    %1301 = vset.pattern.permute.xlu0 4
    %1302 = vperm.xlu0 %1301, %v1260
    %v1303 = vpop.permute.xlu0 %1302
    %1306 = vset.pattern.permute.xlu0 4
    %1307 = vperm.xlu0 %1306, %v1261
    %v1308 = vpop.permute.xlu0 %1307
    %1311 = vset.pattern.permute.xlu0 4
    %1312 = vperm.xlu0 %1311, %v1262
    %v1313 = vpop.permute.xlu0 %1312
    %1316 = vset.pattern.permute.xlu0 4
    %1317 = vperm.xlu0 %1316, %v1263
    %v1318 = vpop.permute.xlu0 %1317
    %1321 = vset.pattern.permute.xlu0 4
    %1322 = vperm.xlu0 %1321, %v1264
    %v1323 = vpop.permute.xlu0 %1322
    %1326 = vset.pattern.permute.xlu0 4
    %1327 = vperm.xlu0 %1326, %v1265
    %v1328 = vpop.permute.xlu0 %1327
    %1331 = vset.pattern.permute.xlu0 4
    %1332 = vperm.xlu0 %1331, %v1266
    %v1333 = vpop.permute.xlu0 %1332
    %1336 = vset.pattern.permute.xlu0 4
    %1337 = vperm.xlu0 %1336, %v1267
    %v1338 = vpop.permute.xlu0 %1337
    %1341 = vset.pattern.permute.xlu0 4
    %1342 = vperm.xlu0 %1341, %v1268
    %v1343 = vpop.permute.xlu0 %1342
    %1346 = vset.pattern.permute.xlu0 4
    %1347 = vperm.xlu0 %1346, %v1269
    %v1348 = vpop.permute.xlu0 %1347
    %1350 = vset.pattern.permute.xlu0 5
    %1351 = vperm.xlu0 %1350, %v1254
    %v1352 = vpop.permute.xlu0 %1351
    %1354 = vset.pattern.permute.xlu0 5
    %1355 = vperm.xlu0 %1354, %v1255
    %v1356 = vpop.permute.xlu0 %1355
    %1358 = vset.pattern.permute.xlu0 5
    %1359 = vperm.xlu0 %1358, %v1256
    %v1360 = vpop.permute.xlu0 %1359
    %1362 = vset.pattern.permute.xlu0 5
    %1363 = vperm.xlu0 %1362, %v1257
    %v1364 = vpop.permute.xlu0 %1363
    %1366 = vset.pattern.permute.xlu0 5
    %1367 = vperm.xlu0 %1366, %v1258
    %v1368 = vpop.permute.xlu0 %1367
    %1370 = vset.pattern.permute.xlu0 5
    %1371 = vperm.xlu0 %1370, %v1259
    %v1372 = vpop.permute.xlu0 %1371
    %1374 = vset.pattern.permute.xlu0 5
    %1375 = vperm.xlu0 %1374, %v1260
    %v1376 = vpop.permute.xlu0 %1375
    %1378 = vset.pattern.permute.xlu0 5
    %1379 = vperm.xlu0 %1378, %v1261
    %v1380 = vpop.permute.xlu0 %1379
    %1382 = vset.pattern.permute.xlu0 5
    %1383 = vperm.xlu0 %1382, %v1262
    %v1384 = vpop.permute.xlu0 %1383
    %1386 = vset.pattern.permute.xlu0 5
    %1387 = vperm.xlu0 %1386, %v1263
    %v1388 = vpop.permute.xlu0 %1387
    %1390 = vset.pattern.permute.xlu0 5
    %1391 = vperm.xlu0 %1390, %v1264
    %v1392 = vpop.permute.xlu0 %1391
    %1394 = vset.pattern.permute.xlu0 5
    %1395 = vperm.xlu0 %1394, %v1265
    %v1396 = vpop.permute.xlu0 %1395
    %1398 = vset.pattern.permute.xlu0 5
    %1399 = vperm.xlu0 %1398, %v1266
    %v1400 = vpop.permute.xlu0 %1399
    %1402 = vset.pattern.permute.xlu0 5
    %1403 = vperm.xlu0 %1402, %v1267
    %v1404 = vpop.permute.xlu0 %1403
    %1406 = vset.pattern.permute.xlu0 5
    %1407 = vperm.xlu0 %1406, %v1268
    %v1408 = vpop.permute.xlu0 %1407
    %1410 = vset.pattern.permute.xlu0 5
    %1411 = vperm.xlu0 %1410, %v1269
    %v1412 = vpop.permute.xlu0 %1411
    %v1414 = vsel %vm94, %v1273, %v1352
    %v1415 = vsel %vm94, %v1278, %v1356
    %v1416 = vsel %vm94, %v1283, %v1360
    %v1417 = vsel %vm94, %v1288, %v1364
    %v1418 = vsel %vm94, %v1293, %v1368
    %v1419 = vsel %vm94, %v1298, %v1372
    %v1420 = vsel %vm94, %v1303, %v1376
    %v1421 = vsel %vm94, %v1308, %v1380
    %v1422 = vsel %vm94, %v1313, %v1384
    %v1423 = vsel %vm94, %v1318, %v1388
    %v1424 = vsel %vm94, %v1323, %v1392
    %v1425 = vsel %vm94, %v1328, %v1396
    %v1426 = vsel %vm94, %v1333, %v1400
    %v1427 = vsel %vm94, %v1338, %v1404
    %v1428 = vsel %vm94, %v1343, %v1408
    %v1429 = vsel %vm94, %v1348, %v1412
    %1430 = vmatprep.subr.mxu0 0.0
    %1431 = vmatpush1.msra.mxu0 %v1106
    %1432 = vmatprep.subr.mxu0 0.0
    %1433 = vmatpush1.msra.mxu0 %v1107
    %1434 = vmatprep.subr.mxu0 0.0
    %1435 = vmatpush1.msra.mxu0 %v1108
    %1436 = vmatprep.subr.mxu0 0.0
    %1437 = vmatpush1.msra.mxu0 %v1109
    %1438 = vmatprep.subr.mxu0 0.0
    %1439 = vmatpush1.msra.mxu0 0.0
    %1440 = vmatprep.subr.mxu0 0.0
    %1441 = vmatpush1.msra.mxu0 0.0
    %1442 = vmatprep.subr.mxu0 0.0
    %1443 = vmatpush1.msra.mxu0 0.0
    %1444 = vmatprep.subr.mxu0 0.0
    %1445 = vmatpush1.msra.mxu0 0.0
    %1446 = vmatprep.subr.mxu0 0.0
    %1447 = vmatpush1.msra.mxu0 0.0
    %1448 = vmatprep.subr.mxu0 0.0
    %1449 = vmatpush1.msra.mxu0 0.0
    %1450 = vmatprep.subr.mxu0 0.0
    %1451 = vmatpush1.msra.mxu0 0.0
    %1452 = vmatprep.subr.mxu0 0.0
    %1453 = vmatpush1.msra.mxu0 0.0
    %1454 = vmatprep.subr.mxu0 0.0
    %1455 = vmatpush1.msra.mxu0 0.0
    %1456 = vmatprep.subr.mxu0 0.0
    %1457 = vmatpush1.msra.mxu0 0.0
    %1458 = vmatprep.subr.mxu0 0.0
    %1459 = vmatpush1.msra.mxu0 0.0
    %1460 = vmatprep.subr.mxu0 0.0
    %1461 = vmatpush1.msra.mxu0 0.0
    %1462 = vmatprep.subr.mxu0 0.0
    %1463 = vmatpush1.msra.mxu0 0.0
    %1464 = vmatprep.subr.mxu0 0.0
    %1465 = vmatpush1.msra.mxu0 0.0
    %1466 = vmatprep.subr.mxu0 0.0
    %1467 = vmatpush1.msra.mxu0 0.0
    %1468 = vmatprep.subr.mxu0 0.0
    %1469 = vmatpush1.msra.mxu0 0.0
    %1470 = vmatprep.subr.mxu0 0.0
    %1471 = vmatpush1.msra.mxu0 0.0
    %1472 = vmatprep.subr.mxu0 0.0
    %1473 = vmatpush1.msra.mxu0 0.0
    %1474 = vmatprep.subr.mxu0 0.0
    %1475 = vmatpush1.msra.mxu0 0.0
    %1476 = vmatprep.subr.mxu0 0.0
    %1477 = vmatpush1.msra.mxu0 0.0
    %1478 = vmatprep.subr.mxu0 0.0
    %1479 = vmatpush1.msra.mxu0 0.0
    %1480 = vmatprep.subr.mxu0 0.0
    %1481 = vmatpush1.msra.mxu0 0.0
    %1482 = vmatprep.subr.mxu0 0.0
    %1483 = vmatpush1.msra.mxu0 0.0
    %1484 = vmatprep.subr.mxu0 0.0
    %1485 = vmatpush1.msra.mxu0 0.0
    %1486 = vmatprep.subr.mxu0 0.0
    %1487 = vmatpush1.msra.mxu0 0.0
    %1488 = vmatprep.subr.mxu0 0.0
    %1489 = vmatpush1.msra.mxu0 0.0
    %1490 = vmatprep.subr.mxu0 0.0
    %1491 = vmatpush1.msra.mxu0 0.0
    %1492 = vmatprep.subr.mxu0 0.0
    %1493 = vmatpush1.msra.mxu0 0.0
    %1494 = vmatprep.mubr.f32.mxu0 0.0
    %1495 = vmatmul.mubr.f32.gmra.mrb[0].mxu0 %v257
    %v1496 = vpop.f32.mrb[0].mxu0
    %v1497 = vadd.f32 %v1414, %v1496
    %v1498 = vpop.f32.mrb[0].mxu0
    %1499 = vmatprep.mubr.f32.mxu0 0.0
    %1500 = vmatmul.mubr.f32.gmra.mrb[0].mxu0 %v260
    %v1501 = vpop.f32.mrb[0].mxu0
    %v1502 = vadd.f32 %v1415, %v1501
    %v1503 = vpop.f32.mrb[0].mxu0
    %1504 = vmatprep.mubr.f32.mxu0 0.0
    %1505 = vmatmul.mubr.f32.gmra.mrb[0].mxu0 %v263
    %v1506 = vpop.f32.mrb[0].mxu0
    %v1507 = vadd.f32 %v1416, %v1506
    %v1508 = vpop.f32.mrb[0].mxu0
    %1509 = vmatprep.mubr.f32.mxu0 0.0
    %1510 = vmatmul.mubr.f32.gmra.mrb[0].mxu0 %v266
    %v1511 = vpop.f32.mrb[0].mxu0
    %v1512 = vadd.f32 %v1417, %v1511
    %v1513 = vpop.f32.mrb[0].mxu0
    %1514 = vmatprep.mubr.f32.mxu0 0.0
    %1515 = vmatmul.mubr.f32.gmra.mrb[0].mxu0 %v269
    %v1516 = vpop.f32.mrb[0].mxu0
    %v1517 = vadd.f32 %v1418, %v1516
    %v1518 = vpop.f32.mrb[0].mxu0
    %1519 = vmatprep.mubr.f32.mxu0 0.0
    %1520 = vmatmul.mubr.f32.gmra.mrb[0].mxu0 %v272
    %v1521 = vpop.f32.mrb[0].mxu0
    %v1522 = vadd.f32 %v1419, %v1521
    %v1523 = vpop.f32.mrb[0].mxu0
    %1524 = vmatprep.mubr.f32.mxu0 0.0
    %1525 = vmatmul.mubr.f32.gmra.mrb[0].mxu0 %v275
    %v1526 = vpop.f32.mrb[0].mxu0
    %v1527 = vadd.f32 %v1420, %v1526
    %v1528 = vpop.f32.mrb[0].mxu0
    %1529 = vmatprep.mubr.f32.mxu0 0.0
    %1530 = vmatmul.mubr.f32.gmra.mrb[0].mxu0 %v278
    %v1531 = vpop.f32.mrb[0].mxu0
    %v1532 = vadd.f32 %v1421, %v1531
    %v1533 = vpop.f32.mrb[0].mxu0
    %1534 = vmatprep.mubr.f32.mxu0 0.0
    %1535 = vmatmul.mubr.f32.gmra.mrb[0].mxu0 %v281
    %v1536 = vpop.f32.mrb[0].mxu0
    %v1537 = vadd.f32 %v1422, %v1536
    %v1538 = vpop.f32.mrb[0].mxu0
    %1539 = vmatprep.mubr.f32.mxu0 0.0
    %1540 = vmatmul.mubr.f32.gmra.mrb[0].mxu0 %v284
    %v1541 = vpop.f32.mrb[0].mxu0
    %v1542 = vadd.f32 %v1423, %v1541
    %v1543 = vpop.f32.mrb[0].mxu0
    %1544 = vmatprep.mubr.f32.mxu0 0.0
    %1545 = vmatmul.mubr.f32.gmra.mrb[0].mxu0 %v287
    %v1546 = vpop.f32.mrb[0].mxu0
    %v1547 = vadd.f32 %v1424, %v1546
    %v1548 = vpop.f32.mrb[0].mxu0
    %1549 = vmatprep.mubr.f32.mxu0 0.0
    %1550 = vmatmul.mubr.f32.gmra.mrb[0].mxu0 %v290
    %v1551 = vpop.f32.mrb[0].mxu0
    %v1552 = vadd.f32 %v1425, %v1551
    %v1553 = vpop.f32.mrb[0].mxu0
    %1554 = vmatprep.mubr.f32.mxu0 0.0
    %1555 = vmatmul.mubr.f32.gmra.mrb[0].mxu0 %v293
    %v1556 = vpop.f32.mrb[0].mxu0
    %v1557 = vadd.f32 %v1426, %v1556
    %v1558 = vpop.f32.mrb[0].mxu0
    %1559 = vmatprep.mubr.f32.mxu0 0.0
    %1560 = vmatmul.mubr.f32.gmra.mrb[0].mxu0 %v296
    %v1561 = vpop.f32.mrb[0].mxu0
    %v1562 = vadd.f32 %v1427, %v1561
    %v1563 = vpop.f32.mrb[0].mxu0
    %1564 = vmatprep.mubr.f32.mxu0 0.0
    %1565 = vmatmul.mubr.f32.gmra.mrb[0].mxu0 %v299
    %v1566 = vpop.f32.mrb[0].mxu0
    %v1567 = vadd.f32 %v1428, %v1566
    %v1568 = vpop.f32.mrb[0].mxu0
    %1569 = vmatprep.mubr.f32.mxu0 0.0
    %1570 = vmatmul.mubr.f32.gmra.mrb[0].mxu0 %v302
    %v1571 = vpop.f32.mrb[0].mxu0
    %v1572 = vadd.f32 %v1429, %v1571
    %v1573 = vpop.f32.mrb[0].mxu0
    %1574 = vdwg.mxu0
    %v1575 = vxor.u32 %v1497, 2147483648
    %v1576 = vxor.u32 %v1502, 2147483648
    %v1577 = vxor.u32 %v1507, 2147483648
    %v1578 = vxor.u32 %v1512, 2147483648
    %v1579 = vxor.u32 %v1517, 2147483648
    %v1580 = vxor.u32 %v1522, 2147483648
    %v1581 = vxor.u32 %v1527, 2147483648
    %v1582 = vxor.u32 %v1532, 2147483648
    %v1583 = vxor.u32 %v1537, 2147483648
    %v1584 = vxor.u32 %v1542, 2147483648
    %v1585 = vxor.u32 %v1547, 2147483648
    %v1586 = vxor.u32 %v1552, 2147483648
    %v1587 = vmul.f32 %v1575, 1.442695
    %v1588 = vpow.pop %v1587
    %v1589 = vmul.f32 %v1576, 1.442695
    %v1590 = vpow.pop %v1589
    %v1591 = vmul.f32 %v1577, 1.442695
    %v1592 = vpow.pop %v1591
    %v1593 = vmul.f32 %v1578, 1.442695
    %v1594 = vpow.pop %v1593
    %v1595 = vmul.f32 %v1579, 1.442695
    %v1596 = vpow.pop %v1595
    %v1597 = vmul.f32 %v1580, 1.442695
    %v1598 = vpow.pop %v1597
    %v1599 = vmul.f32 %v1581, 1.442695
    %v1600 = vpow.pop %v1599
    %v1601 = vmul.f32 %v1582, 1.442695
    %v1602 = vpow.pop %v1601
    %v1603 = vmul.f32 %v1583, 1.442695
    %v1604 = vpow.pop %v1603
    %v1605 = vmul.f32 %v1584, 1.442695
    %v1606 = vpow.pop %v1605
    %v1607 = vmul.f32 %v1585, 1.442695
    %v1608 = vpow.pop %v1607
    %v1609 = vmul.f32 %v1586, 1.442695
    %v1610 = vpow.pop %v1609
    %v1611 = vadd.f32 %v1588, 1.0
    %v1612 = vadd.f32 %v1590, 1.0
    %v1613 = vadd.f32 %v1592, 1.0
    %v1614 = vadd.f32 %v1594, 1.0
    %v1615 = vadd.f32 %v1596, 1.0
    %v1616 = vadd.f32 %v1598, 1.0
    %v1617 = vadd.f32 %v1600, 1.0
    %v1618 = vadd.f32 %v1602, 1.0
    %v1619 = vadd.f32 %v1604, 1.0
    %v1620 = vadd.f32 %v1606, 1.0
    %v1621 = vadd.f32 %v1608, 1.0
    %v1622 = vadd.f32 %v1610, 1.0
    %v1623 = vrcp.pop %v1611
    %v1624 = vmul.f32 1.0, %v1623
    %v1625 = vrcp.pop %v1612
    %v1626 = vmul.f32 1.0, %v1625
    %v1627 = vrcp.pop %v1613
    %v1628 = vmul.f32 1.0, %v1627
    %v1629 = vrcp.pop %v1614
    %v1630 = vmul.f32 1.0, %v1629
    %v1631 = vrcp.pop %v1615
    %v1632 = vmul.f32 1.0, %v1631
    %v1633 = vrcp.pop %v1616
    %v1634 = vmul.f32 1.0, %v1633
    %v1635 = vrcp.pop %v1617
    %v1636 = vmul.f32 1.0, %v1635
    %v1637 = vrcp.pop %v1618
    %v1638 = vmul.f32 1.0, %v1637
    %v1639 = vrcp.pop %v1619
    %v1640 = vmul.f32 1.0, %v1639
    %v1641 = vrcp.pop %v1620
    %v1642 = vmul.f32 1.0, %v1641
    %v1643 = vrcp.pop %v1621
    %v1644 = vmul.f32 1.0, %v1643
    %v1645 = vrcp.pop %v1622
    %v1646 = vmul.f32 1.0, %v1645
    %v1647 = vtanh.pop %v1557
    %v1648 = vtanh.pop %v1562
    %v1649 = vtanh.pop %v1567
    %v1650 = vtanh.pop %v1572
    %v1651 = vmul.f32 %v1632, %v1098
    %v1652 = vmul.f32 %v1634, %v1099
    %v1653 = vmul.f32 %v1636, %v1100
    %v1654 = vmul.f32 %v1638, %v1101
    %v1655 = vmul.f32 %v1624, %v1647
    %v1656 = vmul.f32 %v1626, %v1648
    %v1657 = vmul.f32 %v1628, %v1649
    %v1658 = vmul.f32 %v1630, %v1650
    %v1659 = vadd.f32 %v1651, %v1655
    %v1660 = vadd.f32 %v1652, %v1656
    %v1661 = vadd.f32 %v1653, %v1657
    %v1662 = vadd.f32 %v1654, %v1658
    %v1663 = vtanh.pop %v1659
    %v1664 = vtanh.pop %v1660
    %v1665 = vtanh.pop %v1661
    %v1666 = vtanh.pop %v1662
    %v1667 = vmul.f32 %v1640, %v1663
    %v1668 = vmul.f32 %v1642, %v1664
    %v1669 = vmul.f32 %v1644, %v1665
    %v1670 = vmul.f32 %v1646, %v1666
    %1671 = vmatprep.subr.mxu0 0.0
    %1672 = vmatpush1.msra.mxu0 %v1667
    %1673 = vmatprep.subr.mxu0 0.0
    %1674 = vmatpush1.msra.mxu0 %v1668
    %1675 = vmatprep.subr.mxu0 0.0
    %1676 = vmatpush1.msra.mxu0 %v1669
    %1677 = vmatprep.subr.mxu0 0.0
    %1678 = vmatpush1.msra.mxu0 %v1670
    %1679 = vmatprep.subr.mxu0 0.0
    %1680 = vmatpush1.msra.mxu0 0.0
    %1681 = vmatprep.subr.mxu0 0.0
    %1682 = vmatpush1.msra.mxu0 0.0
    %1683 = vmatprep.subr.mxu0 0.0
    %1684 = vmatpush1.msra.mxu0 0.0
    %1685 = vmatprep.subr.mxu0 0.0
    %1686 = vmatpush1.msra.mxu0 0.0
    %1687 = vmatprep.subr.mxu0 0.0
    %1688 = vmatpush1.msra.mxu0 0.0
    %1689 = vmatprep.subr.mxu0 0.0
    %1690 = vmatpush1.msra.mxu0 0.0
    %1691 = vmatprep.subr.mxu0 0.0
    %1692 = vmatpush1.msra.mxu0 0.0
    %1693 = vmatprep.subr.mxu0 0.0
    %1694 = vmatpush1.msra.mxu0 0.0
    %1695 = vmatprep.subr.mxu0 0.0
    %1696 = vmatpush1.msra.mxu0 0.0
    %1697 = vmatprep.subr.mxu0 0.0
    %1698 = vmatpush1.msra.mxu0 0.0
    %1699 = vmatprep.subr.mxu0 0.0
    %1700 = vmatpush1.msra.mxu0 0.0
    %1701 = vmatprep.subr.mxu0 0.0
    %1702 = vmatpush1.msra.mxu0 0.0
    %1703 = vmatprep.subr.mxu0 0.0
    %1704 = vmatpush1.msra.mxu0 0.0
    %1705 = vmatprep.subr.mxu0 0.0
    %1706 = vmatpush1.msra.mxu0 0.0
    %1707 = vmatprep.subr.mxu0 0.0
    %1708 = vmatpush1.msra.mxu0 0.0
    %1709 = vmatprep.subr.mxu0 0.0
    %1710 = vmatpush1.msra.mxu0 0.0
    %1711 = vmatprep.subr.mxu0 0.0
    %1712 = vmatpush1.msra.mxu0 0.0
    %1713 = vmatprep.subr.mxu0 0.0
    %1714 = vmatpush1.msra.mxu0 0.0
    %1715 = vmatprep.subr.mxu0 0.0
    %1716 = vmatpush1.msra.mxu0 0.0
    %1717 = vmatprep.subr.mxu0 0.0
    %1718 = vmatpush1.msra.mxu0 0.0
    %1719 = vmatprep.subr.mxu0 0.0
    %1720 = vmatpush1.msra.mxu0 0.0
    %1721 = vmatprep.subr.mxu0 0.0
    %1722 = vmatpush1.msra.mxu0 0.0
    %1723 = vmatprep.subr.mxu0 0.0
    %1724 = vmatpush1.msra.mxu0 0.0
    %1725 = vmatprep.subr.mxu0 0.0
    %1726 = vmatpush1.msra.mxu0 0.0
    %1727 = vmatprep.subr.mxu0 0.0
    %1728 = vmatpush1.msra.mxu0 0.0
    %1729 = vmatprep.subr.mxu0 0.0
    %1730 = vmatpush1.msra.mxu0 0.0
    %1731 = vmatprep.subr.mxu0 0.0
    %1732 = vmatpush1.msra.mxu0 0.0
    %1733 = vmatprep.subr.mxu0 0.0
    %1734 = vmatpush1.msra.mxu0 0.0
    %1735 = vmatprep.mubr.f32.mxu0 0.0
    %1736 = vmatmul.mubr.f32.gmra.mrb[0].mxu0 %v546
    %v1737 = vpop.f32.mrb[0].mxu0
    %v1738 = vadd.f32 0.0, %v1737
    %v1739 = vpop.f32.mrb[0].mxu0
    %1740 = vdwg.mxu0
    %v1741 = vld [vmem:[%s1 + $0x2] sm:$0x1]
    %v1742 = vadd.f32 %v1738, %v1741
    %v1743 = vadd.f32 %v1738, %v70
    %v1744 = vadd.f32 %v1208, %v1742
    %v1745 = vsel %vm73, %v1744, -inf
    %v1746 = vsel %vm623, %v1745, -inf
    %1747 = vmax.xlane.f32.xlu0 %v1746
    %v1748 = vpop.xlane.xlu0 %1747
    %v1749 = vsel %vm73, -inf, %v1744
    %v1750 = vsel %vm623, %v1749, -inf
    %1751 = vmax.xlane.f32.xlu0 %v1750
    %v1752 = vpop.xlane.xlu0 %1751
    %v1753 = vsel %vm73, %v1748, %v1752
    %v1754 = vsub.f32 %v1744, %v1753
    %v1755 = vmul.f32 %v1754, 1.442695
    %v1756 = vpow.pop %v1755
    %v1757 = vsel %vm73, %v1756, 0.0
    %v1758 = vsel %vm623, %v1757, 0.0
    %1759 = vadd.xlane.f32.xlu0 %v1758
    %v1760 = vpop.xlane.xlu0 %1759
    %v1761 = vsel %vm73, 0.0, %v1756
    %v1762 = vsel %vm623, %v1761, 0.0
    %1763 = vadd.xlane.f32.xlu0 %v1762
    %v1764 = vpop.xlane.xlu0 %1763
    %v1765 = vsel %vm73, %v1760, %v1764
    %v1766 = vlog2.pop %v1765
    %v1767 = vmul.f32 %v1766, 0.6931472
    %v1768 = vadd.f32 %v1753, %v1767
    %v1769 = vsub.f32 %v1744, %v1768
    %v1770 = vmul.f32 %v1769, 1.442695
    %v1771 = vpow.pop %v1770
    %v1774 = vunpack.c.l.s4 1966171168
    %v1775 = vunpack.c.0.s8 %v1774
    %v1776 = vlaneseq
    %v1777 = vshrl.u32 %v1776, 7
    %v1778 = vsub.s32 %v1775, %v1777
    %v1779 = vrot.slane %v1743, %v1778
    %v1780 = vcombine.high %v1779, %v1779
    %v1782 = vunpack.c.l.s4 1966171168
    %v1783 = vunpack.c.0.s8 %v1782
    %v1784 = vlaneseq
    %v1785 = vshrl.u32 %v1784, 7
    %v1786 = vsub.s32 %v1783, %v1785
    %v1787 = vrot.slane %v1780, %v1786
    %v1789 = vmul.f32 %v1771, %v1787
    %v1790 = vsel %vm73, %v1789, 0.0
    %v1791 = vsel %vm623, %v1790, 0.0
    %1792 = vadd.xlane.f32.xlu0 %v1791
    %v1793 = vpop.xlane.xlu0 %1792
    %v1794 = vsel %vm73, 0.0, %v1789
    %v1795 = vsel %vm623, %v1794, 0.0
    %1796 = vadd.xlane.f32.xlu0 %v1795
    %v1797 = vpop.xlane.xlu0 %1796
    %v1798 = vlaneseq
    %v1799 = vshrl.u32 %v1798, 7
    %v1800 = vsub.s32 0, %v1799
    %v1801 = vrot.slane %v1793, %v1800
    %v1802 = vlaneseq
    %v1803 = vshrl.u32 %v1802, 7
    %v1804 = vsub.s32 0, %v1803
    %v1805 = vrot.slane %v1797, %v1804
    %v1806 = vsel %vm76, %v1801, %v1805
    %vm1807 = vcmp.eq.s32.totalorder %v72, 2
    %v1808 = vsel %vm1807, 1, 0
    %vm1809 = vcmp.eq.s32.totalorder %v1808, 1
    %v1810 = vsel %vm1809, %v1806, %v1249
    %vm1811 = vcmp.ge.f32.partialorder %v1743, 0.0
    %v1812 = vmul.f32 %v1743, 0.01
    %v1813 = vsel %vm1811, %v1743, %v1812
    %1814 = vst [vmem:[#allocation5 + $0x1] sm:$0x2] %v1813
    %v1815 = vld [vmem:[%s0] sm:$0xff]
    %v1816 = vld [vmem:[%s0 + $0x8] sm:$0xff]
    %v1817 = vld [vmem:[%s0 + $0x10] sm:$0xff]
    %v1818 = vld [vmem:[%s0 + $0x18] sm:$0xff]
    %v1819 = vld [vmem:[%s0 + $0x20] sm:$0xff]
    %v1820 = vld [vmem:[%s0 + $0x28] sm:$0xff]
    %v1821 = vld [vmem:[%s0 + $0x30] sm:$0xff]
    %v1822 = vld [vmem:[%s0 + $0x38] sm:$0xff]
    %v1823 = vld [vmem:[%s0 + $0x40] sm:$0xff]
    %v1824 = vld [vmem:[%s0 + $0x48] sm:$0xff]
    %v1825 = vld [vmem:[%s0 + $0x50] sm:$0xff]
    %v1826 = vld [vmem:[%s0 + $0x58] sm:$0xff]
    %v1827 = vld [vmem:[%s0 + $0x60] sm:$0xff]
    %v1828 = vld [vmem:[%s0 + $0x68] sm:$0xff]
    %v1829 = vld [vmem:[%s0 + $0x70] sm:$0xff]
    %v1830 = vld [vmem:[%s0 + $0x78] sm:$0xff]
    %1832 = vset.pattern.permute.xlu0 6
    %1833 = vperm.xlu0 %1832, %v1815
    %v1834 = vpop.permute.xlu0 %1833
    %1837 = vset.pattern.permute.xlu0 6
    %1838 = vperm.xlu0 %1837, %v1816
    %v1839 = vpop.permute.xlu0 %1838
    %1842 = vset.pattern.permute.xlu0 6
    %1843 = vperm.xlu0 %1842, %v1817
    %v1844 = vpop.permute.xlu0 %1843
    %1847 = vset.pattern.permute.xlu0 6
    %1848 = vperm.xlu0 %1847, %v1818
    %v1849 = vpop.permute.xlu0 %1848
    %1852 = vset.pattern.permute.xlu0 6
    %1853 = vperm.xlu0 %1852, %v1819
    %v1854 = vpop.permute.xlu0 %1853
    %1857 = vset.pattern.permute.xlu0 6
    %1858 = vperm.xlu0 %1857, %v1820
    %v1859 = vpop.permute.xlu0 %1858
    %1862 = vset.pattern.permute.xlu0 6
    %1863 = vperm.xlu0 %1862, %v1821
    %v1864 = vpop.permute.xlu0 %1863
    %1867 = vset.pattern.permute.xlu0 6
    %1868 = vperm.xlu0 %1867, %v1822
    %v1869 = vpop.permute.xlu0 %1868
    %1872 = vset.pattern.permute.xlu0 6
    %1873 = vperm.xlu0 %1872, %v1823
    %v1874 = vpop.permute.xlu0 %1873
    %1877 = vset.pattern.permute.xlu0 6
    %1878 = vperm.xlu0 %1877, %v1824
    %v1879 = vpop.permute.xlu0 %1878
    %1882 = vset.pattern.permute.xlu0 6
    %1883 = vperm.xlu0 %1882, %v1825
    %v1884 = vpop.permute.xlu0 %1883
    %1887 = vset.pattern.permute.xlu0 6
    %1888 = vperm.xlu0 %1887, %v1826
    %v1889 = vpop.permute.xlu0 %1888
    %1892 = vset.pattern.permute.xlu0 6
    %1893 = vperm.xlu0 %1892, %v1827
    %v1894 = vpop.permute.xlu0 %1893
    %1897 = vset.pattern.permute.xlu0 6
    %1898 = vperm.xlu0 %1897, %v1828
    %v1899 = vpop.permute.xlu0 %1898
    %1902 = vset.pattern.permute.xlu0 6
    %1903 = vperm.xlu0 %1902, %v1829
    %v1904 = vpop.permute.xlu0 %1903
    %1907 = vset.pattern.permute.xlu0 6
    %1908 = vperm.xlu0 %1907, %v1830
    %v1909 = vpop.permute.xlu0 %1908
    %1911 = vset.pattern.permute.xlu0 7
    %1912 = vperm.xlu0 %1911, %v1815
    %v1913 = vpop.permute.xlu0 %1912
    %1915 = vset.pattern.permute.xlu0 7
    %1916 = vperm.xlu0 %1915, %v1816
    %v1917 = vpop.permute.xlu0 %1916
    %1919 = vset.pattern.permute.xlu0 7
    %1920 = vperm.xlu0 %1919, %v1817
    %v1921 = vpop.permute.xlu0 %1920
    %1923 = vset.pattern.permute.xlu0 7
    %1924 = vperm.xlu0 %1923, %v1818
    %v1925 = vpop.permute.xlu0 %1924
    %1927 = vset.pattern.permute.xlu0 7
    %1928 = vperm.xlu0 %1927, %v1819
    %v1929 = vpop.permute.xlu0 %1928
    %1931 = vset.pattern.permute.xlu0 7
    %1932 = vperm.xlu0 %1931, %v1820
    %v1933 = vpop.permute.xlu0 %1932
    %1935 = vset.pattern.permute.xlu0 7
    %1936 = vperm.xlu0 %1935, %v1821
    %v1937 = vpop.permute.xlu0 %1936
    %1939 = vset.pattern.permute.xlu0 7
    %1940 = vperm.xlu0 %1939, %v1822
    %v1941 = vpop.permute.xlu0 %1940
    %1943 = vset.pattern.permute.xlu0 7
    %1944 = vperm.xlu0 %1943, %v1823
    %v1945 = vpop.permute.xlu0 %1944
    %1947 = vset.pattern.permute.xlu0 7
    %1948 = vperm.xlu0 %1947, %v1824
    %v1949 = vpop.permute.xlu0 %1948
    %1951 = vset.pattern.permute.xlu0 7
    %1952 = vperm.xlu0 %1951, %v1825
    %v1953 = vpop.permute.xlu0 %1952
    %1955 = vset.pattern.permute.xlu0 7
    %1956 = vperm.xlu0 %1955, %v1826
    %v1957 = vpop.permute.xlu0 %1956
    %1959 = vset.pattern.permute.xlu0 7
    %1960 = vperm.xlu0 %1959, %v1827
    %v1961 = vpop.permute.xlu0 %1960
    %1963 = vset.pattern.permute.xlu0 7
    %1964 = vperm.xlu0 %1963, %v1828
    %v1965 = vpop.permute.xlu0 %1964
    %1967 = vset.pattern.permute.xlu0 7
    %1968 = vperm.xlu0 %1967, %v1829
    %v1969 = vpop.permute.xlu0 %1968
    %1971 = vset.pattern.permute.xlu0 7
    %1972 = vperm.xlu0 %1971, %v1830
    %v1973 = vpop.permute.xlu0 %1972
    %v1975 = vsel %vm94, %v1834, %v1913
    %v1976 = vsel %vm94, %v1839, %v1917
    %v1977 = vsel %vm94, %v1844, %v1921
    %v1978 = vsel %vm94, %v1849, %v1925
    %v1979 = vsel %vm94, %v1854, %v1929
    %v1980 = vsel %vm94, %v1859, %v1933
    %v1981 = vsel %vm94, %v1864, %v1937
    %v1982 = vsel %vm94, %v1869, %v1941
    %v1983 = vsel %vm94, %v1874, %v1945
    %v1984 = vsel %vm94, %v1879, %v1949
    %v1985 = vsel %vm94, %v1884, %v1953
    %v1986 = vsel %vm94, %v1889, %v1957
    %v1987 = vsel %vm94, %v1894, %v1961
    %v1988 = vsel %vm94, %v1899, %v1965
    %v1989 = vsel %vm94, %v1904, %v1969
    %v1990 = vsel %vm94, %v1909, %v1973
    %1991 = vmatprep.subr.mxu0 0.0
    %1992 = vmatpush1.msra.mxu0 %v1667
    %1993 = vmatprep.subr.mxu0 0.0
    %1994 = vmatpush1.msra.mxu0 %v1668
    %1995 = vmatprep.subr.mxu0 0.0
    %1996 = vmatpush1.msra.mxu0 %v1669
    %1997 = vmatprep.subr.mxu0 0.0
    %1998 = vmatpush1.msra.mxu0 %v1670
    %1999 = vmatprep.subr.mxu0 0.0
    %2000 = vmatpush1.msra.mxu0 0.0
    %2001 = vmatprep.subr.mxu0 0.0
    %2002 = vmatpush1.msra.mxu0 0.0
    %2003 = vmatprep.subr.mxu0 0.0
    %2004 = vmatpush1.msra.mxu0 0.0
    %2005 = vmatprep.subr.mxu0 0.0
    %2006 = vmatpush1.msra.mxu0 0.0
    %2007 = vmatprep.subr.mxu0 0.0
    %2008 = vmatpush1.msra.mxu0 0.0
    %2009 = vmatprep.subr.mxu0 0.0
    %2010 = vmatpush1.msra.mxu0 0.0
    %2011 = vmatprep.subr.mxu0 0.0
    %2012 = vmatpush1.msra.mxu0 0.0
    %2013 = vmatprep.subr.mxu0 0.0
    %2014 = vmatpush1.msra.mxu0 0.0
    %2015 = vmatprep.subr.mxu0 0.0
    %2016 = vmatpush1.msra.mxu0 0.0
    %2017 = vmatprep.subr.mxu0 0.0
    %2018 = vmatpush1.msra.mxu0 0.0
    %2019 = vmatprep.subr.mxu0 0.0
    %2020 = vmatpush1.msra.mxu0 0.0
    %2021 = vmatprep.subr.mxu0 0.0
    %2022 = vmatpush1.msra.mxu0 0.0
    %2023 = vmatprep.subr.mxu0 0.0
    %2024 = vmatpush1.msra.mxu0 0.0
    %2025 = vmatprep.subr.mxu0 0.0
    %2026 = vmatpush1.msra.mxu0 0.0
    %2027 = vmatprep.subr.mxu0 0.0
    %2028 = vmatpush1.msra.mxu0 0.0
    %2029 = vmatprep.subr.mxu0 0.0
    %2030 = vmatpush1.msra.mxu0 0.0
    %2031 = vmatprep.subr.mxu0 0.0
    %2032 = vmatpush1.msra.mxu0 0.0
    %2033 = vmatprep.subr.mxu0 0.0
    %2034 = vmatpush1.msra.mxu0 0.0
    %2035 = vmatprep.subr.mxu0 0.0
    %2036 = vmatpush1.msra.mxu0 0.0
    %2037 = vmatprep.subr.mxu0 0.0
    %2038 = vmatpush1.msra.mxu0 0.0
    %2039 = vmatprep.subr.mxu0 0.0
    %2040 = vmatpush1.msra.mxu0 0.0
    %2041 = vmatprep.subr.mxu0 0.0
    %2042 = vmatpush1.msra.mxu0 0.0
    %2043 = vmatprep.subr.mxu0 0.0
    %2044 = vmatpush1.msra.mxu0 0.0
    %2045 = vmatprep.subr.mxu0 0.0
    %2046 = vmatpush1.msra.mxu0 0.0
    %2047 = vmatprep.subr.mxu0 0.0
    %2048 = vmatpush1.msra.mxu0 0.0
    %2049 = vmatprep.subr.mxu0 0.0
    %2050 = vmatpush1.msra.mxu0 0.0
    %2051 = vmatprep.subr.mxu0 0.0
    %2052 = vmatpush1.msra.mxu0 0.0
    %2053 = vmatprep.subr.mxu0 0.0
    %2054 = vmatpush1.msra.mxu0 0.0
    %2055 = vmatprep.mubr.f32.mxu0 0.0
    %2056 = vmatmul.mubr.f32.gmra.mrb[0].mxu0 %v257
    %v2057 = vpop.f32.mrb[0].mxu0
    %v2058 = vadd.f32 %v1975, %v2057
    %v2059 = vpop.f32.mrb[0].mxu0
    %2060 = vmatprep.mubr.f32.mxu0 0.0
    %2061 = vmatmul.mubr.f32.gmra.mrb[0].mxu0 %v260
    %v2062 = vpop.f32.mrb[0].mxu0
    %v2063 = vadd.f32 %v1976, %v2062
    %v2064 = vpop.f32.mrb[0].mxu0
    %2065 = vmatprep.mubr.f32.mxu0 0.0
    %2066 = vmatmul.mubr.f32.gmra.mrb[0].mxu0 %v263
    %v2067 = vpop.f32.mrb[0].mxu0
    %v2068 = vadd.f32 %v1977, %v2067
    %v2069 = vpop.f32.mrb[0].mxu0
    %2070 = vmatprep.mubr.f32.mxu0 0.0
    %2071 = vmatmul.mubr.f32.gmra.mrb[0].mxu0 %v266
    %v2072 = vpop.f32.mrb[0].mxu0
    %v2073 = vadd.f32 %v1978, %v2072
    %v2074 = vpop.f32.mrb[0].mxu0
    %2075 = vmatprep.mubr.f32.mxu0 0.0
    %2076 = vmatmul.mubr.f32.gmra.mrb[0].mxu0 %v269
    %v2077 = vpop.f32.mrb[0].mxu0
    %v2078 = vadd.f32 %v1979, %v2077
    %v2079 = vpop.f32.mrb[0].mxu0
    %2080 = vmatprep.mubr.f32.mxu0 0.0
    %2081 = vmatmul.mubr.f32.gmra.mrb[0].mxu0 %v272
    %v2082 = vpop.f32.mrb[0].mxu0
    %v2083 = vadd.f32 %v1980, %v2082
    %v2084 = vpop.f32.mrb[0].mxu0
    %2085 = vmatprep.mubr.f32.mxu0 0.0
    %2086 = vmatmul.mubr.f32.gmra.mrb[0].mxu0 %v275
    %v2087 = vpop.f32.mrb[0].mxu0
    %v2088 = vadd.f32 %v1981, %v2087
    %v2089 = vpop.f32.mrb[0].mxu0
    %2090 = vmatprep.mubr.f32.mxu0 0.0
    %2091 = vmatmul.mubr.f32.gmra.mrb[0].mxu0 %v278
    %v2092 = vpop.f32.mrb[0].mxu0
    %v2093 = vadd.f32 %v1982, %v2092
    %v2094 = vpop.f32.mrb[0].mxu0
    %2095 = vmatprep.mubr.f32.mxu0 0.0
    %2096 = vmatmul.mubr.f32.gmra.mrb[0].mxu0 %v281
    %v2097 = vpop.f32.mrb[0].mxu0
    %v2098 = vadd.f32 %v1983, %v2097
    %v2099 = vpop.f32.mrb[0].mxu0
    %2100 = vmatprep.mubr.f32.mxu0 0.0
    %2101 = vmatmul.mubr.f32.gmra.mrb[0].mxu0 %v284
    %v2102 = vpop.f32.mrb[0].mxu0
    %v2103 = vadd.f32 %v1984, %v2102
    %v2104 = vpop.f32.mrb[0].mxu0
    %2105 = vmatprep.mubr.f32.mxu0 0.0
    %2106 = vmatmul.mubr.f32.gmra.mrb[0].mxu0 %v287
    %v2107 = vpop.f32.mrb[0].mxu0
    %v2108 = vadd.f32 %v1985, %v2107
    %v2109 = vpop.f32.mrb[0].mxu0
    %2110 = vmatprep.mubr.f32.mxu0 0.0
    %2111 = vmatmul.mubr.f32.gmra.mrb[0].mxu0 %v290
    %v2112 = vpop.f32.mrb[0].mxu0
    %v2113 = vadd.f32 %v1986, %v2112
    %v2114 = vpop.f32.mrb[0].mxu0
    %2115 = vmatprep.mubr.f32.mxu0 0.0
    %2116 = vmatmul.mubr.f32.gmra.mrb[0].mxu0 %v293
    %v2117 = vpop.f32.mrb[0].mxu0
    %v2118 = vadd.f32 %v1987, %v2117
    %v2119 = vpop.f32.mrb[0].mxu0
    %2120 = vmatprep.mubr.f32.mxu0 0.0
    %2121 = vmatmul.mubr.f32.gmra.mrb[0].mxu0 %v296
    %v2122 = vpop.f32.mrb[0].mxu0
    %v2123 = vadd.f32 %v1988, %v2122
    %v2124 = vpop.f32.mrb[0].mxu0
    %2125 = vmatprep.mubr.f32.mxu0 0.0
    %2126 = vmatmul.mubr.f32.gmra.mrb[0].mxu0 %v299
    %v2127 = vpop.f32.mrb[0].mxu0
    %v2128 = vadd.f32 %v1989, %v2127
    %v2129 = vpop.f32.mrb[0].mxu0
    %2130 = vmatprep.mubr.f32.mxu0 0.0
    %2131 = vmatmul.mubr.f32.gmra.mrb[0].mxu0 %v302
    %v2132 = vpop.f32.mrb[0].mxu0
    %v2133 = vadd.f32 %v1990, %v2132
    %v2134 = vpop.f32.mrb[0].mxu0
    %2135 = vdwg.mxu0
    %v2136 = vxor.u32 %v2058, 2147483648
    %v2137 = vxor.u32 %v2063, 2147483648
    %v2138 = vxor.u32 %v2068, 2147483648
    %v2139 = vxor.u32 %v2073, 2147483648
    %v2140 = vxor.u32 %v2078, 2147483648
    %v2141 = vxor.u32 %v2083, 2147483648
    %v2142 = vxor.u32 %v2088, 2147483648
    %v2143 = vxor.u32 %v2093, 2147483648
    %v2144 = vxor.u32 %v2098, 2147483648
    %v2145 = vxor.u32 %v2103, 2147483648
    %v2146 = vxor.u32 %v2108, 2147483648
    %v2147 = vxor.u32 %v2113, 2147483648
    %v2148 = vmul.f32 %v2136, 1.442695
    %v2149 = vpow.pop %v2148
    %v2150 = vmul.f32 %v2137, 1.442695
    %v2151 = vpow.pop %v2150
    %v2152 = vmul.f32 %v2138, 1.442695
    %v2153 = vpow.pop %v2152
    %v2154 = vmul.f32 %v2139, 1.442695
    %v2155 = vpow.pop %v2154
    %v2156 = vmul.f32 %v2140, 1.442695
    %v2157 = vpow.pop %v2156
    %v2158 = vmul.f32 %v2141, 1.442695
    %v2159 = vpow.pop %v2158
    %v2160 = vmul.f32 %v2142, 1.442695
    %v2161 = vpow.pop %v2160
    %v2162 = vmul.f32 %v2143, 1.442695
    %v2163 = vpow.pop %v2162
    %v2164 = vmul.f32 %v2144, 1.442695
    %v2165 = vpow.pop %v2164
    %v2166 = vmul.f32 %v2145, 1.442695
    %v2167 = vpow.pop %v2166
    %v2168 = vmul.f32 %v2146, 1.442695
    %v2169 = vpow.pop %v2168
    %v2170 = vmul.f32 %v2147, 1.442695
    %v2171 = vpow.pop %v2170
    %v2172 = vadd.f32 %v2149, 1.0
    %v2173 = vadd.f32 %v2151, 1.0
    %v2174 = vadd.f32 %v2153, 1.0
    %v2175 = vadd.f32 %v2155, 1.0
    %v2176 = vadd.f32 %v2157, 1.0
    %v2177 = vadd.f32 %v2159, 1.0
    %v2178 = vadd.f32 %v2161, 1.0
    %v2179 = vadd.f32 %v2163, 1.0
    %v2180 = vadd.f32 %v2165, 1.0
    %v2181 = vadd.f32 %v2167, 1.0
    %v2182 = vadd.f32 %v2169, 1.0
    %v2183 = vadd.f32 %v2171, 1.0
    %v2184 = vrcp.pop %v2172
    %v2185 = vmul.f32 1.0, %v2184
    %v2186 = vrcp.pop %v2173
    %v2187 = vmul.f32 1.0, %v2186
    %v2188 = vrcp.pop %v2174
    %v2189 = vmul.f32 1.0, %v2188
    %v2190 = vrcp.pop %v2175
    %v2191 = vmul.f32 1.0, %v2190
    %v2192 = vrcp.pop %v2176
    %v2193 = vmul.f32 1.0, %v2192
    %v2194 = vrcp.pop %v2177
    %v2195 = vmul.f32 1.0, %v2194
    %v2196 = vrcp.pop %v2178
    %v2197 = vmul.f32 1.0, %v2196
    %v2198 = vrcp.pop %v2179
    %v2199 = vmul.f32 1.0, %v2198
    %v2200 = vrcp.pop %v2180
    %v2201 = vmul.f32 1.0, %v2200
    %v2202 = vrcp.pop %v2181
    %v2203 = vmul.f32 1.0, %v2202
    %v2204 = vrcp.pop %v2182
    %v2205 = vmul.f32 1.0, %v2204
    %v2206 = vrcp.pop %v2183
    %v2207 = vmul.f32 1.0, %v2206
    %v2208 = vtanh.pop %v2118
    %v2209 = vtanh.pop %v2123
    %v2210 = vtanh.pop %v2128
    %v2211 = vtanh.pop %v2133
    %v2212 = vmul.f32 %v2193, %v1659
    %v2213 = vmul.f32 %v2195, %v1660
    %v2214 = vmul.f32 %v2197, %v1661
    %v2215 = vmul.f32 %v2199, %v1662
    %v2216 = vmul.f32 %v2185, %v2208
    %v2217 = vmul.f32 %v2187, %v2209
    %v2218 = vmul.f32 %v2189, %v2210
    %v2219 = vmul.f32 %v2191, %v2211
    %v2220 = vadd.f32 %v2212, %v2216
    %v2221 = vadd.f32 %v2213, %v2217
    %v2222 = vadd.f32 %v2214, %v2218
    %v2223 = vadd.f32 %v2215, %v2219
    %v2224 = vtanh.pop %v2220
    %v2225 = vtanh.pop %v2221
    %v2226 = vtanh.pop %v2222
    %v2227 = vtanh.pop %v2223
    %v2228 = vmul.f32 %v2201, %v2224
    %v2229 = vmul.f32 %v2203, %v2225
    %v2230 = vmul.f32 %v2205, %v2226
    %v2231 = vmul.f32 %v2207, %v2227
    %2232 = vmatprep.subr.mxu0 0.0
    %2233 = vmatpush1.msra.mxu0 %v2228
    %2234 = vmatprep.subr.mxu0 0.0
    %2235 = vmatpush1.msra.mxu0 %v2229
    %2236 = vmatprep.subr.mxu0 0.0
    %2237 = vmatpush1.msra.mxu0 %v2230
    %2238 = vmatprep.subr.mxu0 0.0
    %2239 = vmatpush1.msra.mxu0 %v2231
    %2240 = vmatprep.subr.mxu0 0.0
    %2241 = vmatpush1.msra.mxu0 0.0
    %2242 = vmatprep.subr.mxu0 0.0
    %2243 = vmatpush1.msra.mxu0 0.0
    %2244 = vmatprep.subr.mxu0 0.0
    %2245 = vmatpush1.msra.mxu0 0.0
    %2246 = vmatprep.subr.mxu0 0.0
    %2247 = vmatpush1.msra.mxu0 0.0
    %2248 = vmatprep.subr.mxu0 0.0
    %2249 = vmatpush1.msra.mxu0 0.0
    %2250 = vmatprep.subr.mxu0 0.0
    %2251 = vmatpush1.msra.mxu0 0.0
    %2252 = vmatprep.subr.mxu0 0.0
    %2253 = vmatpush1.msra.mxu0 0.0
    %2254 = vmatprep.subr.mxu0 0.0
    %2255 = vmatpush1.msra.mxu0 0.0
    %2256 = vmatprep.subr.mxu0 0.0
    %2257 = vmatpush1.msra.mxu0 0.0
    %2258 = vmatprep.subr.mxu0 0.0
    %2259 = vmatpush1.msra.mxu0 0.0
    %2260 = vmatprep.subr.mxu0 0.0
    %2261 = vmatpush1.msra.mxu0 0.0
    %2262 = vmatprep.subr.mxu0 0.0
    %2263 = vmatpush1.msra.mxu0 0.0
    %2264 = vmatprep.subr.mxu0 0.0
    %2265 = vmatpush1.msra.mxu0 0.0
    %2266 = vmatprep.subr.mxu0 0.0
    %2267 = vmatpush1.msra.mxu0 0.0
    %2268 = vmatprep.subr.mxu0 0.0
    %2269 = vmatpush1.msra.mxu0 0.0
    %2270 = vmatprep.subr.mxu0 0.0
    %2271 = vmatpush1.msra.mxu0 0.0
    %2272 = vmatprep.subr.mxu0 0.0
    %2273 = vmatpush1.msra.mxu0 0.0
    %2274 = vmatprep.subr.mxu0 0.0
    %2275 = vmatpush1.msra.mxu0 0.0
    %2276 = vmatprep.subr.mxu0 0.0
    %2277 = vmatpush1.msra.mxu0 0.0
    %2278 = vmatprep.subr.mxu0 0.0
    %2279 = vmatpush1.msra.mxu0 0.0
    %2280 = vmatprep.subr.mxu0 0.0
    %2281 = vmatpush1.msra.mxu0 0.0
    %2282 = vmatprep.subr.mxu0 0.0
    %2283 = vmatpush1.msra.mxu0 0.0
    %2284 = vmatprep.subr.mxu0 0.0
    %2285 = vmatpush1.msra.mxu0 0.0
    %2286 = vmatprep.subr.mxu0 0.0
    %2287 = vmatpush1.msra.mxu0 0.0
    %2288 = vmatprep.subr.mxu0 0.0
    %2289 = vmatpush1.msra.mxu0 0.0
    %2290 = vmatprep.subr.mxu0 0.0
    %2291 = vmatpush1.msra.mxu0 0.0
    %2292 = vmatprep.subr.mxu0 0.0
    %2293 = vmatpush1.msra.mxu0 0.0
    %2294 = vmatprep.subr.mxu0 0.0
    %2295 = vmatpush1.msra.mxu0 0.0
    %2296 = vmatprep.mubr.f32.mxu0 0.0
    %2297 = vmatmul.mubr.f32.gmra.mrb[0].mxu0 %v546
    %v2298 = vpop.f32.mrb[0].mxu0
    %v2299 = vadd.f32 0.0, %v2298
    %v2300 = vpop.f32.mrb[0].mxu0
    %2301 = vdwg.mxu0
    %v2302 = vld [vmem:[%s1 + $0x3] sm:$0x1]
    %v2303 = vadd.f32 %v2299, %v2302
    %v2304 = vadd.f32 %v2299, %v70
    %v2305 = vadd.f32 %v1769, %v2303
    %v2306 = vsel %vm73, %v2305, -inf
    %v2307 = vsel %vm623, %v2306, -inf
    %2308 = vmax.xlane.f32.xlu0 %v2307
    %v2309 = vpop.xlane.xlu0 %2308
    %v2310 = vsel %vm73, -inf, %v2305
    %v2311 = vsel %vm623, %v2310, -inf
    %2312 = vmax.xlane.f32.xlu0 %v2311
    %v2313 = vpop.xlane.xlu0 %2312
    %v2314 = vsel %vm73, %v2309, %v2313
    %v2315 = vsub.f32 %v2305, %v2314
    %v2316 = vmul.f32 %v2315, 1.442695
    %v2317 = vpow.pop %v2316
    %v2318 = vsel %vm73, %v2317, 0.0
    %v2319 = vsel %vm623, %v2318, 0.0
    %2320 = vadd.xlane.f32.xlu0 %v2319
    %v2321 = vpop.xlane.xlu0 %2320
    %v2322 = vsel %vm73, 0.0, %v2317
    %v2323 = vsel %vm623, %v2322, 0.0
    %2324 = vadd.xlane.f32.xlu0 %v2323
    %v2325 = vpop.xlane.xlu0 %2324
    %v2326 = vsel %vm73, %v2321, %v2325
    %v2327 = vlog2.pop %v2326
    %v2328 = vmul.f32 %v2327, 0.6931472
    %v2329 = vadd.f32 %v2314, %v2328
    %v2330 = vsub.f32 %v2305, %v2329
    %v2331 = vmul.f32 %v2330, 1.442695
    %v2332 = vpow.pop %v2331
    %v2335 = vunpack.c.l.s4 1966171168
    %v2336 = vunpack.c.0.s8 %v2335
    %v2337 = vlaneseq
    %v2338 = vshrl.u32 %v2337, 7
    %v2339 = vsub.s32 %v2336, %v2338
    %v2340 = vrot.slane %v2304, %v2339
    %v2341 = vcombine.high %v2340, %v2340
    %v2343 = vunpack.c.l.s4 1966171168
    %v2344 = vunpack.c.0.s8 %v2343
    %v2345 = vlaneseq
    %v2346 = vshrl.u32 %v2345, 7
    %v2347 = vsub.s32 %v2344, %v2346
    %v2348 = vrot.slane %v2341, %v2347
    %v2350 = vmul.f32 %v2332, %v2348
    %v2351 = vsel %vm73, %v2350, 0.0
    %v2352 = vsel %vm623, %v2351, 0.0
    %2353 = vadd.xlane.f32.xlu0 %v2352
    %v2354 = vpop.xlane.xlu0 %2353
    %v2355 = vsel %vm73, 0.0, %v2350
    %v2356 = vsel %vm623, %v2355, 0.0
    %2357 = vadd.xlane.f32.xlu0 %v2356
    %v2358 = vpop.xlane.xlu0 %2357
    %v2359 = vlaneseq
    %v2360 = vshrl.u32 %v2359, 7
    %v2361 = vsub.s32 0, %v2360
    %v2362 = vrot.slane %v2354, %v2361
    %v2363 = vlaneseq
    %v2364 = vshrl.u32 %v2363, 7
    %v2365 = vsub.s32 0, %v2364
    %v2366 = vrot.slane %v2358, %v2365
    %v2367 = vsel %vm76, %v2362, %v2366
    %vm2368 = vcmp.eq.s32.totalorder %v72, 3
    %v2369 = vsel %vm2368, 1, 0
    %vm2370 = vcmp.eq.s32.totalorder %v2369, 1
    %v2371 = vsel %vm2370, %v2367, %v1810
    %vm2372 = vcmp.ge.f32.partialorder %v2304, 0.0
    %v2373 = vmul.f32 %v2304, 0.01
    %v2374 = vsel %vm2372, %v2304, %v2373
    %2375 = vst [vmem:[#allocation5 + $0x2] sm:$0x2] %v2374
    %v2376 = vld [vmem:[%s0] sm:$0xff]
    %v2377 = vld [vmem:[%s0 + $0x8] sm:$0xff]
    %v2378 = vld [vmem:[%s0 + $0x10] sm:$0xff]
    %v2379 = vld [vmem:[%s0 + $0x18] sm:$0xff]
    %v2380 = vld [vmem:[%s0 + $0x20] sm:$0xff]
    %v2381 = vld [vmem:[%s0 + $0x28] sm:$0xff]
    %v2382 = vld [vmem:[%s0 + $0x30] sm:$0xff]
    %v2383 = vld [vmem:[%s0 + $0x38] sm:$0xff]
    %v2384 = vld [vmem:[%s0 + $0x40] sm:$0xff]
    %v2385 = vld [vmem:[%s0 + $0x48] sm:$0xff]
    %v2386 = vld [vmem:[%s0 + $0x50] sm:$0xff]
    %v2387 = vld [vmem:[%s0 + $0x58] sm:$0xff]
    %v2388 = vld [vmem:[%s0 + $0x60] sm:$0xff]
    %v2389 = vld [vmem:[%s0 + $0x68] sm:$0xff]
    %v2390 = vld [vmem:[%s0 + $0x70] sm:$0xff]
    %v2391 = vld [vmem:[%s0 + $0x78] sm:$0xff]
    %2393 = vset.pattern.permute.xlu0 8
    %2394 = vperm.xlu0 %2393, %v2376
    %v2395 = vpop.permute.xlu0 %2394
    %2398 = vset.pattern.permute.xlu0 8
    %2399 = vperm.xlu0 %2398, %v2377
    %v2400 = vpop.permute.xlu0 %2399
    %2403 = vset.pattern.permute.xlu0 8
    %2404 = vperm.xlu0 %2403, %v2378
    %v2405 = vpop.permute.xlu0 %2404
    %2408 = vset.pattern.permute.xlu0 8
    %2409 = vperm.xlu0 %2408, %v2379
    %v2410 = vpop.permute.xlu0 %2409
    %2413 = vset.pattern.permute.xlu0 8
    %2414 = vperm.xlu0 %2413, %v2380
    %v2415 = vpop.permute.xlu0 %2414
    %2418 = vset.pattern.permute.xlu0 8
    %2419 = vperm.xlu0 %2418, %v2381
    %v2420 = vpop.permute.xlu0 %2419
    %2423 = vset.pattern.permute.xlu0 8
    %2424 = vperm.xlu0 %2423, %v2382
    %v2425 = vpop.permute.xlu0 %2424
    %2428 = vset.pattern.permute.xlu0 8
    %2429 = vperm.xlu0 %2428, %v2383
    %v2430 = vpop.permute.xlu0 %2429
    %2433 = vset.pattern.permute.xlu0 8
    %2434 = vperm.xlu0 %2433, %v2384
    %v2435 = vpop.permute.xlu0 %2434
    %2438 = vset.pattern.permute.xlu0 8
    %2439 = vperm.xlu0 %2438, %v2385
    %v2440 = vpop.permute.xlu0 %2439
    %2443 = vset.pattern.permute.xlu0 8
    %2444 = vperm.xlu0 %2443, %v2386
    %v2445 = vpop.permute.xlu0 %2444
    %2448 = vset.pattern.permute.xlu0 8
    %2449 = vperm.xlu0 %2448, %v2387
    %v2450 = vpop.permute.xlu0 %2449
    %2453 = vset.pattern.permute.xlu0 8
    %2454 = vperm.xlu0 %2453, %v2388
    %v2455 = vpop.permute.xlu0 %2454
    %2458 = vset.pattern.permute.xlu0 8
    %2459 = vperm.xlu0 %2458, %v2389
    %v2460 = vpop.permute.xlu0 %2459
    %2463 = vset.pattern.permute.xlu0 8
    %2464 = vperm.xlu0 %2463, %v2390
    %v2465 = vpop.permute.xlu0 %2464
    %2468 = vset.pattern.permute.xlu0 8
    %2469 = vperm.xlu0 %2468, %v2391
    %v2470 = vpop.permute.xlu0 %2469
    %2472 = vset.pattern.permute.xlu0 9
    %2473 = vperm.xlu0 %2472, %v2376
    %v2474 = vpop.permute.xlu0 %2473
    %2476 = vset.pattern.permute.xlu0 9
    %2477 = vperm.xlu0 %2476, %v2377
    %v2478 = vpop.permute.xlu0 %2477
    %2480 = vset.pattern.permute.xlu0 9
    %2481 = vperm.xlu0 %2480, %v2378
    %v2482 = vpop.permute.xlu0 %2481
    %2484 = vset.pattern.permute.xlu0 9
    %2485 = vperm.xlu0 %2484, %v2379
    %v2486 = vpop.permute.xlu0 %2485
    %2488 = vset.pattern.permute.xlu0 9
    %2489 = vperm.xlu0 %2488, %v2380
    %v2490 = vpop.permute.xlu0 %2489
    %2492 = vset.pattern.permute.xlu0 9
    %2493 = vperm.xlu0 %2492, %v2381
    %v2494 = vpop.permute.xlu0 %2493
    %2496 = vset.pattern.permute.xlu0 9
    %2497 = vperm.xlu0 %2496, %v2382
    %v2498 = vpop.permute.xlu0 %2497
    %2500 = vset.pattern.permute.xlu0 9
    %2501 = vperm.xlu0 %2500, %v2383
    %v2502 = vpop.permute.xlu0 %2501
    %2504 = vset.pattern.permute.xlu0 9
    %2505 = vperm.xlu0 %2504, %v2384
    %v2506 = vpop.permute.xlu0 %2505
    %2508 = vset.pattern.permute.xlu0 9
    %2509 = vperm.xlu0 %2508, %v2385
    %v2510 = vpop.permute.xlu0 %2509
    %2512 = vset.pattern.permute.xlu0 9
    %2513 = vperm.xlu0 %2512, %v2386
    %v2514 = vpop.permute.xlu0 %2513
    %2516 = vset.pattern.permute.xlu0 9
    %2517 = vperm.xlu0 %2516, %v2387
    %v2518 = vpop.permute.xlu0 %2517
    %2520 = vset.pattern.permute.xlu0 9
    %2521 = vperm.xlu0 %2520, %v2388
    %v2522 = vpop.permute.xlu0 %2521
    %2524 = vset.pattern.permute.xlu0 9
    %2525 = vperm.xlu0 %2524, %v2389
    %v2526 = vpop.permute.xlu0 %2525
    %2528 = vset.pattern.permute.xlu0 9
    %2529 = vperm.xlu0 %2528, %v2390
    %v2530 = vpop.permute.xlu0 %2529
    %2532 = vset.pattern.permute.xlu0 9
    %2533 = vperm.xlu0 %2532, %v2391
    %v2534 = vpop.permute.xlu0 %2533
    %v2536 = vsel %vm94, %v2395, %v2474
    %v2537 = vsel %vm94, %v2400, %v2478
    %v2538 = vsel %vm94, %v2405, %v2482
    %v2539 = vsel %vm94, %v2410, %v2486
    %v2540 = vsel %vm94, %v2415, %v2490
    %v2541 = vsel %vm94, %v2420, %v2494
    %v2542 = vsel %vm94, %v2425, %v2498
    %v2543 = vsel %vm94, %v2430, %v2502
    %v2544 = vsel %vm94, %v2435, %v2506
    %v2545 = vsel %vm94, %v2440, %v2510
    %v2546 = vsel %vm94, %v2445, %v2514
    %v2547 = vsel %vm94, %v2450, %v2518
    %v2548 = vsel %vm94, %v2455, %v2522
    %v2549 = vsel %vm94, %v2460, %v2526
    %v2550 = vsel %vm94, %v2465, %v2530
    %v2551 = vsel %vm94, %v2470, %v2534
    %2552 = vmatprep.subr.mxu0 0.0
    %2553 = vmatpush1.msra.mxu0 %v2228
    %2554 = vmatprep.subr.mxu0 0.0
    %2555 = vmatpush1.msra.mxu0 %v2229
    %2556 = vmatprep.subr.mxu0 0.0
    %2557 = vmatpush1.msra.mxu0 %v2230
    %2558 = vmatprep.subr.mxu0 0.0
    %2559 = vmatpush1.msra.mxu0 %v2231
    %2560 = vmatprep.subr.mxu0 0.0
    %2561 = vmatpush1.msra.mxu0 0.0
    %2562 = vmatprep.subr.mxu0 0.0
    %2563 = vmatpush1.msra.mxu0 0.0
    %2564 = vmatprep.subr.mxu0 0.0
    %2565 = vmatpush1.msra.mxu0 0.0
    %2566 = vmatprep.subr.mxu0 0.0
    %2567 = vmatpush1.msra.mxu0 0.0
    %2568 = vmatprep.subr.mxu0 0.0
    %2569 = vmatpush1.msra.mxu0 0.0
    %2570 = vmatprep.subr.mxu0 0.0
    %2571 = vmatpush1.msra.mxu0 0.0
    %2572 = vmatprep.subr.mxu0 0.0
    %2573 = vmatpush1.msra.mxu0 0.0
    %2574 = vmatprep.subr.mxu0 0.0
    %2575 = vmatpush1.msra.mxu0 0.0
    %2576 = vmatprep.subr.mxu0 0.0
    %2577 = vmatpush1.msra.mxu0 0.0
    %2578 = vmatprep.subr.mxu0 0.0
    %2579 = vmatpush1.msra.mxu0 0.0
    %2580 = vmatprep.subr.mxu0 0.0
    %2581 = vmatpush1.msra.mxu0 0.0
    %2582 = vmatprep.subr.mxu0 0.0
    %2583 = vmatpush1.msra.mxu0 0.0
    %2584 = vmatprep.subr.mxu0 0.0
    %2585 = vmatpush1.msra.mxu0 0.0
    %2586 = vmatprep.subr.mxu0 0.0
    %2587 = vmatpush1.msra.mxu0 0.0
    %2588 = vmatprep.subr.mxu0 0.0
    %2589 = vmatpush1.msra.mxu0 0.0
    %2590 = vmatprep.subr.mxu0 0.0
    %2591 = vmatpush1.msra.mxu0 0.0
    %2592 = vmatprep.subr.mxu0 0.0
    %2593 = vmatpush1.msra.mxu0 0.0
    %2594 = vmatprep.subr.mxu0 0.0
    %2595 = vmatpush1.msra.mxu0 0.0
    %2596 = vmatprep.subr.mxu0 0.0
    %2597 = vmatpush1.msra.mxu0 0.0
    %2598 = vmatprep.subr.mxu0 0.0
    %2599 = vmatpush1.msra.mxu0 0.0
    %2600 = vmatprep.subr.mxu0 0.0
    %2601 = vmatpush1.msra.mxu0 0.0
    %2602 = vmatprep.subr.mxu0 0.0
    %2603 = vmatpush1.msra.mxu0 0.0
    %2604 = vmatprep.subr.mxu0 0.0
    %2605 = vmatpush1.msra.mxu0 0.0
    %2606 = vmatprep.subr.mxu0 0.0
    %2607 = vmatpush1.msra.mxu0 0.0
    %2608 = vmatprep.subr.mxu0 0.0
    %2609 = vmatpush1.msra.mxu0 0.0
    %2610 = vmatprep.subr.mxu0 0.0
    %2611 = vmatpush1.msra.mxu0 0.0
    %2612 = vmatprep.subr.mxu0 0.0
    %2613 = vmatpush1.msra.mxu0 0.0
    %2614 = vmatprep.subr.mxu0 0.0
    %2615 = vmatpush1.msra.mxu0 0.0
    %2616 = vmatprep.mubr.f32.mxu0 0.0
    %2617 = vmatmul.mubr.f32.gmra.mrb[0].mxu0 %v257
    %v2618 = vpop.f32.mrb[0].mxu0
    %v2619 = vadd.f32 %v2536, %v2618
    %v2620 = vpop.f32.mrb[0].mxu0
    %2621 = vmatprep.mubr.f32.mxu0 0.0
    %2622 = vmatmul.mubr.f32.gmra.mrb[0].mxu0 %v260
    %v2623 = vpop.f32.mrb[0].mxu0
    %v2624 = vadd.f32 %v2537, %v2623
    %v2625 = vpop.f32.mrb[0].mxu0
    %2626 = vmatprep.mubr.f32.mxu0 0.0
    %2627 = vmatmul.mubr.f32.gmra.mrb[0].mxu0 %v263
    %v2628 = vpop.f32.mrb[0].mxu0
    %v2629 = vadd.f32 %v2538, %v2628
    %v2630 = vpop.f32.mrb[0].mxu0
    %2631 = vmatprep.mubr.f32.mxu0 0.0
    %2632 = vmatmul.mubr.f32.gmra.mrb[0].mxu0 %v266
    %v2633 = vpop.f32.mrb[0].mxu0
    %v2634 = vadd.f32 %v2539, %v2633
    %v2635 = vpop.f32.mrb[0].mxu0
    %2636 = vmatprep.mubr.f32.mxu0 0.0
    %2637 = vmatmul.mubr.f32.gmra.mrb[0].mxu0 %v269
    %v2638 = vpop.f32.mrb[0].mxu0
    %v2639 = vadd.f32 %v2540, %v2638
    %v2640 = vpop.f32.mrb[0].mxu0
    %2641 = vmatprep.mubr.f32.mxu0 0.0
    %2642 = vmatmul.mubr.f32.gmra.mrb[0].mxu0 %v272
    %v2643 = vpop.f32.mrb[0].mxu0
    %v2644 = vadd.f32 %v2541, %v2643
    %v2645 = vpop.f32.mrb[0].mxu0
    %2646 = vmatprep.mubr.f32.mxu0 0.0
    %2647 = vmatmul.mubr.f32.gmra.mrb[0].mxu0 %v275
    %v2648 = vpop.f32.mrb[0].mxu0
    %v2649 = vadd.f32 %v2542, %v2648
    %v2650 = vpop.f32.mrb[0].mxu0
    %2651 = vmatprep.mubr.f32.mxu0 0.0
    %2652 = vmatmul.mubr.f32.gmra.mrb[0].mxu0 %v278
    %v2653 = vpop.f32.mrb[0].mxu0
    %v2654 = vadd.f32 %v2543, %v2653
    %v2655 = vpop.f32.mrb[0].mxu0
    %2656 = vmatprep.mubr.f32.mxu0 0.0
    %2657 = vmatmul.mubr.f32.gmra.mrb[0].mxu0 %v281
    %v2658 = vpop.f32.mrb[0].mxu0
    %v2659 = vadd.f32 %v2544, %v2658
    %v2660 = vpop.f32.mrb[0].mxu0
    %2661 = vmatprep.mubr.f32.mxu0 0.0
    %2662 = vmatmul.mubr.f32.gmra.mrb[0].mxu0 %v284
    %v2663 = vpop.f32.mrb[0].mxu0
    %v2664 = vadd.f32 %v2545, %v2663
    %v2665 = vpop.f32.mrb[0].mxu0
    %2666 = vmatprep.mubr.f32.mxu0 0.0
    %2667 = vmatmul.mubr.f32.gmra.mrb[0].mxu0 %v287
    %v2668 = vpop.f32.mrb[0].mxu0
    %v2669 = vadd.f32 %v2546, %v2668
    %v2670 = vpop.f32.mrb[0].mxu0
    %2671 = vmatprep.mubr.f32.mxu0 0.0
    %2672 = vmatmul.mubr.f32.gmra.mrb[0].mxu0 %v290
    %v2673 = vpop.f32.mrb[0].mxu0
    %v2674 = vadd.f32 %v2547, %v2673
    %v2675 = vpop.f32.mrb[0].mxu0
    %2676 = vmatprep.mubr.f32.mxu0 0.0
    %2677 = vmatmul.mubr.f32.gmra.mrb[0].mxu0 %v293
    %v2678 = vpop.f32.mrb[0].mxu0
    %v2679 = vadd.f32 %v2548, %v2678
    %v2680 = vpop.f32.mrb[0].mxu0
    %2681 = vmatprep.mubr.f32.mxu0 0.0
    %2682 = vmatmul.mubr.f32.gmra.mrb[0].mxu0 %v296
    %v2683 = vpop.f32.mrb[0].mxu0
    %v2684 = vadd.f32 %v2549, %v2683
    %v2685 = vpop.f32.mrb[0].mxu0
    %2686 = vmatprep.mubr.f32.mxu0 0.0
    %2687 = vmatmul.mubr.f32.gmra.mrb[0].mxu0 %v299
    %v2688 = vpop.f32.mrb[0].mxu0
    %v2689 = vadd.f32 %v2550, %v2688
    %v2690 = vpop.f32.mrb[0].mxu0
    %2691 = vmatprep.mubr.f32.mxu0 0.0
    %2692 = vmatmul.mubr.f32.gmra.mrb[0].mxu0 %v302
    %v2693 = vpop.f32.mrb[0].mxu0
    %v2694 = vadd.f32 %v2551, %v2693
    %v2695 = vpop.f32.mrb[0].mxu0
    %2696 = vdwg.mxu0
    %v2697 = vxor.u32 %v2619, 2147483648
    %v2698 = vxor.u32 %v2624, 2147483648
    %v2699 = vxor.u32 %v2629, 2147483648
    %v2700 = vxor.u32 %v2634, 2147483648
    %v2701 = vxor.u32 %v2639, 2147483648
    %v2702 = vxor.u32 %v2644, 2147483648
    %v2703 = vxor.u32 %v2649, 2147483648
    %v2704 = vxor.u32 %v2654, 2147483648
    %v2705 = vxor.u32 %v2659, 2147483648
    %v2706 = vxor.u32 %v2664, 2147483648
    %v2707 = vxor.u32 %v2669, 2147483648
    %v2708 = vxor.u32 %v2674, 2147483648
    %v2709 = vmul.f32 %v2697, 1.442695
    %v2710 = vpow.pop %v2709
    %v2711 = vmul.f32 %v2698, 1.442695
    %v2712 = vpow.pop %v2711
    %v2713 = vmul.f32 %v2699, 1.442695
    %v2714 = vpow.pop %v2713
    %v2715 = vmul.f32 %v2700, 1.442695
    %v2716 = vpow.pop %v2715
    %v2717 = vmul.f32 %v2701, 1.442695
    %v2718 = vpow.pop %v2717
    %v2719 = vmul.f32 %v2702, 1.442695
    %v2720 = vpow.pop %v2719
    %v2721 = vmul.f32 %v2703, 1.442695
    %v2722 = vpow.pop %v2721
    %v2723 = vmul.f32 %v2704, 1.442695
    %v2724 = vpow.pop %v2723
    %v2725 = vmul.f32 %v2705, 1.442695
    %v2726 = vpow.pop %v2725
    %v2727 = vmul.f32 %v2706, 1.442695
    %v2728 = vpow.pop %v2727
    %v2729 = vmul.f32 %v2707, 1.442695
    %v2730 = vpow.pop %v2729
    %v2731 = vmul.f32 %v2708, 1.442695
    %v2732 = vpow.pop %v2731
    %v2733 = vadd.f32 %v2710, 1.0
    %v2734 = vadd.f32 %v2712, 1.0
    %v2735 = vadd.f32 %v2714, 1.0
    %v2736 = vadd.f32 %v2716, 1.0
    %v2737 = vadd.f32 %v2718, 1.0
    %v2738 = vadd.f32 %v2720, 1.0
    %v2739 = vadd.f32 %v2722, 1.0
    %v2740 = vadd.f32 %v2724, 1.0
    %v2741 = vadd.f32 %v2726, 1.0
    %v2742 = vadd.f32 %v2728, 1.0
    %v2743 = vadd.f32 %v2730, 1.0
    %v2744 = vadd.f32 %v2732, 1.0
    %v2745 = vrcp.pop %v2733
    %v2746 = vmul.f32 1.0, %v2745
    %v2747 = vrcp.pop %v2734
    %v2748 = vmul.f32 1.0, %v2747
    %v2749 = vrcp.pop %v2735
    %v2750 = vmul.f32 1.0, %v2749
    %v2751 = vrcp.pop %v2736
    %v2752 = vmul.f32 1.0, %v2751
    %v2753 = vrcp.pop %v2737
    %v2754 = vmul.f32 1.0, %v2753
    %v2755 = vrcp.pop %v2738
    %v2756 = vmul.f32 1.0, %v2755
    %v2757 = vrcp.pop %v2739
    %v2758 = vmul.f32 1.0, %v2757
    %v2759 = vrcp.pop %v2740
    %v2760 = vmul.f32 1.0, %v2759
    %v2761 = vrcp.pop %v2741
    %v2762 = vmul.f32 1.0, %v2761
    %v2763 = vrcp.pop %v2742
    %v2764 = vmul.f32 1.0, %v2763
    %v2765 = vrcp.pop %v2743
    %v2766 = vmul.f32 1.0, %v2765
    %v2767 = vrcp.pop %v2744
    %v2768 = vmul.f32 1.0, %v2767
    %v2769 = vtanh.pop %v2679
    %v2770 = vtanh.pop %v2684
    %v2771 = vtanh.pop %v2689
    %v2772 = vtanh.pop %v2694
    %v2773 = vmul.f32 %v2754, %v2220
    %v2774 = vmul.f32 %v2756, %v2221
    %v2775 = vmul.f32 %v2758, %v2222
    %v2776 = vmul.f32 %v2760, %v2223
    %v2777 = vmul.f32 %v2746, %v2769
    %v2778 = vmul.f32 %v2748, %v2770
    %v2779 = vmul.f32 %v2750, %v2771
    %v2780 = vmul.f32 %v2752, %v2772
    %v2781 = vadd.f32 %v2773, %v2777
    %v2782 = vadd.f32 %v2774, %v2778
    %v2783 = vadd.f32 %v2775, %v2779
    %v2784 = vadd.f32 %v2776, %v2780
    %v2785 = vtanh.pop %v2781
    %v2786 = vtanh.pop %v2782
    %v2787 = vtanh.pop %v2783
    %v2788 = vtanh.pop %v2784
    %v2789 = vmul.f32 %v2762, %v2785
    %v2790 = vmul.f32 %v2764, %v2786
    %v2791 = vmul.f32 %v2766, %v2787
    %v2792 = vmul.f32 %v2768, %v2788
    %2793 = vmatprep.subr.mxu0 0.0
    %2794 = vmatpush1.msra.mxu0 %v2789
    %2795 = vmatprep.subr.mxu0 0.0
    %2796 = vmatpush1.msra.mxu0 %v2790
    %2797 = vmatprep.subr.mxu0 0.0
    %2798 = vmatpush1.msra.mxu0 %v2791
    %2799 = vmatprep.subr.mxu0 0.0
    %2800 = vmatpush1.msra.mxu0 %v2792
    %2801 = vmatprep.subr.mxu0 0.0
    %2802 = vmatpush1.msra.mxu0 0.0
    %2803 = vmatprep.subr.mxu0 0.0
    %2804 = vmatpush1.msra.mxu0 0.0
    %2805 = vmatprep.subr.mxu0 0.0
    %2806 = vmatpush1.msra.mxu0 0.0
    %2807 = vmatprep.subr.mxu0 0.0
    %2808 = vmatpush1.msra.mxu0 0.0
    %2809 = vmatprep.subr.mxu0 0.0
    %2810 = vmatpush1.msra.mxu0 0.0
    %2811 = vmatprep.subr.mxu0 0.0
    %2812 = vmatpush1.msra.mxu0 0.0
    %2813 = vmatprep.subr.mxu0 0.0
    %2814 = vmatpush1.msra.mxu0 0.0
    %2815 = vmatprep.subr.mxu0 0.0
    %2816 = vmatpush1.msra.mxu0 0.0
    %2817 = vmatprep.subr.mxu0 0.0
    %2818 = vmatpush1.msra.mxu0 0.0
    %2819 = vmatprep.subr.mxu0 0.0
    %2820 = vmatpush1.msra.mxu0 0.0
    %2821 = vmatprep.subr.mxu0 0.0
    %2822 = vmatpush1.msra.mxu0 0.0
    %2823 = vmatprep.subr.mxu0 0.0
    %2824 = vmatpush1.msra.mxu0 0.0
    %2825 = vmatprep.subr.mxu0 0.0
    %2826 = vmatpush1.msra.mxu0 0.0
    %2827 = vmatprep.subr.mxu0 0.0
    %2828 = vmatpush1.msra.mxu0 0.0
    %2829 = vmatprep.subr.mxu0 0.0
    %2830 = vmatpush1.msra.mxu0 0.0
    %2831 = vmatprep.subr.mxu0 0.0
    %2832 = vmatpush1.msra.mxu0 0.0
    %2833 = vmatprep.subr.mxu0 0.0
    %2834 = vmatpush1.msra.mxu0 0.0
    %2835 = vmatprep.subr.mxu0 0.0
    %2836 = vmatpush1.msra.mxu0 0.0
    %2837 = vmatprep.subr.mxu0 0.0
    %2838 = vmatpush1.msra.mxu0 0.0
    %2839 = vmatprep.subr.mxu0 0.0
    %2840 = vmatpush1.msra.mxu0 0.0
    %2841 = vmatprep.subr.mxu0 0.0
    %2842 = vmatpush1.msra.mxu0 0.0
    %2843 = vmatprep.subr.mxu0 0.0
    %2844 = vmatpush1.msra.mxu0 0.0
    %2845 = vmatprep.subr.mxu0 0.0
    %2846 = vmatpush1.msra.mxu0 0.0
    %2847 = vmatprep.subr.mxu0 0.0
    %2848 = vmatpush1.msra.mxu0 0.0
    %2849 = vmatprep.subr.mxu0 0.0
    %2850 = vmatpush1.msra.mxu0 0.0
    %2851 = vmatprep.subr.mxu0 0.0
    %2852 = vmatpush1.msra.mxu0 0.0
    %2853 = vmatprep.subr.mxu0 0.0
    %2854 = vmatpush1.msra.mxu0 0.0
    %2855 = vmatprep.subr.mxu0 0.0
    %2856 = vmatpush1.msra.mxu0 0.0
    %2857 = vmatprep.mubr.f32.mxu0 0.0
    %2858 = vmatmul.mubr.f32.gmra.mrb[0].mxu0 %v546
    %v2859 = vpop.f32.mrb[0].mxu0
    %v2860 = vadd.f32 0.0, %v2859
    %v2861 = vpop.f32.mrb[0].mxu0
    %2862 = vdwg.mxu0
    %v2863 = vld [vmem:[%s1 + $0x4] sm:$0x1]
    %v2864 = vadd.f32 %v2860, %v2863
    %v2865 = vadd.f32 %v2860, %v70
    %v2866 = vadd.f32 %v2330, %v2864
    %v2867 = vsel %vm73, %v2866, -inf
    %v2868 = vsel %vm623, %v2867, -inf
    %2869 = vmax.xlane.f32.xlu0 %v2868
    %v2870 = vpop.xlane.xlu0 %2869
    %v2871 = vsel %vm73, -inf, %v2866
    %v2872 = vsel %vm623, %v2871, -inf
    %2873 = vmax.xlane.f32.xlu0 %v2872
    %v2874 = vpop.xlane.xlu0 %2873
    %v2875 = vsel %vm73, %v2870, %v2874
    %v2876 = vsub.f32 %v2866, %v2875
    %v2877 = vmul.f32 %v2876, 1.442695
    %v2878 = vpow.pop %v2877
    %v2879 = vsel %vm73, %v2878, 0.0
    %v2880 = vsel %vm623, %v2879, 0.0
    %2881 = vadd.xlane.f32.xlu0 %v2880
    %v2882 = vpop.xlane.xlu0 %2881
    %v2883 = vsel %vm73, 0.0, %v2878
    %v2884 = vsel %vm623, %v2883, 0.0
    %2885 = vadd.xlane.f32.xlu0 %v2884
    %v2886 = vpop.xlane.xlu0 %2885
    %v2887 = vsel %vm73, %v2882, %v2886
    %v2888 = vlog2.pop %v2887
    %v2889 = vmul.f32 %v2888, 0.6931472
    %v2890 = vadd.f32 %v2875, %v2889
    %v2891 = vsub.f32 %v2866, %v2890
    %v2892 = vmul.f32 %v2891, 1.442695
    %v2893 = vpow.pop %v2892
    %v2896 = vunpack.c.l.s4 1966171168
    %v2897 = vunpack.c.0.s8 %v2896
    %v2898 = vlaneseq
    %v2899 = vshrl.u32 %v2898, 7
    %v2900 = vsub.s32 %v2897, %v2899
    %v2901 = vrot.slane %v2865, %v2900
    %v2902 = vcombine.high %v2901, %v2901
    %v2904 = vunpack.c.l.s4 1966171168
    %v2905 = vunpack.c.0.s8 %v2904
    %v2906 = vlaneseq
    %v2907 = vshrl.u32 %v2906, 7
    %v2908 = vsub.s32 %v2905, %v2907
    %v2909 = vrot.slane %v2902, %v2908
    %v2911 = vmul.f32 %v2893, %v2909
    %v2912 = vsel %vm73, %v2911, 0.0
    %v2913 = vsel %vm623, %v2912, 0.0
    %2914 = vadd.xlane.f32.xlu0 %v2913
    %v2915 = vpop.xlane.xlu0 %2914
    %v2916 = vsel %vm73, 0.0, %v2911
    %v2917 = vsel %vm623, %v2916, 0.0
    %2918 = vadd.xlane.f32.xlu0 %v2917
    %v2919 = vpop.xlane.xlu0 %2918
    %v2920 = vlaneseq
    %v2921 = vshrl.u32 %v2920, 7
    %v2922 = vsub.s32 0, %v2921
    %v2923 = vrot.slane %v2915, %v2922
    %v2924 = vlaneseq
    %v2925 = vshrl.u32 %v2924, 7
    %v2926 = vsub.s32 0, %v2925
    %v2927 = vrot.slane %v2919, %v2926
    %v2928 = vsel %vm76, %v2923, %v2927
    %vm2929 = vcmp.eq.s32.totalorder %v72, 4
    %v2930 = vsel %vm2929, 1, 0
    %vm2931 = vcmp.eq.s32.totalorder %v2930, 1
    %v2932 = vsel %vm2931, %v2928, %v2371
    %vm2933 = vcmp.ge.f32.partialorder %v2865, 0.0
    %v2934 = vmul.f32 %v2865, 0.01
    %v2935 = vsel %vm2933, %v2865, %v2934
    %2936 = vst [vmem:[#allocation5 + $0x3] sm:$0x2] %v2935
    %v2937 = vld [vmem:[%s0] sm:$0xff]
    %v2938 = vld [vmem:[%s0 + $0x8] sm:$0xff]
    %v2939 = vld [vmem:[%s0 + $0x10] sm:$0xff]
    %v2940 = vld [vmem:[%s0 + $0x18] sm:$0xff]
    %v2941 = vld [vmem:[%s0 + $0x20] sm:$0xff]
    %v2942 = vld [vmem:[%s0 + $0x28] sm:$0xff]
    %v2943 = vld [vmem:[%s0 + $0x30] sm:$0xff]
    %v2944 = vld [vmem:[%s0 + $0x38] sm:$0xff]
    %v2945 = vld [vmem:[%s0 + $0x40] sm:$0xff]
    %v2946 = vld [vmem:[%s0 + $0x48] sm:$0xff]
    %v2947 = vld [vmem:[%s0 + $0x50] sm:$0xff]
    %v2948 = vld [vmem:[%s0 + $0x58] sm:$0xff]
    %v2949 = vld [vmem:[%s0 + $0x60] sm:$0xff]
    %v2950 = vld [vmem:[%s0 + $0x68] sm:$0xff]
    %v2951 = vld [vmem:[%s0 + $0x70] sm:$0xff]
    %v2952 = vld [vmem:[%s0 + $0x78] sm:$0xff]
    %2954 = vset.pattern.permute.xlu0 10
    %2955 = vperm.xlu0 %2954, %v2937
    %v2956 = vpop.permute.xlu0 %2955
    %2959 = vset.pattern.permute.xlu0 10
    %2960 = vperm.xlu0 %2959, %v2938
    %v2961 = vpop.permute.xlu0 %2960
    %2964 = vset.pattern.permute.xlu0 10
    %2965 = vperm.xlu0 %2964, %v2939
    %v2966 = vpop.permute.xlu0 %2965
    %2969 = vset.pattern.permute.xlu0 10
    %2970 = vperm.xlu0 %2969, %v2940
    %v2971 = vpop.permute.xlu0 %2970
    %2974 = vset.pattern.permute.xlu0 10
    %2975 = vperm.xlu0 %2974, %v2941
    %v2976 = vpop.permute.xlu0 %2975
    %2979 = vset.pattern.permute.xlu0 10
    %2980 = vperm.xlu0 %2979, %v2942
    %v2981 = vpop.permute.xlu0 %2980
    %2984 = vset.pattern.permute.xlu0 10
    %2985 = vperm.xlu0 %2984, %v2943
    %v2986 = vpop.permute.xlu0 %2985
    %2989 = vset.pattern.permute.xlu0 10
    %2990 = vperm.xlu0 %2989, %v2944
    %v2991 = vpop.permute.xlu0 %2990
    %2994 = vset.pattern.permute.xlu0 10
    %2995 = vperm.xlu0 %2994, %v2945
    %v2996 = vpop.permute.xlu0 %2995
    %2999 = vset.pattern.permute.xlu0 10
    %3000 = vperm.xlu0 %2999, %v2946
    %v3001 = vpop.permute.xlu0 %3000
    %3004 = vset.pattern.permute.xlu0 10
    %3005 = vperm.xlu0 %3004, %v2947
    %v3006 = vpop.permute.xlu0 %3005
    %3009 = vset.pattern.permute.xlu0 10
    %3010 = vperm.xlu0 %3009, %v2948
    %v3011 = vpop.permute.xlu0 %3010
    %3014 = vset.pattern.permute.xlu0 10
    %3015 = vperm.xlu0 %3014, %v2949
    %v3016 = vpop.permute.xlu0 %3015
    %3019 = vset.pattern.permute.xlu0 10
    %3020 = vperm.xlu0 %3019, %v2950
    %v3021 = vpop.permute.xlu0 %3020
    %3024 = vset.pattern.permute.xlu0 10
    %3025 = vperm.xlu0 %3024, %v2951
    %v3026 = vpop.permute.xlu0 %3025
    %3029 = vset.pattern.permute.xlu0 10
    %3030 = vperm.xlu0 %3029, %v2952
    %v3031 = vpop.permute.xlu0 %3030
    %3033 = vset.pattern.permute.xlu0 11
    %3034 = vperm.xlu0 %3033, %v2937
    %v3035 = vpop.permute.xlu0 %3034
    %3037 = vset.pattern.permute.xlu0 11
    %3038 = vperm.xlu0 %3037, %v2938
    %v3039 = vpop.permute.xlu0 %3038
    %3041 = vset.pattern.permute.xlu0 11
    %3042 = vperm.xlu0 %3041, %v2939
    %v3043 = vpop.permute.xlu0 %3042
    %3045 = vset.pattern.permute.xlu0 11
    %3046 = vperm.xlu0 %3045, %v2940
    %v3047 = vpop.permute.xlu0 %3046
    %3049 = vset.pattern.permute.xlu0 11
    %3050 = vperm.xlu0 %3049, %v2941
    %v3051 = vpop.permute.xlu0 %3050
    %3053 = vset.pattern.permute.xlu0 11
    %3054 = vperm.xlu0 %3053, %v2942
    %v3055 = vpop.permute.xlu0 %3054
    %3057 = vset.pattern.permute.xlu0 11
    %3058 = vperm.xlu0 %3057, %v2943
    %v3059 = vpop.permute.xlu0 %3058
    %3061 = vset.pattern.permute.xlu0 11
    %3062 = vperm.xlu0 %3061, %v2944
    %v3063 = vpop.permute.xlu0 %3062
    %3065 = vset.pattern.permute.xlu0 11
    %3066 = vperm.xlu0 %3065, %v2945
    %v3067 = vpop.permute.xlu0 %3066
    %3069 = vset.pattern.permute.xlu0 11
    %3070 = vperm.xlu0 %3069, %v2946
    %v3071 = vpop.permute.xlu0 %3070
    %3073 = vset.pattern.permute.xlu0 11
    %3074 = vperm.xlu0 %3073, %v2947
    %v3075 = vpop.permute.xlu0 %3074
    %3077 = vset.pattern.permute.xlu0 11
    %3078 = vperm.xlu0 %3077, %v2948
    %v3079 = vpop.permute.xlu0 %3078
    %3081 = vset.pattern.permute.xlu0 11
    %3082 = vperm.xlu0 %3081, %v2949
    %v3083 = vpop.permute.xlu0 %3082
    %3085 = vset.pattern.permute.xlu0 11
    %3086 = vperm.xlu0 %3085, %v2950
    %v3087 = vpop.permute.xlu0 %3086
    %3089 = vset.pattern.permute.xlu0 11
    %3090 = vperm.xlu0 %3089, %v2951
    %v3091 = vpop.permute.xlu0 %3090
    %3093 = vset.pattern.permute.xlu0 11
    %3094 = vperm.xlu0 %3093, %v2952
    %v3095 = vpop.permute.xlu0 %3094
    %v3097 = vsel %vm94, %v2956, %v3035
    %v3098 = vsel %vm94, %v2961, %v3039
    %v3099 = vsel %vm94, %v2966, %v3043
    %v3100 = vsel %vm94, %v2971, %v3047
    %v3101 = vsel %vm94, %v2976, %v3051
    %v3102 = vsel %vm94, %v2981, %v3055
    %v3103 = vsel %vm94, %v2986, %v3059
    %v3104 = vsel %vm94, %v2991, %v3063
    %v3105 = vsel %vm94, %v2996, %v3067
    %v3106 = vsel %vm94, %v3001, %v3071
    %v3107 = vsel %vm94, %v3006, %v3075
    %v3108 = vsel %vm94, %v3011, %v3079
    %v3109 = vsel %vm94, %v3016, %v3083
    %v3110 = vsel %vm94, %v3021, %v3087
    %v3111 = vsel %vm94, %v3026, %v3091
    %v3112 = vsel %vm94, %v3031, %v3095
    %3113 = vmatprep.subr.mxu0 0.0
    %3114 = vmatpush1.msra.mxu0 %v2789
    %3115 = vmatprep.subr.mxu0 0.0
    %3116 = vmatpush1.msra.mxu0 %v2790
    %3117 = vmatprep.subr.mxu0 0.0
    %3118 = vmatpush1.msra.mxu0 %v2791
    %3119 = vmatprep.subr.mxu0 0.0
    %3120 = vmatpush1.msra.mxu0 %v2792
    %3121 = vmatprep.subr.mxu0 0.0
    %3122 = vmatpush1.msra.mxu0 0.0
    %3123 = vmatprep.subr.mxu0 0.0
    %3124 = vmatpush1.msra.mxu0 0.0
    %3125 = vmatprep.subr.mxu0 0.0
    %3126 = vmatpush1.msra.mxu0 0.0
    %3127 = vmatprep.subr.mxu0 0.0
    %3128 = vmatpush1.msra.mxu0 0.0
    %3129 = vmatprep.subr.mxu0 0.0
    %3130 = vmatpush1.msra.mxu0 0.0
    %3131 = vmatprep.subr.mxu0 0.0
    %3132 = vmatpush1.msra.mxu0 0.0
    %3133 = vmatprep.subr.mxu0 0.0
    %3134 = vmatpush1.msra.mxu0 0.0
    %3135 = vmatprep.subr.mxu0 0.0
    %3136 = vmatpush1.msra.mxu0 0.0
    %3137 = vmatprep.subr.mxu0 0.0
    %3138 = vmatpush1.msra.mxu0 0.0
    %3139 = vmatprep.subr.mxu0 0.0
    %3140 = vmatpush1.msra.mxu0 0.0
    %3141 = vmatprep.subr.mxu0 0.0
    %3142 = vmatpush1.msra.mxu0 0.0
    %3143 = vmatprep.subr.mxu0 0.0
    %3144 = vmatpush1.msra.mxu0 0.0
    %3145 = vmatprep.subr.mxu0 0.0
    %3146 = vmatpush1.msra.mxu0 0.0
    %3147 = vmatprep.subr.mxu0 0.0
    %3148 = vmatpush1.msra.mxu0 0.0
    %3149 = vmatprep.subr.mxu0 0.0
    %3150 = vmatpush1.msra.mxu0 0.0
    %3151 = vmatprep.subr.mxu0 0.0
    %3152 = vmatpush1.msra.mxu0 0.0
    %3153 = vmatprep.subr.mxu0 0.0
    %3154 = vmatpush1.msra.mxu0 0.0
    %3155 = vmatprep.subr.mxu0 0.0
    %3156 = vmatpush1.msra.mxu0 0.0
    %3157 = vmatprep.subr.mxu0 0.0
    %3158 = vmatpush1.msra.mxu0 0.0
    %3159 = vmatprep.subr.mxu0 0.0
    %3160 = vmatpush1.msra.mxu0 0.0
    %3161 = vmatprep.subr.mxu0 0.0
    %3162 = vmatpush1.msra.mxu0 0.0
    %3163 = vmatprep.subr.mxu0 0.0
    %3164 = vmatpush1.msra.mxu0 0.0
    %3165 = vmatprep.subr.mxu0 0.0
    %3166 = vmatpush1.msra.mxu0 0.0
    %3167 = vmatprep.subr.mxu0 0.0
    %3168 = vmatpush1.msra.mxu0 0.0
    %3169 = vmatprep.subr.mxu0 0.0
    %3170 = vmatpush1.msra.mxu0 0.0
    %3171 = vmatprep.subr.mxu0 0.0
    %3172 = vmatpush1.msra.mxu0 0.0
    %3173 = vmatprep.subr.mxu0 0.0
    %3174 = vmatpush1.msra.mxu0 0.0
    %3175 = vmatprep.subr.mxu0 0.0
    %3176 = vmatpush1.msra.mxu0 0.0
    %3177 = vmatprep.mubr.f32.mxu0 0.0
    %3178 = vmatmul.mubr.f32.gmra.mrb[0].mxu0 %v257
    %v3179 = vpop.f32.mrb[0].mxu0
    %v3180 = vadd.f32 %v3097, %v3179
    %v3181 = vpop.f32.mrb[0].mxu0
    %3182 = vmatprep.mubr.f32.mxu0 0.0
    %3183 = vmatmul.mubr.f32.gmra.mrb[0].mxu0 %v260
    %v3184 = vpop.f32.mrb[0].mxu0
    %v3185 = vadd.f32 %v3098, %v3184
    %v3186 = vpop.f32.mrb[0].mxu0
    %3187 = vmatprep.mubr.f32.mxu0 0.0
    %3188 = vmatmul.mubr.f32.gmra.mrb[0].mxu0 %v263
    %v3189 = vpop.f32.mrb[0].mxu0
    %v3190 = vadd.f32 %v3099, %v3189
    %v3191 = vpop.f32.mrb[0].mxu0
    %3192 = vmatprep.mubr.f32.mxu0 0.0
    %3193 = vmatmul.mubr.f32.gmra.mrb[0].mxu0 %v266
    %v3194 = vpop.f32.mrb[0].mxu0
    %v3195 = vadd.f32 %v3100, %v3194
    %v3196 = vpop.f32.mrb[0].mxu0
    %3197 = vmatprep.mubr.f32.mxu0 0.0
    %3198 = vmatmul.mubr.f32.gmra.mrb[0].mxu0 %v269
    %v3199 = vpop.f32.mrb[0].mxu0
    %v3200 = vadd.f32 %v3101, %v3199
    %v3201 = vpop.f32.mrb[0].mxu0
    %3202 = vmatprep.mubr.f32.mxu0 0.0
    %3203 = vmatmul.mubr.f32.gmra.mrb[0].mxu0 %v272
    %v3204 = vpop.f32.mrb[0].mxu0
    %v3205 = vadd.f32 %v3102, %v3204
    %v3206 = vpop.f32.mrb[0].mxu0
    %3207 = vmatprep.mubr.f32.mxu0 0.0
    %3208 = vmatmul.mubr.f32.gmra.mrb[0].mxu0 %v275
    %v3209 = vpop.f32.mrb[0].mxu0
    %v3210 = vadd.f32 %v3103, %v3209
    %v3211 = vpop.f32.mrb[0].mxu0
    %3212 = vmatprep.mubr.f32.mxu0 0.0
    %3213 = vmatmul.mubr.f32.gmra.mrb[0].mxu0 %v278
    %v3214 = vpop.f32.mrb[0].mxu0
    %v3215 = vadd.f32 %v3104, %v3214
    %v3216 = vpop.f32.mrb[0].mxu0
    %3217 = vmatprep.mubr.f32.mxu0 0.0
    %3218 = vmatmul.mubr.f32.gmra.mrb[0].mxu0 %v281
    %v3219 = vpop.f32.mrb[0].mxu0
    %v3220 = vadd.f32 %v3105, %v3219
    %v3221 = vpop.f32.mrb[0].mxu0
    %3222 = vmatprep.mubr.f32.mxu0 0.0
    %3223 = vmatmul.mubr.f32.gmra.mrb[0].mxu0 %v284
    %v3224 = vpop.f32.mrb[0].mxu0
    %v3225 = vadd.f32 %v3106, %v3224
    %v3226 = vpop.f32.mrb[0].mxu0
    %3227 = vmatprep.mubr.f32.mxu0 0.0
    %3228 = vmatmul.mubr.f32.gmra.mrb[0].mxu0 %v287
    %v3229 = vpop.f32.mrb[0].mxu0
    %v3230 = vadd.f32 %v3107, %v3229
    %v3231 = vpop.f32.mrb[0].mxu0
    %3232 = vmatprep.mubr.f32.mxu0 0.0
    %3233 = vmatmul.mubr.f32.gmra.mrb[0].mxu0 %v290
    %v3234 = vpop.f32.mrb[0].mxu0
    %v3235 = vadd.f32 %v3108, %v3234
    %v3236 = vpop.f32.mrb[0].mxu0
    %3237 = vmatprep.mubr.f32.mxu0 0.0
    %3238 = vmatmul.mubr.f32.gmra.mrb[0].mxu0 %v293
    %v3239 = vpop.f32.mrb[0].mxu0
    %v3240 = vadd.f32 %v3109, %v3239
    %v3241 = vpop.f32.mrb[0].mxu0
    %3242 = vmatprep.mubr.f32.mxu0 0.0
    %3243 = vmatmul.mubr.f32.gmra.mrb[0].mxu0 %v296
    %v3244 = vpop.f32.mrb[0].mxu0
    %v3245 = vadd.f32 %v3110, %v3244
    %v3246 = vpop.f32.mrb[0].mxu0
    %3247 = vmatprep.mubr.f32.mxu0 0.0
    %3248 = vmatmul.mubr.f32.gmra.mrb[0].mxu0 %v299
    %v3249 = vpop.f32.mrb[0].mxu0
    %v3250 = vadd.f32 %v3111, %v3249
    %v3251 = vpop.f32.mrb[0].mxu0
    %3252 = vmatprep.mubr.f32.mxu0 0.0
    %3253 = vmatmul.mubr.f32.gmra.mrb[0].mxu0 %v302
    %v3254 = vpop.f32.mrb[0].mxu0
    %v3255 = vadd.f32 %v3112, %v3254
    %v3256 = vpop.f32.mrb[0].mxu0
    %3257 = vdwg.mxu0
    %v3258 = vxor.u32 %v3180, 2147483648
    %v3259 = vxor.u32 %v3185, 2147483648
    %v3260 = vxor.u32 %v3190, 2147483648
    %v3261 = vxor.u32 %v3195, 2147483648
    %v3262 = vxor.u32 %v3200, 2147483648
    %v3263 = vxor.u32 %v3205, 2147483648
    %v3264 = vxor.u32 %v3210, 2147483648
    %v3265 = vxor.u32 %v3215, 2147483648
    %v3266 = vxor.u32 %v3220, 2147483648
    %v3267 = vxor.u32 %v3225, 2147483648
    %v3268 = vxor.u32 %v3230, 2147483648
    %v3269 = vxor.u32 %v3235, 2147483648
    %v3270 = vmul.f32 %v3258, 1.442695
    %v3271 = vpow.pop %v3270
    %v3272 = vmul.f32 %v3259, 1.442695
    %v3273 = vpow.pop %v3272
    %v3274 = vmul.f32 %v3260, 1.442695
    %v3275 = vpow.pop %v3274
    %v3276 = vmul.f32 %v3261, 1.442695
    %v3277 = vpow.pop %v3276
    %v3278 = vmul.f32 %v3262, 1.442695
    %v3279 = vpow.pop %v3278
    %v3280 = vmul.f32 %v3263, 1.442695
    %v3281 = vpow.pop %v3280
    %v3282 = vmul.f32 %v3264, 1.442695
    %v3283 = vpow.pop %v3282
    %v3284 = vmul.f32 %v3265, 1.442695
    %v3285 = vpow.pop %v3284
    %v3286 = vmul.f32 %v3266, 1.442695
    %v3287 = vpow.pop %v3286
    %v3288 = vmul.f32 %v3267, 1.442695
    %v3289 = vpow.pop %v3288
    %v3290 = vmul.f32 %v3268, 1.442695
    %v3291 = vpow.pop %v3290
    %v3292 = vmul.f32 %v3269, 1.442695
    %v3293 = vpow.pop %v3292
    %v3294 = vadd.f32 %v3271, 1.0
    %v3295 = vadd.f32 %v3273, 1.0
    %v3296 = vadd.f32 %v3275, 1.0
    %v3297 = vadd.f32 %v3277, 1.0
    %v3298 = vadd.f32 %v3279, 1.0
    %v3299 = vadd.f32 %v3281, 1.0
    %v3300 = vadd.f32 %v3283, 1.0
    %v3301 = vadd.f32 %v3285, 1.0
    %v3302 = vadd.f32 %v3287, 1.0
    %v3303 = vadd.f32 %v3289, 1.0
    %v3304 = vadd.f32 %v3291, 1.0
    %v3305 = vadd.f32 %v3293, 1.0
    %v3306 = vrcp.pop %v3294
    %v3307 = vmul.f32 1.0, %v3306
    %v3308 = vrcp.pop %v3295
    %v3309 = vmul.f32 1.0, %v3308
    %v3310 = vrcp.pop %v3296
    %v3311 = vmul.f32 1.0, %v3310
    %v3312 = vrcp.pop %v3297
    %v3313 = vmul.f32 1.0, %v3312
    %v3314 = vrcp.pop %v3298
    %v3315 = vmul.f32 1.0, %v3314
    %v3316 = vrcp.pop %v3299
    %v3317 = vmul.f32 1.0, %v3316
    %v3318 = vrcp.pop %v3300
    %v3319 = vmul.f32 1.0, %v3318
    %v3320 = vrcp.pop %v3301
    %v3321 = vmul.f32 1.0, %v3320
    %v3322 = vrcp.pop %v3302
    %v3323 = vmul.f32 1.0, %v3322
    %v3324 = vrcp.pop %v3303
    %v3325 = vmul.f32 1.0, %v3324
    %v3326 = vrcp.pop %v3304
    %v3327 = vmul.f32 1.0, %v3326
    %v3328 = vrcp.pop %v3305
    %v3329 = vmul.f32 1.0, %v3328
    %v3330 = vtanh.pop %v3240
    %v3331 = vtanh.pop %v3245
    %v3332 = vtanh.pop %v3250
    %v3333 = vtanh.pop %v3255
    %v3334 = vmul.f32 %v3315, %v2781
    %v3335 = vmul.f32 %v3317, %v2782
    %v3336 = vmul.f32 %v3319, %v2783
    %v3337 = vmul.f32 %v3321, %v2784
    %v3338 = vmul.f32 %v3307, %v3330
    %v3339 = vmul.f32 %v3309, %v3331
    %v3340 = vmul.f32 %v3311, %v3332
    %v3341 = vmul.f32 %v3313, %v3333
    %v3342 = vadd.f32 %v3334, %v3338
    %v3343 = vadd.f32 %v3335, %v3339
    %v3344 = vadd.f32 %v3336, %v3340
    %v3345 = vadd.f32 %v3337, %v3341
    %v3346 = vtanh.pop %v3342
    %v3347 = vtanh.pop %v3343
    %v3348 = vtanh.pop %v3344
    %v3349 = vtanh.pop %v3345
    %v3350 = vmul.f32 %v3323, %v3346
    %v3351 = vmul.f32 %v3325, %v3347
    %v3352 = vmul.f32 %v3327, %v3348
    %v3353 = vmul.f32 %v3329, %v3349
    %3354 = vmatprep.subr.mxu0 0.0
    %3355 = vmatpush1.msra.mxu0 %v3350
    %3356 = vmatprep.subr.mxu0 0.0
    %3357 = vmatpush1.msra.mxu0 %v3351
    %3358 = vmatprep.subr.mxu0 0.0
    %3359 = vmatpush1.msra.mxu0 %v3352
    %3360 = vmatprep.subr.mxu0 0.0
    %3361 = vmatpush1.msra.mxu0 %v3353
    %3362 = vmatprep.subr.mxu0 0.0
    %3363 = vmatpush1.msra.mxu0 0.0
    %3364 = vmatprep.subr.mxu0 0.0
    %3365 = vmatpush1.msra.mxu0 0.0
    %3366 = vmatprep.subr.mxu0 0.0
    %3367 = vmatpush1.msra.mxu0 0.0
    %3368 = vmatprep.subr.mxu0 0.0
    %3369 = vmatpush1.msra.mxu0 0.0
    %3370 = vmatprep.subr.mxu0 0.0
    %3371 = vmatpush1.msra.mxu0 0.0
    %3372 = vmatprep.subr.mxu0 0.0
    %3373 = vmatpush1.msra.mxu0 0.0
    %3374 = vmatprep.subr.mxu0 0.0
    %3375 = vmatpush1.msra.mxu0 0.0
    %3376 = vmatprep.subr.mxu0 0.0
    %3377 = vmatpush1.msra.mxu0 0.0
    %3378 = vmatprep.subr.mxu0 0.0
    %3379 = vmatpush1.msra.mxu0 0.0
    %3380 = vmatprep.subr.mxu0 0.0
    %3381 = vmatpush1.msra.mxu0 0.0
    %3382 = vmatprep.subr.mxu0 0.0
    %3383 = vmatpush1.msra.mxu0 0.0
    %3384 = vmatprep.subr.mxu0 0.0
    %3385 = vmatpush1.msra.mxu0 0.0
    %3386 = vmatprep.subr.mxu0 0.0
    %3387 = vmatpush1.msra.mxu0 0.0
    %3388 = vmatprep.subr.mxu0 0.0
    %3389 = vmatpush1.msra.mxu0 0.0
    %3390 = vmatprep.subr.mxu0 0.0
    %3391 = vmatpush1.msra.mxu0 0.0
    %3392 = vmatprep.subr.mxu0 0.0
    %3393 = vmatpush1.msra.mxu0 0.0
    %3394 = vmatprep.subr.mxu0 0.0
    %3395 = vmatpush1.msra.mxu0 0.0
    %3396 = vmatprep.subr.mxu0 0.0
    %3397 = vmatpush1.msra.mxu0 0.0
    %3398 = vmatprep.subr.mxu0 0.0
    %3399 = vmatpush1.msra.mxu0 0.0
    %3400 = vmatprep.subr.mxu0 0.0
    %3401 = vmatpush1.msra.mxu0 0.0
    %3402 = vmatprep.subr.mxu0 0.0
    %3403 = vmatpush1.msra.mxu0 0.0
    %3404 = vmatprep.subr.mxu0 0.0
    %3405 = vmatpush1.msra.mxu0 0.0
    %3406 = vmatprep.subr.mxu0 0.0
    %3407 = vmatpush1.msra.mxu0 0.0
    %3408 = vmatprep.subr.mxu0 0.0
    %3409 = vmatpush1.msra.mxu0 0.0
    %3410 = vmatprep.subr.mxu0 0.0
    %3411 = vmatpush1.msra.mxu0 0.0
    %3412 = vmatprep.subr.mxu0 0.0
    %3413 = vmatpush1.msra.mxu0 0.0
    %3414 = vmatprep.subr.mxu0 0.0
    %3415 = vmatpush1.msra.mxu0 0.0
    %3416 = vmatprep.subr.mxu0 0.0
    %3417 = vmatpush1.msra.mxu0 0.0
    %3418 = vmatprep.mubr.f32.mxu0 0.0
    %3419 = vmatmul.mubr.f32.gmra.mrb[0].mxu0 %v546
    %v3420 = vpop.f32.mrb[0].mxu0
    %v3421 = vadd.f32 0.0, %v3420
    %v3422 = vpop.f32.mrb[0].mxu0
    %3423 = vdwg.mxu0
    %v3424 = vld [vmem:[%s1 + $0x5] sm:$0x1]
    %v3425 = vadd.f32 %v3421, %v3424
    %v3426 = vadd.f32 %v3421, %v70
    %v3427 = vadd.f32 %v2891, %v3425
    %v3428 = vsel %vm73, %v3427, -inf
    %v3429 = vsel %vm623, %v3428, -inf
    %3430 = vmax.xlane.f32.xlu0 %v3429
    %v3431 = vpop.xlane.xlu0 %3430
    %v3432 = vsel %vm73, -inf, %v3427
    %v3433 = vsel %vm623, %v3432, -inf
    %3434 = vmax.xlane.f32.xlu0 %v3433
    %v3435 = vpop.xlane.xlu0 %3434
    %v3436 = vsel %vm73, %v3431, %v3435
    %v3437 = vsub.f32 %v3427, %v3436
    %v3438 = vmul.f32 %v3437, 1.442695
    %v3439 = vpow.pop %v3438
    %v3440 = vsel %vm73, %v3439, 0.0
    %v3441 = vsel %vm623, %v3440, 0.0
    %3442 = vadd.xlane.f32.xlu0 %v3441
    %v3443 = vpop.xlane.xlu0 %3442
    %v3444 = vsel %vm73, 0.0, %v3439
    %v3445 = vsel %vm623, %v3444, 0.0
    %3446 = vadd.xlane.f32.xlu0 %v3445
    %v3447 = vpop.xlane.xlu0 %3446
    %v3448 = vsel %vm73, %v3443, %v3447
    %v3449 = vlog2.pop %v3448
    %v3450 = vmul.f32 %v3449, 0.6931472
    %v3451 = vadd.f32 %v3436, %v3450
    %v3452 = vsub.f32 %v3427, %v3451
    %v3453 = vmul.f32 %v3452, 1.442695
    %v3454 = vpow.pop %v3453
    %v3457 = vunpack.c.l.s4 1966171168
    %v3458 = vunpack.c.0.s8 %v3457
    %v3459 = vlaneseq
    %v3460 = vshrl.u32 %v3459, 7
    %v3461 = vsub.s32 %v3458, %v3460
    %v3462 = vrot.slane %v3426, %v3461
    %v3463 = vcombine.high %v3462, %v3462
    %v3465 = vunpack.c.l.s4 1966171168
    %v3466 = vunpack.c.0.s8 %v3465
    %v3467 = vlaneseq
    %v3468 = vshrl.u32 %v3467, 7
    %v3469 = vsub.s32 %v3466, %v3468
    %v3470 = vrot.slane %v3463, %v3469
    %v3472 = vmul.f32 %v3454, %v3470
    %v3473 = vsel %vm73, %v3472, 0.0
    %v3474 = vsel %vm623, %v3473, 0.0
    %3475 = vadd.xlane.f32.xlu0 %v3474
    %v3476 = vpop.xlane.xlu0 %3475
    %v3477 = vsel %vm73, 0.0, %v3472
    %v3478 = vsel %vm623, %v3477, 0.0
    %3479 = vadd.xlane.f32.xlu0 %v3478
    %v3480 = vpop.xlane.xlu0 %3479
    %v3481 = vlaneseq
    %v3482 = vshrl.u32 %v3481, 7
    %v3483 = vsub.s32 0, %v3482
    %v3484 = vrot.slane %v3476, %v3483
    %v3485 = vlaneseq
    %v3486 = vshrl.u32 %v3485, 7
    %v3487 = vsub.s32 0, %v3486
    %v3488 = vrot.slane %v3480, %v3487
    %v3489 = vsel %vm76, %v3484, %v3488
    %vm3490 = vcmp.eq.s32.totalorder %v72, 5
    %v3491 = vsel %vm3490, 1, 0
    %vm3492 = vcmp.eq.s32.totalorder %v3491, 1
    %v3493 = vsel %vm3492, %v3489, %v2932
    %vm3494 = vcmp.ge.f32.partialorder %v3426, 0.0
    %v3495 = vmul.f32 %v3426, 0.01
    %v3496 = vsel %vm3494, %v3426, %v3495
    %3497 = vst [vmem:[#allocation5 + $0x4] sm:$0x2] %v3496
    %v3498 = vld [vmem:[%s0] sm:$0xff]
    %v3499 = vld [vmem:[%s0 + $0x8] sm:$0xff]
    %v3500 = vld [vmem:[%s0 + $0x10] sm:$0xff]
    %v3501 = vld [vmem:[%s0 + $0x18] sm:$0xff]
    %v3502 = vld [vmem:[%s0 + $0x20] sm:$0xff]
    %v3503 = vld [vmem:[%s0 + $0x28] sm:$0xff]
    %v3504 = vld [vmem:[%s0 + $0x30] sm:$0xff]
    %v3505 = vld [vmem:[%s0 + $0x38] sm:$0xff]
    %v3506 = vld [vmem:[%s0 + $0x40] sm:$0xff]
    %v3507 = vld [vmem:[%s0 + $0x48] sm:$0xff]
    %v3508 = vld [vmem:[%s0 + $0x50] sm:$0xff]
    %v3509 = vld [vmem:[%s0 + $0x58] sm:$0xff]
    %v3510 = vld [vmem:[%s0 + $0x60] sm:$0xff]
    %v3511 = vld [vmem:[%s0 + $0x68] sm:$0xff]
    %v3512 = vld [vmem:[%s0 + $0x70] sm:$0xff]
    %v3513 = vld [vmem:[%s0 + $0x78] sm:$0xff]
    %3515 = vset.pattern.permute.xlu0 12
    %3516 = vperm.xlu0 %3515, %v3498
    %v3517 = vpop.permute.xlu0 %3516
    %3520 = vset.pattern.permute.xlu0 12
    %3521 = vperm.xlu0 %3520, %v3499
    %v3522 = vpop.permute.xlu0 %3521
    %3525 = vset.pattern.permute.xlu0 12
    %3526 = vperm.xlu0 %3525, %v3500
    %v3527 = vpop.permute.xlu0 %3526
    %3530 = vset.pattern.permute.xlu0 12
    %3531 = vperm.xlu0 %3530, %v3501
    %v3532 = vpop.permute.xlu0 %3531
    %3535 = vset.pattern.permute.xlu0 12
    %3536 = vperm.xlu0 %3535, %v3502
    %v3537 = vpop.permute.xlu0 %3536
    %3540 = vset.pattern.permute.xlu0 12
    %3541 = vperm.xlu0 %3540, %v3503
    %v3542 = vpop.permute.xlu0 %3541
    %3545 = vset.pattern.permute.xlu0 12
    %3546 = vperm.xlu0 %3545, %v3504
    %v3547 = vpop.permute.xlu0 %3546
    %3550 = vset.pattern.permute.xlu0 12
    %3551 = vperm.xlu0 %3550, %v3505
    %v3552 = vpop.permute.xlu0 %3551
    %3555 = vset.pattern.permute.xlu0 12
    %3556 = vperm.xlu0 %3555, %v3506
    %v3557 = vpop.permute.xlu0 %3556
    %3560 = vset.pattern.permute.xlu0 12
    %3561 = vperm.xlu0 %3560, %v3507
    %v3562 = vpop.permute.xlu0 %3561
    %3565 = vset.pattern.permute.xlu0 12
    %3566 = vperm.xlu0 %3565, %v3508
    %v3567 = vpop.permute.xlu0 %3566
    %3570 = vset.pattern.permute.xlu0 12
    %3571 = vperm.xlu0 %3570, %v3509
    %v3572 = vpop.permute.xlu0 %3571
    %3575 = vset.pattern.permute.xlu0 12
    %3576 = vperm.xlu0 %3575, %v3510
    %v3577 = vpop.permute.xlu0 %3576
    %3580 = vset.pattern.permute.xlu0 12
    %3581 = vperm.xlu0 %3580, %v3511
    %v3582 = vpop.permute.xlu0 %3581
    %3585 = vset.pattern.permute.xlu0 12
    %3586 = vperm.xlu0 %3585, %v3512
    %v3587 = vpop.permute.xlu0 %3586
    %3590 = vset.pattern.permute.xlu0 12
    %3591 = vperm.xlu0 %3590, %v3513
    %v3592 = vpop.permute.xlu0 %3591
    %3594 = vset.pattern.permute.xlu0 13
    %3595 = vperm.xlu0 %3594, %v3498
    %v3596 = vpop.permute.xlu0 %3595
    %3598 = vset.pattern.permute.xlu0 13
    %3599 = vperm.xlu0 %3598, %v3499
    %v3600 = vpop.permute.xlu0 %3599
    %3602 = vset.pattern.permute.xlu0 13
    %3603 = vperm.xlu0 %3602, %v3500
    %v3604 = vpop.permute.xlu0 %3603
    %3606 = vset.pattern.permute.xlu0 13
    %3607 = vperm.xlu0 %3606, %v3501
    %v3608 = vpop.permute.xlu0 %3607
    %3610 = vset.pattern.permute.xlu0 13
    %3611 = vperm.xlu0 %3610, %v3502
    %v3612 = vpop.permute.xlu0 %3611
    %3614 = vset.pattern.permute.xlu0 13
    %3615 = vperm.xlu0 %3614, %v3503
    %v3616 = vpop.permute.xlu0 %3615
    %3618 = vset.pattern.permute.xlu0 13
    %3619 = vperm.xlu0 %3618, %v3504
    %v3620 = vpop.permute.xlu0 %3619
    %3622 = vset.pattern.permute.xlu0 13
    %3623 = vperm.xlu0 %3622, %v3505
    %v3624 = vpop.permute.xlu0 %3623
    %3626 = vset.pattern.permute.xlu0 13
    %3627 = vperm.xlu0 %3626, %v3506
    %v3628 = vpop.permute.xlu0 %3627
    %3630 = vset.pattern.permute.xlu0 13
    %3631 = vperm.xlu0 %3630, %v3507
    %v3632 = vpop.permute.xlu0 %3631
    %3634 = vset.pattern.permute.xlu0 13
    %3635 = vperm.xlu0 %3634, %v3508
    %v3636 = vpop.permute.xlu0 %3635
    %3638 = vset.pattern.permute.xlu0 13
    %3639 = vperm.xlu0 %3638, %v3509
    %v3640 = vpop.permute.xlu0 %3639
    %3642 = vset.pattern.permute.xlu0 13
    %3643 = vperm.xlu0 %3642, %v3510
    %v3644 = vpop.permute.xlu0 %3643
    %3646 = vset.pattern.permute.xlu0 13
    %3647 = vperm.xlu0 %3646, %v3511
    %v3648 = vpop.permute.xlu0 %3647
    %3650 = vset.pattern.permute.xlu0 13
    %3651 = vperm.xlu0 %3650, %v3512
    %v3652 = vpop.permute.xlu0 %3651
    %3654 = vset.pattern.permute.xlu0 13
    %3655 = vperm.xlu0 %3654, %v3513
    %v3656 = vpop.permute.xlu0 %3655
    %v3658 = vsel %vm94, %v3517, %v3596
    %v3659 = vsel %vm94, %v3522, %v3600
    %v3660 = vsel %vm94, %v3527, %v3604
    %v3661 = vsel %vm94, %v3532, %v3608
    %v3662 = vsel %vm94, %v3537, %v3612
    %v3663 = vsel %vm94, %v3542, %v3616
    %v3664 = vsel %vm94, %v3547, %v3620
    %v3665 = vsel %vm94, %v3552, %v3624
    %v3666 = vsel %vm94, %v3557, %v3628
    %v3667 = vsel %vm94, %v3562, %v3632
    %v3668 = vsel %vm94, %v3567, %v3636
    %v3669 = vsel %vm94, %v3572, %v3640
    %v3670 = vsel %vm94, %v3577, %v3644
    %v3671 = vsel %vm94, %v3582, %v3648
    %v3672 = vsel %vm94, %v3587, %v3652
    %v3673 = vsel %vm94, %v3592, %v3656
    %3674 = vmatprep.subr.mxu0 0.0
    %3675 = vmatpush1.msra.mxu0 %v3350
    %3676 = vmatprep.subr.mxu0 0.0
    %3677 = vmatpush1.msra.mxu0 %v3351
    %3678 = vmatprep.subr.mxu0 0.0
    %3679 = vmatpush1.msra.mxu0 %v3352
    %3680 = vmatprep.subr.mxu0 0.0
    %3681 = vmatpush1.msra.mxu0 %v3353
    %3682 = vmatprep.subr.mxu0 0.0
    %3683 = vmatpush1.msra.mxu0 0.0
    %3684 = vmatprep.subr.mxu0 0.0
    %3685 = vmatpush1.msra.mxu0 0.0
    %3686 = vmatprep.subr.mxu0 0.0
    %3687 = vmatpush1.msra.mxu0 0.0
    %3688 = vmatprep.subr.mxu0 0.0
    %3689 = vmatpush1.msra.mxu0 0.0
    %3690 = vmatprep.subr.mxu0 0.0
    %3691 = vmatpush1.msra.mxu0 0.0
    %3692 = vmatprep.subr.mxu0 0.0
    %3693 = vmatpush1.msra.mxu0 0.0
    %3694 = vmatprep.subr.mxu0 0.0
    %3695 = vmatpush1.msra.mxu0 0.0
    %3696 = vmatprep.subr.mxu0 0.0
    %3697 = vmatpush1.msra.mxu0 0.0
    %3698 = vmatprep.subr.mxu0 0.0
    %3699 = vmatpush1.msra.mxu0 0.0
    %3700 = vmatprep.subr.mxu0 0.0
    %3701 = vmatpush1.msra.mxu0 0.0
    %3702 = vmatprep.subr.mxu0 0.0
    %3703 = vmatpush1.msra.mxu0 0.0
    %3704 = vmatprep.subr.mxu0 0.0
    %3705 = vmatpush1.msra.mxu0 0.0
    %3706 = vmatprep.subr.mxu0 0.0
    %3707 = vmatpush1.msra.mxu0 0.0
    %3708 = vmatprep.subr.mxu0 0.0
    %3709 = vmatpush1.msra.mxu0 0.0
    %3710 = vmatprep.subr.mxu0 0.0
    %3711 = vmatpush1.msra.mxu0 0.0
    %3712 = vmatprep.subr.mxu0 0.0
    %3713 = vmatpush1.msra.mxu0 0.0
    %3714 = vmatprep.subr.mxu0 0.0
    %3715 = vmatpush1.msra.mxu0 0.0
    %3716 = vmatprep.subr.mxu0 0.0
    %3717 = vmatpush1.msra.mxu0 0.0
    %3718 = vmatprep.subr.mxu0 0.0
    %3719 = vmatpush1.msra.mxu0 0.0
    %3720 = vmatprep.subr.mxu0 0.0
    %3721 = vmatpush1.msra.mxu0 0.0
    %3722 = vmatprep.subr.mxu0 0.0
    %3723 = vmatpush1.msra.mxu0 0.0
    %3724 = vmatprep.subr.mxu0 0.0
    %3725 = vmatpush1.msra.mxu0 0.0
    %3726 = vmatprep.subr.mxu0 0.0
    %3727 = vmatpush1.msra.mxu0 0.0
    %3728 = vmatprep.subr.mxu0 0.0
    %3729 = vmatpush1.msra.mxu0 0.0
    %3730 = vmatprep.subr.mxu0 0.0
    %3731 = vmatpush1.msra.mxu0 0.0
    %3732 = vmatprep.subr.mxu0 0.0
    %3733 = vmatpush1.msra.mxu0 0.0
    %3734 = vmatprep.subr.mxu0 0.0
    %3735 = vmatpush1.msra.mxu0 0.0
    %3736 = vmatprep.subr.mxu0 0.0
    %3737 = vmatpush1.msra.mxu0 0.0
    %3738 = vmatprep.mubr.f32.mxu0 0.0
    %3739 = vmatmul.mubr.f32.gmra.mrb[0].mxu0 %v257
    %v3740 = vpop.f32.mrb[0].mxu0
    %v3741 = vadd.f32 %v3658, %v3740
    %v3742 = vpop.f32.mrb[0].mxu0
    %3743 = vmatprep.mubr.f32.mxu0 0.0
    %3744 = vmatmul.mubr.f32.gmra.mrb[0].mxu0 %v260
    %v3745 = vpop.f32.mrb[0].mxu0
    %v3746 = vadd.f32 %v3659, %v3745
    %v3747 = vpop.f32.mrb[0].mxu0
    %3748 = vmatprep.mubr.f32.mxu0 0.0
    %3749 = vmatmul.mubr.f32.gmra.mrb[0].mxu0 %v263
    %v3750 = vpop.f32.mrb[0].mxu0
    %v3751 = vadd.f32 %v3660, %v3750
    %v3752 = vpop.f32.mrb[0].mxu0
    %3753 = vmatprep.mubr.f32.mxu0 0.0
    %3754 = vmatmul.mubr.f32.gmra.mrb[0].mxu0 %v266
    %v3755 = vpop.f32.mrb[0].mxu0
    %v3756 = vadd.f32 %v3661, %v3755
    %v3757 = vpop.f32.mrb[0].mxu0
    %3758 = vmatprep.mubr.f32.mxu0 0.0
    %3759 = vmatmul.mubr.f32.gmra.mrb[0].mxu0 %v269
    %v3760 = vpop.f32.mrb[0].mxu0
    %v3761 = vadd.f32 %v3662, %v3760
    %v3762 = vpop.f32.mrb[0].mxu0
    %3763 = vmatprep.mubr.f32.mxu0 0.0
    %3764 = vmatmul.mubr.f32.gmra.mrb[0].mxu0 %v272
    %v3765 = vpop.f32.mrb[0].mxu0
    %v3766 = vadd.f32 %v3663, %v3765
    %v3767 = vpop.f32.mrb[0].mxu0
    %3768 = vmatprep.mubr.f32.mxu0 0.0
    %3769 = vmatmul.mubr.f32.gmra.mrb[0].mxu0 %v275
    %v3770 = vpop.f32.mrb[0].mxu0
    %v3771 = vadd.f32 %v3664, %v3770
    %v3772 = vpop.f32.mrb[0].mxu0
    %3773 = vmatprep.mubr.f32.mxu0 0.0
    %3774 = vmatmul.mubr.f32.gmra.mrb[0].mxu0 %v278
    %v3775 = vpop.f32.mrb[0].mxu0
    %v3776 = vadd.f32 %v3665, %v3775
    %v3777 = vpop.f32.mrb[0].mxu0
    %3778 = vmatprep.mubr.f32.mxu0 0.0
    %3779 = vmatmul.mubr.f32.gmra.mrb[0].mxu0 %v281
    %v3780 = vpop.f32.mrb[0].mxu0
    %v3781 = vadd.f32 %v3666, %v3780
    %v3782 = vpop.f32.mrb[0].mxu0
    %3783 = vmatprep.mubr.f32.mxu0 0.0
    %3784 = vmatmul.mubr.f32.gmra.mrb[0].mxu0 %v284
    %v3785 = vpop.f32.mrb[0].mxu0
    %v3786 = vadd.f32 %v3667, %v3785
    %v3787 = vpop.f32.mrb[0].mxu0
    %3788 = vmatprep.mubr.f32.mxu0 0.0
    %3789 = vmatmul.mubr.f32.gmra.mrb[0].mxu0 %v287
    %v3790 = vpop.f32.mrb[0].mxu0
    %v3791 = vadd.f32 %v3668, %v3790
    %v3792 = vpop.f32.mrb[0].mxu0
    %3793 = vmatprep.mubr.f32.mxu0 0.0
    %3794 = vmatmul.mubr.f32.gmra.mrb[0].mxu0 %v290
    %v3795 = vpop.f32.mrb[0].mxu0
    %v3796 = vadd.f32 %v3669, %v3795
    %v3797 = vpop.f32.mrb[0].mxu0
    %3798 = vmatprep.mubr.f32.mxu0 0.0
    %3799 = vmatmul.mubr.f32.gmra.mrb[0].mxu0 %v293
    %v3800 = vpop.f32.mrb[0].mxu0
    %v3801 = vadd.f32 %v3670, %v3800
    %v3802 = vpop.f32.mrb[0].mxu0
    %3803 = vmatprep.mubr.f32.mxu0 0.0
    %3804 = vmatmul.mubr.f32.gmra.mrb[0].mxu0 %v296
    %v3805 = vpop.f32.mrb[0].mxu0
    %v3806 = vadd.f32 %v3671, %v3805
    %v3807 = vpop.f32.mrb[0].mxu0
    %3808 = vmatprep.mubr.f32.mxu0 0.0
    %3809 = vmatmul.mubr.f32.gmra.mrb[0].mxu0 %v299
    %v3810 = vpop.f32.mrb[0].mxu0
    %v3811 = vadd.f32 %v3672, %v3810
    %v3812 = vpop.f32.mrb[0].mxu0
    %3813 = vmatprep.mubr.f32.mxu0 0.0
    %3814 = vmatmul.mubr.f32.gmra.mrb[0].mxu0 %v302
    %v3815 = vpop.f32.mrb[0].mxu0
    %v3816 = vadd.f32 %v3673, %v3815
    %v3817 = vpop.f32.mrb[0].mxu0
    %3818 = vdwg.mxu0
    %v3819 = vxor.u32 %v3741, 2147483648
    %v3820 = vxor.u32 %v3746, 2147483648
    %v3821 = vxor.u32 %v3751, 2147483648
    %v3822 = vxor.u32 %v3756, 2147483648
    %v3823 = vxor.u32 %v3761, 2147483648
    %v3824 = vxor.u32 %v3766, 2147483648
    %v3825 = vxor.u32 %v3771, 2147483648
    %v3826 = vxor.u32 %v3776, 2147483648
    %v3827 = vxor.u32 %v3781, 2147483648
    %v3828 = vxor.u32 %v3786, 2147483648
    %v3829 = vxor.u32 %v3791, 2147483648
    %v3830 = vxor.u32 %v3796, 2147483648
    %v3831 = vmul.f32 %v3819, 1.442695
    %v3832 = vpow.pop %v3831
    %v3833 = vmul.f32 %v3820, 1.442695
    %v3834 = vpow.pop %v3833
    %v3835 = vmul.f32 %v3821, 1.442695
    %v3836 = vpow.pop %v3835
    %v3837 = vmul.f32 %v3822, 1.442695
    %v3838 = vpow.pop %v3837
    %v3839 = vmul.f32 %v3823, 1.442695
    %v3840 = vpow.pop %v3839
    %v3841 = vmul.f32 %v3824, 1.442695
    %v3842 = vpow.pop %v3841
    %v3843 = vmul.f32 %v3825, 1.442695
    %v3844 = vpow.pop %v3843
    %v3845 = vmul.f32 %v3826, 1.442695
    %v3846 = vpow.pop %v3845
    %v3847 = vmul.f32 %v3827, 1.442695
    %v3848 = vpow.pop %v3847
    %v3849 = vmul.f32 %v3828, 1.442695
    %v3850 = vpow.pop %v3849
    %v3851 = vmul.f32 %v3829, 1.442695
    %v3852 = vpow.pop %v3851
    %v3853 = vmul.f32 %v3830, 1.442695
    %v3854 = vpow.pop %v3853
    %v3855 = vadd.f32 %v3832, 1.0
    %v3856 = vadd.f32 %v3834, 1.0
    %v3857 = vadd.f32 %v3836, 1.0
    %v3858 = vadd.f32 %v3838, 1.0
    %v3859 = vadd.f32 %v3840, 1.0
    %v3860 = vadd.f32 %v3842, 1.0
    %v3861 = vadd.f32 %v3844, 1.0
    %v3862 = vadd.f32 %v3846, 1.0
    %v3863 = vadd.f32 %v3848, 1.0
    %v3864 = vadd.f32 %v3850, 1.0
    %v3865 = vadd.f32 %v3852, 1.0
    %v3866 = vadd.f32 %v3854, 1.0
    %v3867 = vrcp.pop %v3855
    %v3868 = vmul.f32 1.0, %v3867
    %v3869 = vrcp.pop %v3856
    %v3870 = vmul.f32 1.0, %v3869
    %v3871 = vrcp.pop %v3857
    %v3872 = vmul.f32 1.0, %v3871
    %v3873 = vrcp.pop %v3858
    %v3874 = vmul.f32 1.0, %v3873
    %v3875 = vrcp.pop %v3859
    %v3876 = vmul.f32 1.0, %v3875
    %v3877 = vrcp.pop %v3860
    %v3878 = vmul.f32 1.0, %v3877
    %v3879 = vrcp.pop %v3861
    %v3880 = vmul.f32 1.0, %v3879
    %v3881 = vrcp.pop %v3862
    %v3882 = vmul.f32 1.0, %v3881
    %v3883 = vrcp.pop %v3863
    %v3884 = vmul.f32 1.0, %v3883
    %v3885 = vrcp.pop %v3864
    %v3886 = vmul.f32 1.0, %v3885
    %v3887 = vrcp.pop %v3865
    %v3888 = vmul.f32 1.0, %v3887
    %v3889 = vrcp.pop %v3866
    %v3890 = vmul.f32 1.0, %v3889
    %v3891 = vtanh.pop %v3801
    %v3892 = vtanh.pop %v3806
    %v3893 = vtanh.pop %v3811
    %v3894 = vtanh.pop %v3816
    %v3895 = vmul.f32 %v3876, %v3342
    %v3896 = vmul.f32 %v3878, %v3343
    %v3897 = vmul.f32 %v3880, %v3344
    %v3898 = vmul.f32 %v3882, %v3345
    %v3899 = vmul.f32 %v3868, %v3891
    %v3900 = vmul.f32 %v3870, %v3892
    %v3901 = vmul.f32 %v3872, %v3893
    %v3902 = vmul.f32 %v3874, %v3894
    %v3903 = vadd.f32 %v3895, %v3899
    %v3904 = vadd.f32 %v3896, %v3900
    %v3905 = vadd.f32 %v3897, %v3901
    %v3906 = vadd.f32 %v3898, %v3902
    %v3907 = vtanh.pop %v3903
    %v3908 = vtanh.pop %v3904
    %v3909 = vtanh.pop %v3905
    %v3910 = vtanh.pop %v3906
    %v3911 = vmul.f32 %v3884, %v3907
    %v3912 = vmul.f32 %v3886, %v3908
    %v3913 = vmul.f32 %v3888, %v3909
    %v3914 = vmul.f32 %v3890, %v3910
    %3915 = vmatprep.subr.mxu0 0.0
    %3916 = vmatpush1.msra.mxu0 %v3911
    %3917 = vmatprep.subr.mxu0 0.0
    %3918 = vmatpush1.msra.mxu0 %v3912
    %3919 = vmatprep.subr.mxu0 0.0
    %3920 = vmatpush1.msra.mxu0 %v3913
    %3921 = vmatprep.subr.mxu0 0.0
    %3922 = vmatpush1.msra.mxu0 %v3914
    %3923 = vmatprep.subr.mxu0 0.0
    %3924 = vmatpush1.msra.mxu0 0.0
    %3925 = vmatprep.subr.mxu0 0.0
    %3926 = vmatpush1.msra.mxu0 0.0
    %3927 = vmatprep.subr.mxu0 0.0
    %3928 = vmatpush1.msra.mxu0 0.0
    %3929 = vmatprep.subr.mxu0 0.0
    %3930 = vmatpush1.msra.mxu0 0.0
    %3931 = vmatprep.subr.mxu0 0.0
    %3932 = vmatpush1.msra.mxu0 0.0
    %3933 = vmatprep.subr.mxu0 0.0
    %3934 = vmatpush1.msra.mxu0 0.0
    %3935 = vmatprep.subr.mxu0 0.0
    %3936 = vmatpush1.msra.mxu0 0.0
    %3937 = vmatprep.subr.mxu0 0.0
    %3938 = vmatpush1.msra.mxu0 0.0
    %3939 = vmatprep.subr.mxu0 0.0
    %3940 = vmatpush1.msra.mxu0 0.0
    %3941 = vmatprep.subr.mxu0 0.0
    %3942 = vmatpush1.msra.mxu0 0.0
    %3943 = vmatprep.subr.mxu0 0.0
    %3944 = vmatpush1.msra.mxu0 0.0
    %3945 = vmatprep.subr.mxu0 0.0
    %3946 = vmatpush1.msra.mxu0 0.0
    %3947 = vmatprep.subr.mxu0 0.0
    %3948 = vmatpush1.msra.mxu0 0.0
    %3949 = vmatprep.subr.mxu0 0.0
    %3950 = vmatpush1.msra.mxu0 0.0
    %3951 = vmatprep.subr.mxu0 0.0
    %3952 = vmatpush1.msra.mxu0 0.0
    %3953 = vmatprep.subr.mxu0 0.0
    %3954 = vmatpush1.msra.mxu0 0.0
    %3955 = vmatprep.subr.mxu0 0.0
    %3956 = vmatpush1.msra.mxu0 0.0
    %3957 = vmatprep.subr.mxu0 0.0
    %3958 = vmatpush1.msra.mxu0 0.0
    %3959 = vmatprep.subr.mxu0 0.0
    %3960 = vmatpush1.msra.mxu0 0.0
    %3961 = vmatprep.subr.mxu0 0.0
    %3962 = vmatpush1.msra.mxu0 0.0
    %3963 = vmatprep.subr.mxu0 0.0
    %3964 = vmatpush1.msra.mxu0 0.0
    %3965 = vmatprep.subr.mxu0 0.0
    %3966 = vmatpush1.msra.mxu0 0.0
    %3967 = vmatprep.subr.mxu0 0.0
    %3968 = vmatpush1.msra.mxu0 0.0
    %3969 = vmatprep.subr.mxu0 0.0
    %3970 = vmatpush1.msra.mxu0 0.0
    %3971 = vmatprep.subr.mxu0 0.0
    %3972 = vmatpush1.msra.mxu0 0.0
    %3973 = vmatprep.subr.mxu0 0.0
    %3974 = vmatpush1.msra.mxu0 0.0
    %3975 = vmatprep.subr.mxu0 0.0
    %3976 = vmatpush1.msra.mxu0 0.0
    %3977 = vmatprep.subr.mxu0 0.0
    %3978 = vmatpush1.msra.mxu0 0.0
    %3979 = vmatprep.mubr.f32.mxu0 0.0
    %3980 = vmatmul.mubr.f32.gmra.mrb[0].mxu0 %v546
    %v3981 = vpop.f32.mrb[0].mxu0
    %v3982 = vadd.f32 0.0, %v3981
    %v3983 = vpop.f32.mrb[0].mxu0
    %3984 = vdwg.mxu0
    %v3985 = vld [vmem:[%s1 + $0x6] sm:$0x1]
    %v3986 = vadd.f32 %v3982, %v3985
    %v3987 = vadd.f32 %v3982, %v70
    %v3988 = vadd.f32 %v3452, %v3986
    %v3989 = vsel %vm73, %v3988, -inf
    %v3990 = vsel %vm623, %v3989, -inf
    %3991 = vmax.xlane.f32.xlu0 %v3990
    %v3992 = vpop.xlane.xlu0 %3991
    %v3993 = vsel %vm73, -inf, %v3988
    %v3994 = vsel %vm623, %v3993, -inf
    %3995 = vmax.xlane.f32.xlu0 %v3994
    %v3996 = vpop.xlane.xlu0 %3995
    %v3997 = vsel %vm73, %v3992, %v3996
    %v3998 = vsub.f32 %v3988, %v3997
    %v3999 = vmul.f32 %v3998, 1.442695
    %v4000 = vpow.pop %v3999
    %v4001 = vsel %vm73, %v4000, 0.0
    %v4002 = vsel %vm623, %v4001, 0.0
    %4003 = vadd.xlane.f32.xlu0 %v4002
    %v4004 = vpop.xlane.xlu0 %4003
    %v4005 = vsel %vm73, 0.0, %v4000
    %v4006 = vsel %vm623, %v4005, 0.0
    %4007 = vadd.xlane.f32.xlu0 %v4006
    %v4008 = vpop.xlane.xlu0 %4007
    %v4009 = vsel %vm73, %v4004, %v4008
    %v4010 = vlog2.pop %v4009
    %v4011 = vmul.f32 %v4010, 0.6931472
    %v4012 = vadd.f32 %v3997, %v4011
    %v4013 = vsub.f32 %v3988, %v4012
    %v4014 = vmul.f32 %v4013, 1.442695
    %v4015 = vpow.pop %v4014
    %v4018 = vunpack.c.l.s4 1966171168
    %v4019 = vunpack.c.0.s8 %v4018
    %v4020 = vlaneseq
    %v4021 = vshrl.u32 %v4020, 7
    %v4022 = vsub.s32 %v4019, %v4021
    %v4023 = vrot.slane %v3987, %v4022
    %v4024 = vcombine.high %v4023, %v4023
    %v4026 = vunpack.c.l.s4 1966171168
    %v4027 = vunpack.c.0.s8 %v4026
    %v4028 = vlaneseq
    %v4029 = vshrl.u32 %v4028, 7
    %v4030 = vsub.s32 %v4027, %v4029
    %v4031 = vrot.slane %v4024, %v4030
    %v4033 = vmul.f32 %v4015, %v4031
    %v4034 = vsel %vm73, %v4033, 0.0
    %v4035 = vsel %vm623, %v4034, 0.0
    %4036 = vadd.xlane.f32.xlu0 %v4035
    %v4037 = vpop.xlane.xlu0 %4036
    %v4038 = vsel %vm73, 0.0, %v4033
    %v4039 = vsel %vm623, %v4038, 0.0
    %4040 = vadd.xlane.f32.xlu0 %v4039
    %v4041 = vpop.xlane.xlu0 %4040
    %v4042 = vlaneseq
    %v4043 = vshrl.u32 %v4042, 7
    %v4044 = vsub.s32 0, %v4043
    %v4045 = vrot.slane %v4037, %v4044
    %v4046 = vlaneseq
    %v4047 = vshrl.u32 %v4046, 7
    %v4048 = vsub.s32 0, %v4047
    %v4049 = vrot.slane %v4041, %v4048
    %v4050 = vsel %vm76, %v4045, %v4049
    %vm4051 = vcmp.eq.s32.totalorder %v72, 6
    %v4052 = vsel %vm4051, 1, 0
    %vm4053 = vcmp.eq.s32.totalorder %v4052, 1
    %v4054 = vsel %vm4053, %v4050, %v3493
    %vm4055 = vcmp.ge.f32.partialorder %v3987, 0.0
    %v4056 = vmul.f32 %v3987, 0.01
    %v4057 = vsel %vm4055, %v3987, %v4056
    %4058 = vst [vmem:[#allocation5 + $0x5] sm:$0x2] %v4057
    %v4059 = vld [vmem:[%s0] sm:$0xff]
    %v4060 = vld [vmem:[%s0 + $0x8] sm:$0xff]
    %v4061 = vld [vmem:[%s0 + $0x10] sm:$0xff]
    %v4062 = vld [vmem:[%s0 + $0x18] sm:$0xff]
    %v4063 = vld [vmem:[%s0 + $0x20] sm:$0xff]
    %v4064 = vld [vmem:[%s0 + $0x28] sm:$0xff]
    %v4065 = vld [vmem:[%s0 + $0x30] sm:$0xff]
    %v4066 = vld [vmem:[%s0 + $0x38] sm:$0xff]
    %v4067 = vld [vmem:[%s0 + $0x40] sm:$0xff]
    %v4068 = vld [vmem:[%s0 + $0x48] sm:$0xff]
    %v4069 = vld [vmem:[%s0 + $0x50] sm:$0xff]
    %v4070 = vld [vmem:[%s0 + $0x58] sm:$0xff]
    %v4071 = vld [vmem:[%s0 + $0x60] sm:$0xff]
    %v4072 = vld [vmem:[%s0 + $0x68] sm:$0xff]
    %v4073 = vld [vmem:[%s0 + $0x70] sm:$0xff]
    %v4074 = vld [vmem:[%s0 + $0x78] sm:$0xff]
    %4076 = vset.pattern.permute.xlu0 14
    %4077 = vperm.xlu0 %4076, %v4059
    %v4078 = vpop.permute.xlu0 %4077
    %4081 = vset.pattern.permute.xlu0 14
    %4082 = vperm.xlu0 %4081, %v4060
    %v4083 = vpop.permute.xlu0 %4082
    %4086 = vset.pattern.permute.xlu0 14
    %4087 = vperm.xlu0 %4086, %v4061
    %v4088 = vpop.permute.xlu0 %4087
    %4091 = vset.pattern.permute.xlu0 14
    %4092 = vperm.xlu0 %4091, %v4062
    %v4093 = vpop.permute.xlu0 %4092
    %4096 = vset.pattern.permute.xlu0 14
    %4097 = vperm.xlu0 %4096, %v4063
    %v4098 = vpop.permute.xlu0 %4097
    %4101 = vset.pattern.permute.xlu0 14
    %4102 = vperm.xlu0 %4101, %v4064
    %v4103 = vpop.permute.xlu0 %4102
    %4106 = vset.pattern.permute.xlu0 14
    %4107 = vperm.xlu0 %4106, %v4065
    %v4108 = vpop.permute.xlu0 %4107
    %4111 = vset.pattern.permute.xlu0 14
    %4112 = vperm.xlu0 %4111, %v4066
    %v4113 = vpop.permute.xlu0 %4112
    %4116 = vset.pattern.permute.xlu0 14
    %4117 = vperm.xlu0 %4116, %v4067
    %v4118 = vpop.permute.xlu0 %4117
    %4121 = vset.pattern.permute.xlu0 14
    %4122 = vperm.xlu0 %4121, %v4068
    %v4123 = vpop.permute.xlu0 %4122
    %4126 = vset.pattern.permute.xlu0 14
    %4127 = vperm.xlu0 %4126, %v4069
    %v4128 = vpop.permute.xlu0 %4127
    %4131 = vset.pattern.permute.xlu0 14
    %4132 = vperm.xlu0 %4131, %v4070
    %v4133 = vpop.permute.xlu0 %4132
    %4136 = vset.pattern.permute.xlu0 14
    %4137 = vperm.xlu0 %4136, %v4071
    %v4138 = vpop.permute.xlu0 %4137
    %4141 = vset.pattern.permute.xlu0 14
    %4142 = vperm.xlu0 %4141, %v4072
    %v4143 = vpop.permute.xlu0 %4142
    %4146 = vset.pattern.permute.xlu0 14
    %4147 = vperm.xlu0 %4146, %v4073
    %v4148 = vpop.permute.xlu0 %4147
    %4151 = vset.pattern.permute.xlu0 14
    %4152 = vperm.xlu0 %4151, %v4074
    %v4153 = vpop.permute.xlu0 %4152
    %4155 = vset.pattern.permute.xlu0 15
    %4156 = vperm.xlu0 %4155, %v4059
    %v4157 = vpop.permute.xlu0 %4156
    %4159 = vset.pattern.permute.xlu0 15
    %4160 = vperm.xlu0 %4159, %v4060
    %v4161 = vpop.permute.xlu0 %4160
    %4163 = vset.pattern.permute.xlu0 15
    %4164 = vperm.xlu0 %4163, %v4061
    %v4165 = vpop.permute.xlu0 %4164
    %4167 = vset.pattern.permute.xlu0 15
    %4168 = vperm.xlu0 %4167, %v4062
    %v4169 = vpop.permute.xlu0 %4168
    %4171 = vset.pattern.permute.xlu0 15
    %4172 = vperm.xlu0 %4171, %v4063
    %v4173 = vpop.permute.xlu0 %4172
    %4175 = vset.pattern.permute.xlu0 15
    %4176 = vperm.xlu0 %4175, %v4064
    %v4177 = vpop.permute.xlu0 %4176
    %4179 = vset.pattern.permute.xlu0 15
    %4180 = vperm.xlu0 %4179, %v4065
    %v4181 = vpop.permute.xlu0 %4180
    %4183 = vset.pattern.permute.xlu0 15
    %4184 = vperm.xlu0 %4183, %v4066
    %v4185 = vpop.permute.xlu0 %4184
    %4187 = vset.pattern.permute.xlu0 15
    %4188 = vperm.xlu0 %4187, %v4067
    %v4189 = vpop.permute.xlu0 %4188
    %4191 = vset.pattern.permute.xlu0 15
    %4192 = vperm.xlu0 %4191, %v4068
    %v4193 = vpop.permute.xlu0 %4192
    %4195 = vset.pattern.permute.xlu0 15
    %4196 = vperm.xlu0 %4195, %v4069
    %v4197 = vpop.permute.xlu0 %4196
    %4199 = vset.pattern.permute.xlu0 15
    %4200 = vperm.xlu0 %4199, %v4070
    %v4201 = vpop.permute.xlu0 %4200
    %4203 = vset.pattern.permute.xlu0 15
    %4204 = vperm.xlu0 %4203, %v4071
    %v4205 = vpop.permute.xlu0 %4204
    %4207 = vset.pattern.permute.xlu0 15
    %4208 = vperm.xlu0 %4207, %v4072
    %v4209 = vpop.permute.xlu0 %4208
    %4211 = vset.pattern.permute.xlu0 15
    %4212 = vperm.xlu0 %4211, %v4073
    %v4213 = vpop.permute.xlu0 %4212
    %4215 = vset.pattern.permute.xlu0 15
    %4216 = vperm.xlu0 %4215, %v4074
    %v4217 = vpop.permute.xlu0 %4216
    %v4219 = vsel %vm94, %v4078, %v4157
    %v4220 = vsel %vm94, %v4083, %v4161
    %v4221 = vsel %vm94, %v4088, %v4165
    %v4222 = vsel %vm94, %v4093, %v4169
    %v4223 = vsel %vm94, %v4098, %v4173
    %v4224 = vsel %vm94, %v4103, %v4177
    %v4225 = vsel %vm94, %v4108, %v4181
    %v4226 = vsel %vm94, %v4113, %v4185
    %v4227 = vsel %vm94, %v4118, %v4189
    %v4228 = vsel %vm94, %v4123, %v4193
    %v4229 = vsel %vm94, %v4128, %v4197
    %v4230 = vsel %vm94, %v4133, %v4201
    %v4231 = vsel %vm94, %v4138, %v4205
    %v4232 = vsel %vm94, %v4143, %v4209
    %v4233 = vsel %vm94, %v4148, %v4213
    %v4234 = vsel %vm94, %v4153, %v4217
    %4235 = vmatprep.subr.mxu0 0.0
    %4236 = vmatpush1.msra.mxu0 %v3911
    %4237 = vmatprep.subr.mxu0 0.0
    %4238 = vmatpush1.msra.mxu0 %v3912
    %4239 = vmatprep.subr.mxu0 0.0
    %4240 = vmatpush1.msra.mxu0 %v3913
    %4241 = vmatprep.subr.mxu0 0.0
    %4242 = vmatpush1.msra.mxu0 %v3914
    %4243 = vmatprep.subr.mxu0 0.0
    %4244 = vmatpush1.msra.mxu0 0.0
    %4245 = vmatprep.subr.mxu0 0.0
    %4246 = vmatpush1.msra.mxu0 0.0
    %4247 = vmatprep.subr.mxu0 0.0
    %4248 = vmatpush1.msra.mxu0 0.0
    %4249 = vmatprep.subr.mxu0 0.0
    %4250 = vmatpush1.msra.mxu0 0.0
    %4251 = vmatprep.subr.mxu0 0.0
    %4252 = vmatpush1.msra.mxu0 0.0
    %4253 = vmatprep.subr.mxu0 0.0
    %4254 = vmatpush1.msra.mxu0 0.0
    %4255 = vmatprep.subr.mxu0 0.0
    %4256 = vmatpush1.msra.mxu0 0.0
    %4257 = vmatprep.subr.mxu0 0.0
    %4258 = vmatpush1.msra.mxu0 0.0
    %4259 = vmatprep.subr.mxu0 0.0
    %4260 = vmatpush1.msra.mxu0 0.0
    %4261 = vmatprep.subr.mxu0 0.0
    %4262 = vmatpush1.msra.mxu0 0.0
    %4263 = vmatprep.subr.mxu0 0.0
    %4264 = vmatpush1.msra.mxu0 0.0
    %4265 = vmatprep.subr.mxu0 0.0
    %4266 = vmatpush1.msra.mxu0 0.0
    %4267 = vmatprep.subr.mxu0 0.0
    %4268 = vmatpush1.msra.mxu0 0.0
    %4269 = vmatprep.subr.mxu0 0.0
    %4270 = vmatpush1.msra.mxu0 0.0
    %4271 = vmatprep.subr.mxu0 0.0
    %4272 = vmatpush1.msra.mxu0 0.0
    %4273 = vmatprep.subr.mxu0 0.0
    %4274 = vmatpush1.msra.mxu0 0.0
    %4275 = vmatprep.subr.mxu0 0.0
    %4276 = vmatpush1.msra.mxu0 0.0
    %4277 = vmatprep.subr.mxu0 0.0
    %4278 = vmatpush1.msra.mxu0 0.0
    %4279 = vmatprep.subr.mxu0 0.0
    %4280 = vmatpush1.msra.mxu0 0.0
    %4281 = vmatprep.subr.mxu0 0.0
    %4282 = vmatpush1.msra.mxu0 0.0
    %4283 = vmatprep.subr.mxu0 0.0
    %4284 = vmatpush1.msra.mxu0 0.0
    %4285 = vmatprep.subr.mxu0 0.0
    %4286 = vmatpush1.msra.mxu0 0.0
    %4287 = vmatprep.subr.mxu0 0.0
    %4288 = vmatpush1.msra.mxu0 0.0
    %4289 = vmatprep.subr.mxu0 0.0
    %4290 = vmatpush1.msra.mxu0 0.0
    %4291 = vmatprep.subr.mxu0 0.0
    %4292 = vmatpush1.msra.mxu0 0.0
    %4293 = vmatprep.subr.mxu0 0.0
    %4294 = vmatpush1.msra.mxu0 0.0
    %4295 = vmatprep.subr.mxu0 0.0
    %4296 = vmatpush1.msra.mxu0 0.0
    %4297 = vmatprep.subr.mxu0 0.0
    %4298 = vmatpush1.msra.mxu0 0.0
    %4299 = vmatprep.mubr.f32.mxu0 0.0
    %4300 = vmatmul.mubr.f32.gmra.mrb[0].mxu0 %v257
    %v4301 = vpop.f32.mrb[0].mxu0
    %v4302 = vadd.f32 %v4219, %v4301
    %v4303 = vpop.f32.mrb[0].mxu0
    %4304 = vmatprep.mubr.f32.mxu0 0.0
    %4305 = vmatmul.mubr.f32.gmra.mrb[0].mxu0 %v260
    %v4306 = vpop.f32.mrb[0].mxu0
    %v4307 = vadd.f32 %v4220, %v4306
    %v4308 = vpop.f32.mrb[0].mxu0
    %4309 = vmatprep.mubr.f32.mxu0 0.0
    %4310 = vmatmul.mubr.f32.gmra.mrb[0].mxu0 %v263
    %v4311 = vpop.f32.mrb[0].mxu0
    %v4312 = vadd.f32 %v4221, %v4311
    %v4313 = vpop.f32.mrb[0].mxu0
    %4314 = vmatprep.mubr.f32.mxu0 0.0
    %4315 = vmatmul.mubr.f32.gmra.mrb[0].mxu0 %v266
    %v4316 = vpop.f32.mrb[0].mxu0
    %v4317 = vadd.f32 %v4222, %v4316
    %v4318 = vpop.f32.mrb[0].mxu0
    %4319 = vmatprep.mubr.f32.mxu0 0.0
    %4320 = vmatmul.mubr.f32.gmra.mrb[0].mxu0 %v269
    %v4321 = vpop.f32.mrb[0].mxu0
    %v4322 = vadd.f32 %v4223, %v4321
    %v4323 = vpop.f32.mrb[0].mxu0
    %4324 = vmatprep.mubr.f32.mxu0 0.0
    %4325 = vmatmul.mubr.f32.gmra.mrb[0].mxu0 %v272
    %v4326 = vpop.f32.mrb[0].mxu0
    %v4327 = vadd.f32 %v4224, %v4326
    %v4328 = vpop.f32.mrb[0].mxu0
    %4329 = vmatprep.mubr.f32.mxu0 0.0
    %4330 = vmatmul.mubr.f32.gmra.mrb[0].mxu0 %v275
    %v4331 = vpop.f32.mrb[0].mxu0
    %v4332 = vadd.f32 %v4225, %v4331
    %v4333 = vpop.f32.mrb[0].mxu0
    %4334 = vmatprep.mubr.f32.mxu0 0.0
    %4335 = vmatmul.mubr.f32.gmra.mrb[0].mxu0 %v278
    %v4336 = vpop.f32.mrb[0].mxu0
    %v4337 = vadd.f32 %v4226, %v4336
    %v4338 = vpop.f32.mrb[0].mxu0
    %4339 = vmatprep.mubr.f32.mxu0 0.0
    %4340 = vmatmul.mubr.f32.gmra.mrb[0].mxu0 %v281
    %v4341 = vpop.f32.mrb[0].mxu0
    %v4342 = vadd.f32 %v4227, %v4341
    %v4343 = vpop.f32.mrb[0].mxu0
    %4344 = vmatprep.mubr.f32.mxu0 0.0
    %4345 = vmatmul.mubr.f32.gmra.mrb[0].mxu0 %v284
    %v4346 = vpop.f32.mrb[0].mxu0
    %v4347 = vadd.f32 %v4228, %v4346
    %v4348 = vpop.f32.mrb[0].mxu0
    %4349 = vmatprep.mubr.f32.mxu0 0.0
    %4350 = vmatmul.mubr.f32.gmra.mrb[0].mxu0 %v287
    %v4351 = vpop.f32.mrb[0].mxu0
    %v4352 = vadd.f32 %v4229, %v4351
    %v4353 = vpop.f32.mrb[0].mxu0
    %4354 = vmatprep.mubr.f32.mxu0 0.0
    %4355 = vmatmul.mubr.f32.gmra.mrb[0].mxu0 %v290
    %v4356 = vpop.f32.mrb[0].mxu0
    %v4357 = vadd.f32 %v4230, %v4356
    %v4358 = vpop.f32.mrb[0].mxu0
    %4359 = vmatprep.mubr.f32.mxu0 0.0
    %4360 = vmatmul.mubr.f32.gmra.mrb[0].mxu0 %v293
    %v4361 = vpop.f32.mrb[0].mxu0
    %v4362 = vadd.f32 %v4231, %v4361
    %v4363 = vpop.f32.mrb[0].mxu0
    %4364 = vmatprep.mubr.f32.mxu0 0.0
    %4365 = vmatmul.mubr.f32.gmra.mrb[0].mxu0 %v296
    %v4366 = vpop.f32.mrb[0].mxu0
    %v4367 = vadd.f32 %v4232, %v4366
    %v4368 = vpop.f32.mrb[0].mxu0
    %4369 = vmatprep.mubr.f32.mxu0 0.0
    %4370 = vmatmul.mubr.f32.gmra.mrb[0].mxu0 %v299
    %v4371 = vpop.f32.mrb[0].mxu0
    %v4372 = vadd.f32 %v4233, %v4371
    %v4373 = vpop.f32.mrb[0].mxu0
    %4374 = vmatprep.mubr.f32.mxu0 0.0
    %4375 = vmatmul.mubr.f32.gmra.mrb[0].mxu0 %v302
    %v4376 = vpop.f32.mrb[0].mxu0
    %v4377 = vadd.f32 %v4234, %v4376
    %v4378 = vpop.f32.mrb[0].mxu0
    %4379 = vdwg.mxu0
    %v4380 = vxor.u32 %v4302, 2147483648
    %v4381 = vxor.u32 %v4307, 2147483648
    %v4382 = vxor.u32 %v4312, 2147483648
    %v4383 = vxor.u32 %v4317, 2147483648
    %v4384 = vxor.u32 %v4322, 2147483648
    %v4385 = vxor.u32 %v4327, 2147483648
    %v4386 = vxor.u32 %v4332, 2147483648
    %v4387 = vxor.u32 %v4337, 2147483648
    %v4388 = vxor.u32 %v4342, 2147483648
    %v4389 = vxor.u32 %v4347, 2147483648
    %v4390 = vxor.u32 %v4352, 2147483648
    %v4391 = vxor.u32 %v4357, 2147483648
    %v4392 = vmul.f32 %v4380, 1.442695
    %v4393 = vpow.pop %v4392
    %v4394 = vmul.f32 %v4381, 1.442695
    %v4395 = vpow.pop %v4394
    %v4396 = vmul.f32 %v4382, 1.442695
    %v4397 = vpow.pop %v4396
    %v4398 = vmul.f32 %v4383, 1.442695
    %v4399 = vpow.pop %v4398
    %v4400 = vmul.f32 %v4384, 1.442695
    %v4401 = vpow.pop %v4400
    %v4402 = vmul.f32 %v4385, 1.442695
    %v4403 = vpow.pop %v4402
    %v4404 = vmul.f32 %v4386, 1.442695
    %v4405 = vpow.pop %v4404
    %v4406 = vmul.f32 %v4387, 1.442695
    %v4407 = vpow.pop %v4406
    %v4408 = vmul.f32 %v4388, 1.442695
    %v4409 = vpow.pop %v4408
    %v4410 = vmul.f32 %v4389, 1.442695
    %v4411 = vpow.pop %v4410
    %v4412 = vmul.f32 %v4390, 1.442695
    %v4413 = vpow.pop %v4412
    %v4414 = vmul.f32 %v4391, 1.442695
    %v4415 = vpow.pop %v4414
    %v4416 = vadd.f32 %v4393, 1.0
    %v4417 = vadd.f32 %v4395, 1.0
    %v4418 = vadd.f32 %v4397, 1.0
    %v4419 = vadd.f32 %v4399, 1.0
    %v4420 = vadd.f32 %v4401, 1.0
    %v4421 = vadd.f32 %v4403, 1.0
    %v4422 = vadd.f32 %v4405, 1.0
    %v4423 = vadd.f32 %v4407, 1.0
    %v4424 = vadd.f32 %v4409, 1.0
    %v4425 = vadd.f32 %v4411, 1.0
    %v4426 = vadd.f32 %v4413, 1.0
    %v4427 = vadd.f32 %v4415, 1.0
    %v4428 = vrcp.pop %v4416
    %v4429 = vmul.f32 1.0, %v4428
    %v4430 = vrcp.pop %v4417
    %v4431 = vmul.f32 1.0, %v4430
    %v4432 = vrcp.pop %v4418
    %v4433 = vmul.f32 1.0, %v4432
    %v4434 = vrcp.pop %v4419
    %v4435 = vmul.f32 1.0, %v4434
    %v4436 = vrcp.pop %v4420
    %v4437 = vmul.f32 1.0, %v4436
    %v4438 = vrcp.pop %v4421
    %v4439 = vmul.f32 1.0, %v4438
    %v4440 = vrcp.pop %v4422
    %v4441 = vmul.f32 1.0, %v4440
    %v4442 = vrcp.pop %v4423
    %v4443 = vmul.f32 1.0, %v4442
    %v4444 = vrcp.pop %v4424
    %v4445 = vmul.f32 1.0, %v4444
    %v4446 = vrcp.pop %v4425
    %v4447 = vmul.f32 1.0, %v4446
    %v4448 = vrcp.pop %v4426
    %v4449 = vmul.f32 1.0, %v4448
    %v4450 = vrcp.pop %v4427
    %v4451 = vmul.f32 1.0, %v4450
    %v4452 = vtanh.pop %v4362
    %v4453 = vtanh.pop %v4367
    %v4454 = vtanh.pop %v4372
    %v4455 = vtanh.pop %v4377
    %v4456 = vmul.f32 %v4437, %v3903
    %v4457 = vmul.f32 %v4439, %v3904
    %v4458 = vmul.f32 %v4441, %v3905
    %v4459 = vmul.f32 %v4443, %v3906
    %v4460 = vmul.f32 %v4429, %v4452
    %v4461 = vmul.f32 %v4431, %v4453
    %v4462 = vmul.f32 %v4433, %v4454
    %v4463 = vmul.f32 %v4435, %v4455
    %v4464 = vadd.f32 %v4456, %v4460
    %v4465 = vadd.f32 %v4457, %v4461
    %v4466 = vadd.f32 %v4458, %v4462
    %v4467 = vadd.f32 %v4459, %v4463
    %v4468 = vtanh.pop %v4464
    %v4469 = vtanh.pop %v4465
    %v4470 = vtanh.pop %v4466
    %v4471 = vtanh.pop %v4467
    %v4472 = vmul.f32 %v4445, %v4468
    %v4473 = vmul.f32 %v4447, %v4469
    %v4474 = vmul.f32 %v4449, %v4470
    %v4475 = vmul.f32 %v4451, %v4471
    %4476 = vmatprep.subr.mxu0 0.0
    %4477 = vmatpush1.msra.mxu0 %v4472
    %4478 = vmatprep.subr.mxu0 0.0
    %4479 = vmatpush1.msra.mxu0 %v4473
    %4480 = vmatprep.subr.mxu0 0.0
    %4481 = vmatpush1.msra.mxu0 %v4474
    %4482 = vmatprep.subr.mxu0 0.0
    %4483 = vmatpush1.msra.mxu0 %v4475
    %4484 = vmatprep.subr.mxu0 0.0
    %4485 = vmatpush1.msra.mxu0 0.0
    %4486 = vmatprep.subr.mxu0 0.0
    %4487 = vmatpush1.msra.mxu0 0.0
    %4488 = vmatprep.subr.mxu0 0.0
    %4489 = vmatpush1.msra.mxu0 0.0
    %4490 = vmatprep.subr.mxu0 0.0
    %4491 = vmatpush1.msra.mxu0 0.0
    %4492 = vmatprep.subr.mxu0 0.0
    %4493 = vmatpush1.msra.mxu0 0.0
    %4494 = vmatprep.subr.mxu0 0.0
    %4495 = vmatpush1.msra.mxu0 0.0
    %4496 = vmatprep.subr.mxu0 0.0
    %4497 = vmatpush1.msra.mxu0 0.0
    %4498 = vmatprep.subr.mxu0 0.0
    %4499 = vmatpush1.msra.mxu0 0.0
    %4500 = vmatprep.subr.mxu0 0.0
    %4501 = vmatpush1.msra.mxu0 0.0
    %4502 = vmatprep.subr.mxu0 0.0
    %4503 = vmatpush1.msra.mxu0 0.0
    %4504 = vmatprep.subr.mxu0 0.0
    %4505 = vmatpush1.msra.mxu0 0.0
    %4506 = vmatprep.subr.mxu0 0.0
    %4507 = vmatpush1.msra.mxu0 0.0
    %4508 = vmatprep.subr.mxu0 0.0
    %4509 = vmatpush1.msra.mxu0 0.0
    %4510 = vmatprep.subr.mxu0 0.0
    %4511 = vmatpush1.msra.mxu0 0.0
    %4512 = vmatprep.subr.mxu0 0.0
    %4513 = vmatpush1.msra.mxu0 0.0
    %4514 = vmatprep.subr.mxu0 0.0
    %4515 = vmatpush1.msra.mxu0 0.0
    %4516 = vmatprep.subr.mxu0 0.0
    %4517 = vmatpush1.msra.mxu0 0.0
    %4518 = vmatprep.subr.mxu0 0.0
    %4519 = vmatpush1.msra.mxu0 0.0
    %4520 = vmatprep.subr.mxu0 0.0
    %4521 = vmatpush1.msra.mxu0 0.0
    %4522 = vmatprep.subr.mxu0 0.0
    %4523 = vmatpush1.msra.mxu0 0.0
    %4524 = vmatprep.subr.mxu0 0.0
    %4525 = vmatpush1.msra.mxu0 0.0
    %4526 = vmatprep.subr.mxu0 0.0
    %4527 = vmatpush1.msra.mxu0 0.0
    %4528 = vmatprep.subr.mxu0 0.0
    %4529 = vmatpush1.msra.mxu0 0.0
    %4530 = vmatprep.subr.mxu0 0.0
    %4531 = vmatpush1.msra.mxu0 0.0
    %4532 = vmatprep.subr.mxu0 0.0
    %4533 = vmatpush1.msra.mxu0 0.0
    %4534 = vmatprep.subr.mxu0 0.0
    %4535 = vmatpush1.msra.mxu0 0.0
    %4536 = vmatprep.subr.mxu0 0.0
    %4537 = vmatpush1.msra.mxu0 0.0
    %4538 = vmatprep.subr.mxu0 0.0
    %4539 = vmatpush1.msra.mxu0 0.0
    %4540 = vmatprep.mubr.f32.mxu0 0.0
    %4541 = vmatmul.mubr.f32.gmra.mrb[0].mxu0 %v546
    %v4542 = vpop.f32.mrb[0].mxu0
    %v4543 = vadd.f32 0.0, %v4542
    %v4544 = vpop.f32.mrb[0].mxu0
    %4545 = vdwg.mxu0
    %v4546 = vld [vmem:[%s1 + $0x7] sm:$0x1]
    %v4547 = vadd.f32 %v4543, %v4546
    %v4548 = vadd.f32 %v4543, %v70
    %v4549 = vadd.f32 %v4013, %v4547
    %v4550 = vsel %vm73, %v4549, -inf
    %v4551 = vsel %vm623, %v4550, -inf
    %4552 = vmax.xlane.f32.xlu0 %v4551
    %v4553 = vpop.xlane.xlu0 %4552
    %v4554 = vsel %vm73, -inf, %v4549
    %v4555 = vsel %vm623, %v4554, -inf
    %4556 = vmax.xlane.f32.xlu0 %v4555
    %v4557 = vpop.xlane.xlu0 %4556
    %v4558 = vsel %vm73, %v4553, %v4557
    %v4559 = vsub.f32 %v4549, %v4558
    %v4560 = vmul.f32 %v4559, 1.442695
    %v4561 = vpow.pop %v4560
    %v4562 = vsel %vm73, %v4561, 0.0
    %v4563 = vsel %vm623, %v4562, 0.0
    %4564 = vadd.xlane.f32.xlu0 %v4563
    %v4565 = vpop.xlane.xlu0 %4564
    %v4566 = vsel %vm73, 0.0, %v4561
    %v4567 = vsel %vm623, %v4566, 0.0
    %4568 = vadd.xlane.f32.xlu0 %v4567
    %v4569 = vpop.xlane.xlu0 %4568
    %v4570 = vsel %vm73, %v4565, %v4569
    %v4571 = vlog2.pop %v4570
    %v4572 = vmul.f32 %v4571, 0.6931472
    %v4573 = vadd.f32 %v4558, %v4572
    %v4574 = vsub.f32 %v4549, %v4573
    %v4575 = vmul.f32 %v4574, 1.442695
    %v4576 = vpow.pop %v4575
    %v4579 = vunpack.c.l.s4 1966171168
    %v4580 = vunpack.c.0.s8 %v4579
    %v4581 = vlaneseq
    %v4582 = vshrl.u32 %v4581, 7
    %v4583 = vsub.s32 %v4580, %v4582
    %v4584 = vrot.slane %v4548, %v4583
    %v4585 = vcombine.high %v4584, %v4584
    %v4587 = vunpack.c.l.s4 1966171168
    %v4588 = vunpack.c.0.s8 %v4587
    %v4589 = vlaneseq
    %v4590 = vshrl.u32 %v4589, 7
    %v4591 = vsub.s32 %v4588, %v4590
    %v4592 = vrot.slane %v4585, %v4591
    %v4594 = vmul.f32 %v4576, %v4592
    %v4595 = vsel %vm73, %v4594, 0.0
    %v4596 = vsel %vm623, %v4595, 0.0
    %4597 = vadd.xlane.f32.xlu0 %v4596
    %v4598 = vpop.xlane.xlu0 %4597
    %v4599 = vsel %vm73, 0.0, %v4594
    %v4600 = vsel %vm623, %v4599, 0.0
    %4601 = vadd.xlane.f32.xlu0 %v4600
    %v4602 = vpop.xlane.xlu0 %4601
    %v4603 = vlaneseq
    %v4604 = vshrl.u32 %v4603, 7
    %v4605 = vsub.s32 0, %v4604
    %v4606 = vrot.slane %v4598, %v4605
    %v4607 = vlaneseq
    %v4608 = vshrl.u32 %v4607, 7
    %v4609 = vsub.s32 0, %v4608
    %v4610 = vrot.slane %v4602, %v4609
    %v4611 = vsel %vm76, %v4606, %v4610
    %vm4612 = vcmp.eq.s32.totalorder %v72, 7
    %v4613 = vsel %vm4612, 1, 0
    %vm4614 = vcmp.eq.s32.totalorder %v4613, 1
    %v4615 = vsel %vm4614, %v4611, %v4054
    %vm4616 = vcmp.ge.f32.partialorder %v4548, 0.0
    %v4617 = vmul.f32 %v4548, 0.01
    %v4618 = vsel %vm4616, %v4548, %v4617
    %4619 = vst [vmem:[#allocation5 + $0x6] sm:$0x2] %v4618
    %vm4620 = vcmp.ge.f32.partialorder %v4615, 0.0
    %v4621 = vmul.f32 %v4615, 0.01
    %v4622 = vsel %vm4620, %v4615, %v4621
    %vm4623 = vcmask 58368
    %4624 = vst.msk [vmem:[#allocation3] sm:$0x3] %vm4623, %v4622
    // Predicated region
    $region34: #{tpu_custom_call.1} parent=1 // pred_check
      _
    $region35: #{tpu_custom_call.1} parent=1 // pred_check_branch
      %4626 = sbr.rel (0) target = $region37
    $region36: #{tpu_custom_call.1} parent=1 // pred_region
      %s4628 = ssub.s32 32, 32
      %4629 = vsyncadd [#allocation4], %s4628
      %s4631 = sshll.u32 [#allocation3], 4
      %s4632 = int_to_ptr.vmem [resolvable:$true] %s4631
      %4634 = dma.vmem_to_hbm [thread:$0]  %s4632, 32, %s8, [#allocation4]
    $region37: #{tpu_custom_call.1} parent=1 // pred_fallthru
      _
    // Predicated region
    $region38: #{tpu_custom_call.1} parent=1 // pred_check
      _
    $region39: #{tpu_custom_call.1} parent=1 // pred_check_branch
      %4636 = sbr.rel (0) target = $region41
    $region40: #{tpu_custom_call.1} parent=1 // pred_region
      %s4638 = ssub.s32 128, 128
      %4639 = vsyncadd [#allocation6], %s4638
      %s4641 = sshll.u32 [#allocation5], 4
      %s4642 = int_to_ptr.vmem [resolvable:$true] %s4641
      %4644 = dma.vmem_to_hbm [thread:$0]  %s4642, 128, %s9, [#allocation6]
    $region41: #{tpu_custom_call.1} parent=1 // pred_fallthru
      _
    // Predicated region
    $region42: #{tpu_custom_call.1} parent=1 // pred_check
      _
    $region43: #{tpu_custom_call.1} parent=1 // pred_check_branch
      %4646 = sbr.rel (0) target = $region45
    $region44: #{tpu_custom_call.1} parent=1 // pred_region
      %4647 = dma.done [#allocation4], 32
    $region45: #{tpu_custom_call.1} parent=1 // pred_fallthru
      _
    // Predicated region
    $region46: #{tpu_custom_call.1} parent=1 // pred_check
      _
    $region47: #{tpu_custom_call.1} parent=1 // pred_check_branch
      %4649 = sbr.rel (0) target = $region49
    $region48: #{tpu_custom_call.1} parent=1 // pred_region
      %4650 = dma.done [#allocation6], 128
    $region49: #{tpu_custom_call.1} parent=1 // pred_fallthru
      _
    %4651 = vsyncpa [#allocation4], 1
    %4652 = vsyncpa [#allocation6], 1

</llo_original>
